<compile_context>
chip_gen: v7x
topology: tpu7x:2x2x1
jax: 0.10.0
libtpu: 0.0.40
codegen_flags: <defaults>
</compile_context>

<pallas_src>
import math
from functools import partial

import jax
import jax.numpy as jnp
import numpy as np
from jax.experimental import pallas as pl
from jax.experimental.pallas import tpu as pltpu


def attention_pool_kernel(x_ref, pos_sp_ref, pos0_ref,
                          wq_ref, bq_ref, wk_ref, bk_ref, wv_ref, bv_ref,
                          wc_ref, bc_ref, out_ref, tok_ref, *, num_heads):
    # x_ref     : (BB, E, HW) f32   -- raw NCHW batch block (C == E), channel-major
    # pos_sp_ref: (HW, E) f32       -- positional embedding of the spatial tokens (pos[1:])
    # pos0_ref  : (1, E) f32        -- pos[0] - mean(pos[1:])   (see mean-token note below)
    # w*_ref    : (E, E)/(E, O_pad) bf16, (in, out) layout; b*_ref: (1, E)/(1, O_pad) f32
    # out_ref   : (BB, O_pad)
    # tok_ref   : (BB*HW, E) bf16 VMEM scratch holding the transposed tokens (+pos)
    f32 = jnp.float32
    cdt = wq_ref.dtype                         # MXU operand dtype (bf16)

    bb, e, hw = x_ref.shape
    nh = num_heads
    hd = e // nh

    # ---- fold NCHW -> (tokens, E) transpose into the kernel ------------------
    # per-batch 2-D transposes into an aligned VMEM scratch; the spatial
    # positional embedding is added on the way.
    pos_sp = pos_sp_ref[...].astype(f32)                           # (HW, E)
    for i in range(bb):                                            # static unroll
        tok_ref[i * hw:(i + 1) * hw, :] = (
            x_ref[i].astype(f32).T + pos_sp).astype(tok_ref.dtype)
    tok_sp = tok_ref[...]                                          # (BB*HW, E) bf16

    # ---- constant helper matrices (shape-only, built on the VPU) -------------
    # sel[i, r] = 1 iff flattened token row r belongs to batch element i
    row_i = jax.lax.broadcasted_iota(jnp.int32, (bb, bb * hw), 0)
    col_r = jax.lax.broadcasted_iota(jnp.int32, (bb, bb * hw), 1)
    sel = jnp.where((col_r >= row_i * hw) & (col_r < row_i * hw + hw),
                    1.0, 0.0).astype(cdt)                          # (BB, BB*HW)
    # g[e, h] = 1 iff embedding lane e belongs to head h;  gt = g^T
    e_i = jax.lax.broadcasted_iota(jnp.int32, (e, nh), 0)
    h_i = jax.lax.broadcasted_iota(jnp.int32, (e, nh), 1)
    g = jnp.where((e_i >= h_i * hd) & (e_i < h_i * hd + hd),
                  1.0, 0.0).astype(cdt)                            # (E, H)
    h_j = jax.lax.broadcasted_iota(jnp.int32, (nh, e), 0)
    e_j = jax.lax.broadcasted_iota(jnp.int32, (nh, e), 1)
    gt = jnp.where((e_j >= h_j * hd) & (e_j < h_j * hd + hd),
                   1.0, 0.0).astype(cdt)                           # (H, E)

    # ---- query token = mean over spatial tokens + pos[0] ---------------------
    # mean_s(tok_sp) = mean_s(x) + mean_s(pos[1:]); pos0_ref already holds
    # pos[0] - mean_s(pos[1:]), so tok0 == mean_s(x) + pos[0], exactly as in
    # the PyTorch module.  The row-sum runs as a ones-selector MXU matmul.
    tok0 = (jnp.dot(sel, tok_sp, preferred_element_type=f32) * (1.0 / hw)
            + pos0_ref[...].astype(f32))                           # (BB, E)
    tok0_c = tok0.astype(cdt)

    # ---- projections (big, MXU-friendly matmuls) ------------------------------
    bq = bq_ref[...].astype(f32)
    bk = bk_ref[...].astype(f32)
    bv = bv_ref[...].astype(f32)

    q = jnp.dot(tok0_c, wq_ref[...], preferred_element_type=f32) + bq    # (BB, E)
    q = q * (float(hd) ** -0.5)                                          # MHA scaling
    k0 = jnp.dot(tok0_c, wk_ref[...], preferred_element_type=f32) + bk   # (BB, E)
    v0 = jnp.dot(tok0_c, wv_ref[...], preferred_element_type=f32) + bv   # (BB, E)
    k_sp = jnp.dot(tok_sp, wk_ref[...], preferred_element_type=f32) + bk  # (BB*HW, E)
    v_sp = jnp.dot(tok_sp, wv_ref[...], preferred_element_type=f32) + bv  # (BB*HW, E)

    # ---- all-head logits without per-head slicing / transposes ---------------
    prod = (q[:, None, :] * k_sp.reshape(bb, hw, e)).reshape(bb * hw, e)
    logits_sp = jnp.dot(prod.astype(cdt), g,
                        preferred_element_type=f32).reshape(bb, hw, nh)   # (BB, HW, H)
    logit0 = jnp.dot((q * k0).astype(cdt), g,
                     preferred_element_type=f32)                          # (BB, H)

    # ---- softmax over the HW spatial tokens plus the mean token --------------
    m = jnp.maximum(jnp.max(logits_sp, axis=1), logit0)                   # (BB, H)
    p_sp = jnp.exp(logits_sp - m[:, None, :])                             # (BB, HW, H)
    p0 = jnp.exp(logit0 - m)                                              # (BB, H)
    inv = pl.reciprocal(p0 + jnp.sum(p_sp, axis=1), approx=True)          # (BB, H)
    p_sp = (p_sp * inv[:, None, :]).reshape(bb * hw, nh)                  # (BB*HW, H)
    p0 = p0 * inv                                                         # (BB, H)

    # ---- attention output: expand probs to E lanes, weight, reduce over S ----
    p_exp = jnp.dot(p_sp.astype(cdt), gt, preferred_element_type=f32)     # (BB*HW, E)
    weighted = (p_exp * v_sp).astype(cdt)                                 # (BB*HW, E)
    attn = jnp.dot(sel, weighted, preferred_element_type=f32)             # (BB, E)
    p0_exp = jnp.dot(p0.astype(cdt), gt, preferred_element_type=f32)      # (BB, E)
    attn = attn + p0_exp * v0                                             # (BB, E)

    # ---- output projection (lane-dense, padded to a multiple of 128) ---------
    out = (jnp.dot(attn.astype(cdt), wc_ref[...], preferred_element_type=f32)
           + bc_ref[...].astype(f32))                                     # (BB, O_pad)
    out_ref[...] = out.astype(out_ref.dtype)


def attention_pool_2d(x, params, num_heads, *, block_batch=None,
                      compute_dtype=jnp.bfloat16):
    """x: (N, C, H, W) NCHW.  params hold (in, out)-layout projection weights."""
    n, c, h, w = x.shape
    hw = h * w
    e = c
    if e % num_heads != 0:
        raise ValueError("embed_dim must be divisible by num_heads")

    if block_batch is None:
        block_batch = next(bb for bb in (8, 4, 2, 1) if n % bb == 0)
    if n % block_batch != 0:
        raise ValueError("batch must be divisible by block_batch")
    n_blocks = n // block_batch

    # NCHW -> (N, C, HW) is a free reshape; the C/HW transpose happens inside
    # the kernel, so no transposed activation copy is written back to HBM.
    x_tok = x.reshape(n, c, hw)

    f32 = jnp.float32
    cdt = compute_dtype
    pos = params["pos"].astype(f32)                       # (S, E), S = HW + 1
    pos_sp = pos[1:]                                      # (HW, E)
    # kernel rebuilds the mean/query token from mean_s(x + pos[1:]), so it is
    # handed pos[0] - mean_s(pos[1:])  (see kernel comment).
    pos0_adj = pos[0:1] - jnp.mean(pos_sp, axis=0, keepdims=True)

    wq = params["wq"].astype(cdt); bq = params["bq"].astype(f32)
    wk = params["wk"].astype(cdt); bk = params["bk"].astype(f32)
    wv = params["wv"].astype(cdt); bv = params["bv"].astype(f32)
    out_dim = params["wc"].shape[1]
    o_pad = ((out_dim + 127) // 128) * 128                # lane-dense output store
    wc = jnp.zeros((e, o_pad), cdt).at[:, :out_dim].set(params["wc"].astype(cdt))
    bc = jnp.zeros((1, o_pad), f32).at[:, :out_dim].set(params["bc"].astype(f32))

    kernel = partial(attention_pool_kernel, num_heads=num_heads)
    const = lambda i: (0, 0)                              # grid-invariant operands
    grid_spec = pltpu.PrefetchScalarGridSpec(
        num_scalar_prefetch=0,
        grid=(n_blocks,),
        in_specs=[
            pl.BlockSpec((block_batch, e, hw), lambda i: (i, 0, 0)),   # x (N, C, HW)
            pl.BlockSpec((hw, e), const),                              # pos[1:]
            pl.BlockSpec((1, e), const),                               # pos[0]-mean(pos[1:])
            pl.BlockSpec((e, e), const),                               # Wq
            pl.BlockSpec((1, e), const),                               # bq
            pl.BlockSpec((e, e), const),                               # Wk
            pl.BlockSpec((1, e), const),                               # bk
            pl.BlockSpec((e, e), const),                               # Wv
            pl.BlockSpec((1, e), const),                               # bv
            pl.BlockSpec((e, o_pad), const),                           # Wc (padded)
            pl.BlockSpec((1, o_pad), const),                           # bc (padded)
        ],
        out_specs=pl.BlockSpec((block_batch, o_pad), lambda i: (i, 0)),
        scratch_shapes=[pltpu.VMEM((block_batch * hw, e), cdt)],       # token scratch
    )
    out_padded = pl.pallas_call(
        kernel,
        out_shape=jax.ShapeDtypeStruct((n, o_pad), x.dtype),
        grid_spec=grid_spec,
        compiler_params=pltpu.CompilerParams(
            dimension_semantics=("parallel",),    # >=2 batch blocks -> both v7x TCs busy
            vmem_limit_bytes=64 * 1024 * 1024),
    )(x_tok, pos_sp, pos0_adj, wq, bq, wk, bk, wv, bv, wc, bc)
    return out_padded[:, :out_dim]


def ref_attention_pool(x, params, num_heads):
    """Pure-JAX f32 reference mirroring F.multi_head_attention_forward."""
    n, c, hh, ww = x.shape
    e = c
    xt = jnp.transpose(x.reshape(n, c, hh * ww), (2, 0, 1))        # (HW, N, E)
    xt = jnp.concatenate([xt.mean(axis=0, keepdims=True), xt], 0)  # (S, N, E)
    xt = xt + params["pos"][:, None, :]
    s = xt.shape[0]
    hd = e // num_heads
    q = (xt[:1] @ params["wq"] + params["bq"][0]) * (hd ** -0.5)   # (1, N, E)
    k = xt @ params["wk"] + params["bk"][0]                        # (S, N, E)
    v = xt @ params["wv"] + params["bv"][0]
    qh = q.reshape(1, n, num_heads, hd)
    kh = k.reshape(s, n, num_heads, hd)
    vh = v.reshape(s, n, num_heads, hd)
    logits = jnp.einsum('qnhd,snhd->nhqs', qh, kh)
    attn = jax.nn.softmax(logits, axis=-1)
    o = jnp.einsum('nhqs,snhd->qnhd', attn, vh).reshape(1, n, e)
    out = o @ params["wc"] + params["bc"][0]
    return out[0]                                                  # (N, O)


if __name__ == "__main__":
    batch, embed_dim, spacial_dim, num_heads, output_dim = 16, 128, 8, 4, 64
    seq = spacial_dim ** 2 + 1

    key = jax.random.PRNGKey(0)
    ks = jax.random.split(key, 10)
    scale = 1.0 / math.sqrt(embed_dim)
    params = {
        "pos": jax.random.normal(ks[0], (seq, embed_dim), jnp.float32) * scale,
        "wq": jax.random.normal(ks[1], (embed_dim, embed_dim), jnp.float32) * scale,
        "bq": jax.random.normal(ks[2], (1, embed_dim), jnp.float32) * 0.01,
        "wk": jax.random.normal(ks[3], (embed_dim, embed_dim), jnp.float32) * scale,
        "bk": jax.random.normal(ks[4], (1, embed_dim), jnp.float32) * 0.01,
        "wv": jax.random.normal(ks[5], (embed_dim, embed_dim), jnp.float32) * scale,
        "bv": jax.random.normal(ks[6], (1, embed_dim), jnp.float32) * 0.01,
        "wc": jax.random.normal(ks[7], (embed_dim, output_dim), jnp.float32) * scale,
        "bc": jax.random.normal(ks[8], (1, output_dim), jnp.float32) * 0.01,
    }
    x = jax.random.normal(ks[9], (batch, embed_dim, spacial_dim, spacial_dim),
                          jnp.float32)

    out = jax.block_until_ready(attention_pool_2d(x, params, num_heads))
    ref = jax.block_until_ready(ref_attention_pool(x, params, num_heads))
    # kernel uses bf16 MXU operands (f32 accumulation); compare vs all-f32 ref.
    np.testing.assert_allclose(np.asarray(out), np.asarray(ref),
                               rtol=5e-2, atol=5e-2)
    print("KERNEL_OK")
</pallas_src>

<mosaic_0001>
module attributes {stable_mosaic.version = 11 : i64} {
  func.func @attention_pool_kernel(%arg0: i32, %arg1: memref<8x128x64xf32, #tpu.memory_space<vmem>>, %arg2: memref<64x128xf32, #tpu.memory_space<vmem>>, %arg3: memref<1x128xf32, #tpu.memory_space<vmem>>, %arg4: memref<128x128xbf16, #tpu.memory_space<vmem>>, %arg5: memref<1x128xf32, #tpu.memory_space<vmem>>, %arg6: memref<128x128xbf16, #tpu.memory_space<vmem>>, %arg7: memref<1x128xf32, #tpu.memory_space<vmem>>, %arg8: memref<128x128xbf16, #tpu.memory_space<vmem>>, %arg9: memref<1x128xf32, #tpu.memory_space<vmem>>, %arg10: memref<128x128xbf16, #tpu.memory_space<vmem>>, %arg11: memref<1x128xf32, #tpu.memory_space<vmem>>, %arg12: memref<8x128xf32, #tpu.memory_space<vmem>>, %arg13: memref<512x128xbf16, #tpu.memory_space<vmem>>) attributes {dimension_semantics = [#tpu.dimension_semantics<parallel>], iteration_bounds = array<i64: 2>, scalar_prefetch = 0 : i64, scratch_operands = 1 : i64, tpu.core_type = #tpu.core_type<tc>, window_params = [{transform_indices = @transform_0, window_bounds = array<i64: 8, 128, 64>}, {pipeline_mode = #tpu.pipeline_mode<synchronous>, transform_indices = @transform_1, window_bounds = array<i64: 64, 128>}, {pipeline_mode = #tpu.pipeline_mode<synchronous>, transform_indices = @transform_2, window_bounds = array<i64: 1, 128>}, {pipeline_mode = #tpu.pipeline_mode<synchronous>, transform_indices = @transform_3, window_bounds = array<i64: 128, 128>}, {pipeline_mode = #tpu.pipeline_mode<synchronous>, transform_indices = @transform_4, window_bounds = array<i64: 1, 128>}, {pipeline_mode = #tpu.pipeline_mode<synchronous>, transform_indices = @transform_5, window_bounds = array<i64: 128, 128>}, {pipeline_mode = #tpu.pipeline_mode<synchronous>, transform_indices = @transform_6, window_bounds = array<i64: 1, 128>}, {pipeline_mode = #tpu.pipeline_mode<synchronous>, transform_indices = @transform_7, window_bounds = array<i64: 128, 128>}, {pipeline_mode = #tpu.pipeline_mode<synchronous>, transform_indices = @transform_8, window_bounds = array<i64: 1, 128>}, {pipeline_mode = #tpu.pipeline_mode<synchronous>, transform_indices = @transform_9, window_bounds = array<i64: 128, 128>}, {pipeline_mode = #tpu.pipeline_mode<synchronous>, transform_indices = @transform_10, window_bounds = array<i64: 1, 128>}, {transform_indices = @transform_11, window_bounds = array<i64: 8, 128>}]} {
    %c0 = arith.constant 0 : index
    %c0_0 = arith.constant 0 : index
    %0 = vector.load %arg2[%c0, %c0_0] : memref<64x128xf32, #tpu.memory_space<vmem>>, vector<64x128xf32>
    %c0_1 = arith.constant 0 : index
    %c0_2 = arith.constant 0 : index
    %c0_3 = arith.constant 0 : index
    %1 = vector.load %arg1[%c0_1, %c0_2, %c0_3] : memref<8x128x64xf32, #tpu.memory_space<vmem>>, vector<1x128x64xf32>
    %2 = vector.shape_cast %1 : vector<1x128x64xf32> to vector<128x64xf32>
    %3 = tpu.transpose %2, [1, 0] : vector<128x64xf32> -> vector<64x128xf32>
    %4 = arith.addf %3, %0 : vector<64x128xf32>
    %5 = arith.truncf %4 : vector<64x128xf32> to vector<64x128xbf16>
    %c0_4 = arith.constant 0 : index
    %c0_5 = arith.constant 0 : index
    %6 = vector.load %arg13[%c0_4, %c0_5] : memref<512x128xbf16, #tpu.memory_space<vmem>>, vector<64x128xbf16>
    tpu.vector_store %arg13[%c0_4, %c0_5], %5 {strides = array<i32>} : memref<512x128xbf16, #tpu.memory_space<vmem>>, vector<64x128xbf16>,
    %c1 = arith.constant 1 : index
    %c0_6 = arith.constant 0 : index
    %c0_7 = arith.constant 0 : index
    %7 = vector.load %arg1[%c1, %c0_6, %c0_7] : memref<8x128x64xf32, #tpu.memory_space<vmem>>, vector<1x128x64xf32>
    %8 = vector.shape_cast %7 : vector<1x128x64xf32> to vector<128x64xf32>
    %9 = tpu.transpose %8, [1, 0] : vector<128x64xf32> -> vector<64x128xf32>
    %10 = arith.addf %9, %0 : vector<64x128xf32>
    %11 = arith.truncf %10 : vector<64x128xf32> to vector<64x128xbf16>
    %c64 = arith.constant 64 : index
    %c0_8 = arith.constant 0 : index
    %12 = vector.load %arg13[%c64, %c0_8] : memref<512x128xbf16, #tpu.memory_space<vmem>>, vector<64x128xbf16>
    tpu.vector_store %arg13[%c64, %c0_8], %11 {strides = array<i32>} : memref<512x128xbf16, #tpu.memory_space<vmem>>, vector<64x128xbf16>,
    %c2 = arith.constant 2 : index
    %c0_9 = arith.constant 0 : index
    %c0_10 = arith.constant 0 : index
    %13 = vector.load %arg1[%c2, %c0_9, %c0_10] : memref<8x128x64xf32, #tpu.memory_space<vmem>>, vector<1x128x64xf32>
    %14 = vector.shape_cast %13 : vector<1x128x64xf32> to vector<128x64xf32>
    %15 = tpu.transpose %14, [1, 0] : vector<128x64xf32> -> vector<64x128xf32>
    %16 = arith.addf %15, %0 : vector<64x128xf32>
    %17 = arith.truncf %16 : vector<64x128xf32> to vector<64x128xbf16>
    %c128 = arith.constant 128 : index
    %c0_11 = arith.constant 0 : index
    %18 = vector.load %arg13[%c128, %c0_11] : memref<512x128xbf16, #tpu.memory_space<vmem>>, vector<64x128xbf16>
    tpu.vector_store %arg13[%c128, %c0_11], %17 {strides = array<i32>} : memref<512x128xbf16, #tpu.memory_space<vmem>>, vector<64x128xbf16>,
    %c3 = arith.constant 3 : index
    %c0_12 = arith.constant 0 : index
    %c0_13 = arith.constant 0 : index
    %19 = vector.load %arg1[%c3, %c0_12, %c0_13] : memref<8x128x64xf32, #tpu.memory_space<vmem>>, vector<1x128x64xf32>
    %20 = vector.shape_cast %19 : vector<1x128x64xf32> to vector<128x64xf32>
    %21 = tpu.transpose %20, [1, 0] : vector<128x64xf32> -> vector<64x128xf32>
    %22 = arith.addf %21, %0 : vector<64x128xf32>
    %23 = arith.truncf %22 : vector<64x128xf32> to vector<64x128xbf16>
    %c192 = arith.constant 192 : index
    %c0_14 = arith.constant 0 : index
    %24 = vector.load %arg13[%c192, %c0_14] : memref<512x128xbf16, #tpu.memory_space<vmem>>, vector<64x128xbf16>
    tpu.vector_store %arg13[%c192, %c0_14], %23 {strides = array<i32>} : memref<512x128xbf16, #tpu.memory_space<vmem>>, vector<64x128xbf16>,
    %c4 = arith.constant 4 : index
    %c0_15 = arith.constant 0 : index
    %c0_16 = arith.constant 0 : index
    %25 = vector.load %arg1[%c4, %c0_15, %c0_16] : memref<8x128x64xf32, #tpu.memory_space<vmem>>, vector<1x128x64xf32>
    %26 = vector.shape_cast %25 : vector<1x128x64xf32> to vector<128x64xf32>
    %27 = tpu.transpose %26, [1, 0] : vector<128x64xf32> -> vector<64x128xf32>
    %28 = arith.addf %27, %0 : vector<64x128xf32>
    %29 = arith.truncf %28 : vector<64x128xf32> to vector<64x128xbf16>
    %c256 = arith.constant 256 : index
    %c0_17 = arith.constant 0 : index
    %30 = vector.load %arg13[%c256, %c0_17] : memref<512x128xbf16, #tpu.memory_space<vmem>>, vector<64x128xbf16>
    tpu.vector_store %arg13[%c256, %c0_17], %29 {strides = array<i32>} : memref<512x128xbf16, #tpu.memory_space<vmem>>, vector<64x128xbf16>,
    %c5 = arith.constant 5 : index
    %c0_18 = arith.constant 0 : index
    %c0_19 = arith.constant 0 : index
    %31 = vector.load %arg1[%c5, %c0_18, %c0_19] : memref<8x128x64xf32, #tpu.memory_space<vmem>>, vector<1x128x64xf32>
    %32 = vector.shape_cast %31 : vector<1x128x64xf32> to vector<128x64xf32>
    %33 = tpu.transpose %32, [1, 0] : vector<128x64xf32> -> vector<64x128xf32>
    %34 = arith.addf %33, %0 : vector<64x128xf32>
    %35 = arith.truncf %34 : vector<64x128xf32> to vector<64x128xbf16>
    %c320 = arith.constant 320 : index
    %c0_20 = arith.constant 0 : index
    %36 = vector.load %arg13[%c320, %c0_20] : memref<512x128xbf16, #tpu.memory_space<vmem>>, vector<64x128xbf16>
    tpu.vector_store %arg13[%c320, %c0_20], %35 {strides = array<i32>} : memref<512x128xbf16, #tpu.memory_space<vmem>>, vector<64x128xbf16>,
    %c6 = arith.constant 6 : index
    %c0_21 = arith.constant 0 : index
    %c0_22 = arith.constant 0 : index
    %37 = vector.load %arg1[%c6, %c0_21, %c0_22] : memref<8x128x64xf32, #tpu.memory_space<vmem>>, vector<1x128x64xf32>
    %38 = vector.shape_cast %37 : vector<1x128x64xf32> to vector<128x64xf32>
    %39 = tpu.transpose %38, [1, 0] : vector<128x64xf32> -> vector<64x128xf32>
    %40 = arith.addf %39, %0 : vector<64x128xf32>
    %41 = arith.truncf %40 : vector<64x128xf32> to vector<64x128xbf16>
    %c384 = arith.constant 384 : index
    %c0_23 = arith.constant 0 : index
    %42 = vector.load %arg13[%c384, %c0_23] : memref<512x128xbf16, #tpu.memory_space<vmem>>, vector<64x128xbf16>
    tpu.vector_store %arg13[%c384, %c0_23], %41 {strides = array<i32>} : memref<512x128xbf16, #tpu.memory_space<vmem>>, vector<64x128xbf16>,
    %c7 = arith.constant 7 : index
    %c0_24 = arith.constant 0 : index
    %c0_25 = arith.constant 0 : index
    %43 = vector.load %arg1[%c7, %c0_24, %c0_25] : memref<8x128x64xf32, #tpu.memory_space<vmem>>, vector<1x128x64xf32>
    %44 = vector.shape_cast %43 : vector<1x128x64xf32> to vector<128x64xf32>
    %45 = tpu.transpose %44, [1, 0] : vector<128x64xf32> -> vector<64x128xf32>
    %46 = arith.addf %45, %0 : vector<64x128xf32>
    %47 = arith.truncf %46 : vector<64x128xf32> to vector<64x128xbf16>
    %c448 = arith.constant 448 : index
    %c0_26 = arith.constant 0 : index
    %48 = vector.load %arg13[%c448, %c0_26] : memref<512x128xbf16, #tpu.memory_space<vmem>>, vector<64x128xbf16>
    tpu.vector_store %arg13[%c448, %c0_26], %47 {strides = array<i32>} : memref<512x128xbf16, #tpu.memory_space<vmem>>, vector<64x128xbf16>,
    %c0_27 = arith.constant 0 : index
    %c0_28 = arith.constant 0 : index
    %49 = vector.load %arg13[%c0_27, %c0_28] : memref<512x128xbf16, #tpu.memory_space<vmem>>, vector<512x128xbf16>
    %50 = tpu.iota {dimensions = array<i32: 0>} : vector<8x512xi32>
    %51 = tpu.iota {dimensions = array<i32: 1>} : vector<8x512xi32>
    %c64_i32 = arith.constant 64 : i32
    %52 = vector.broadcast %c64_i32 : i32 to vector<8x512xi32>
    %53 = arith.muli %50, %52 : vector<8x512xi32>
    %54 = arith.cmpi sge, %51, %53 : vector<8x512xi32>
    %c64_i32_29 = arith.constant 64 : i32
    %55 = vector.broadcast %c64_i32_29 : i32 to vector<8x512xi32>
    %56 = arith.muli %50, %55 : vector<8x512xi32>
    %c64_i32_30 = arith.constant 64 : i32
    %57 = vector.broadcast %c64_i32_30 : i32 to vector<8x512xi32>
    %58 = arith.addi %56, %57 : vector<8x512xi32>
    %59 = arith.cmpi slt, %51, %58 : vector<8x512xi32>
    %60 = arith.andi %54, %59 : vector<8x512xi1>
    %cst = arith.constant 1.000000e+00 : f32
    %cst_31 = arith.constant 0.000000e+00 : f32
    %61 = vector.broadcast %cst : f32 to vector<8x512xf32>
    %62 = vector.broadcast %cst_31 : f32 to vector<8x512xf32>
    %63 = arith.select %60, %61, %62 : vector<8x512xi1>, vector<8x512xf32>
    %64 = arith.truncf %63 : vector<8x512xf32> to vector<8x512xbf16>
    %65 = tpu.iota {dimensions = array<i32: 0>} : vector<128x4xi32>
    %66 = tpu.iota {dimensions = array<i32: 1>} : vector<128x4xi32>
    %c32_i32 = arith.constant 32 : i32
    %67 = vector.broadcast %c32_i32 : i32 to vector<128x4xi32>
    %68 = arith.muli %66, %67 : vector<128x4xi32>
    %69 = arith.cmpi sge, %65, %68 : vector<128x4xi32>
    %c32_i32_32 = arith.constant 32 : i32
    %70 = vector.broadcast %c32_i32_32 : i32 to vector<128x4xi32>
    %71 = arith.muli %66, %70 : vector<128x4xi32>
    %c32_i32_33 = arith.constant 32 : i32
    %72 = vector.broadcast %c32_i32_33 : i32 to vector<128x4xi32>
    %73 = arith.addi %71, %72 : vector<128x4xi32>
    %74 = arith.cmpi slt, %65, %73 : vector<128x4xi32>
    %75 = arith.andi %69, %74 : vector<128x4xi1>
    %cst_34 = arith.constant 1.000000e+00 : f32
    %cst_35 = arith.constant 0.000000e+00 : f32
    %76 = vector.broadcast %cst_34 : f32 to vector<128x4xf32>
    %77 = vector.broadcast %cst_35 : f32 to vector<128x4xf32>
    %78 = arith.select %75, %76, %77 : vector<128x4xi1>, vector<128x4xf32>
    %79 = arith.truncf %78 : vector<128x4xf32> to vector<128x4xbf16>
    %80 = tpu.iota {dimensions = array<i32: 0>} : vector<4x128xi32>
    %81 = tpu.iota {dimensions = array<i32: 1>} : vector<4x128xi32>
    %c32_i32_36 = arith.constant 32 : i32
    %82 = vector.broadcast %c32_i32_36 : i32 to vector<4x128xi32>
    %83 = arith.muli %80, %82 : vector<4x128xi32>
    %84 = arith.cmpi sge, %81, %83 : vector<4x128xi32>
    %c32_i32_37 = arith.constant 32 : i32
    %85 = vector.broadcast %c32_i32_37 : i32 to vector<4x128xi32>
    %86 = arith.muli %80, %85 : vector<4x128xi32>
    %c32_i32_38 = arith.constant 32 : i32
    %87 = vector.broadcast %c32_i32_38 : i32 to vector<4x128xi32>
    %88 = arith.addi %86, %87 : vector<4x128xi32>
    %89 = arith.cmpi slt, %81, %88 : vector<4x128xi32>
    %90 = arith.andi %84, %89 : vector<4x128xi1>
    %cst_39 = arith.constant 1.000000e+00 : f32
    %cst_40 = arith.constant 0.000000e+00 : f32
    %91 = vector.broadcast %cst_39 : f32 to vector<4x128xf32>
    %92 = vector.broadcast %cst_40 : f32 to vector<4x128xf32>
    %93 = arith.select %90, %91, %92 : vector<4x128xi1>, vector<4x128xf32>
    %94 = arith.truncf %93 : vector<4x128xf32> to vector<4x128xbf16>
    %cst_41 = arith.constant dense<0.000000e+00> : vector<8x128xf32>
    %95 = tpu.matmul %64, %49, %cst_41 {dimension_numbers = #tpu.dot_dimension_numbers<[1], [0], [0], [1], [0, 0, 1, 1], [], []>} : vector<8x512xbf16>, vector<512x128xbf16>, vector<8x128xf32> -> vector<8x128xf32>
    %cst_42 = arith.constant 1.562500e-02 : f32
    %96 = vector.broadcast %cst_42 : f32 to vector<8x128xf32>
    %97 = arith.mulf %95, %96 : vector<8x128xf32>
    %c0_43 = arith.constant 0 : index
    %c0_44 = arith.constant 0 : index
    %98 = vector.load %arg3[%c0_43, %c0_44] : memref<1x128xf32, #tpu.memory_space<vmem>>, vector<1x128xf32>
    %99 = vector.broadcast %98 : vector<1x128xf32> to vector<8x128xf32>
    %100 = arith.addf %97, %99 : vector<8x128xf32>
    %101 = arith.truncf %100 : vector<8x128xf32> to vector<8x128xbf16>
    %c0_45 = arith.constant 0 : index
    %c0_46 = arith.constant 0 : index
    %102 = vector.load %arg5[%c0_45, %c0_46] : memref<1x128xf32, #tpu.memory_space<vmem>>, vector<1x128xf32>
    %c0_47 = arith.constant 0 : index
    %c0_48 = arith.constant 0 : index
    %103 = vector.load %arg7[%c0_47, %c0_48] : memref<1x128xf32, #tpu.memory_space<vmem>>, vector<1x128xf32>
    %c0_49 = arith.constant 0 : index
    %c0_50 = arith.constant 0 : index
    %104 = vector.load %arg9[%c0_49, %c0_50] : memref<1x128xf32, #tpu.memory_space<vmem>>, vector<1x128xf32>
    %c0_51 = arith.constant 0 : index
    %c0_52 = arith.constant 0 : index
    %105 = vector.load %arg4[%c0_51, %c0_52] : memref<128x128xbf16, #tpu.memory_space<vmem>>, vector<128x128xbf16>
    %cst_53 = arith.constant dense<0.000000e+00> : vector<8x128xf32>
    %106 = tpu.matmul %101, %105, %cst_53 {dimension_numbers = #tpu.dot_dimension_numbers<[1], [0], [0], [1], [0, 0, 1, 1], [], []>} : vector<8x128xbf16>, vector<128x128xbf16>, vector<8x128xf32> -> vector<8x128xf32>
    %107 = vector.broadcast %102 : vector<1x128xf32> to vector<8x128xf32>
    %108 = arith.addf %106, %107 : vector<8x128xf32>
    %cst_54 = arith.constant 0.176776692 : f32
    %109 = vector.broadcast %cst_54 : f32 to vector<8x128xf32>
    %110 = arith.mulf %108, %109 : vector<8x128xf32>
    %c0_55 = arith.constant 0 : index
    %c0_56 = arith.constant 0 : index
    %111 = vector.load %arg6[%c0_55, %c0_56] : memref<128x128xbf16, #tpu.memory_space<vmem>>, vector<128x128xbf16>
    %cst_57 = arith.constant dense<0.000000e+00> : vector<8x128xf32>
    %112 = tpu.matmul %101, %111, %cst_57 {dimension_numbers = #tpu.dot_dimension_numbers<[1], [0], [0], [1], [0, 0, 1, 1], [], []>} : vector<8x128xbf16>, vector<128x128xbf16>, vector<8x128xf32> -> vector<8x128xf32>
    %113 = vector.broadcast %103 : vector<1x128xf32> to vector<8x128xf32>
    %114 = arith.addf %112, %113 : vector<8x128xf32>
    %c0_58 = arith.constant 0 : index
    %c0_59 = arith.constant 0 : index
    %115 = vector.load %arg8[%c0_58, %c0_59] : memref<128x128xbf16, #tpu.memory_space<vmem>>, vector<128x128xbf16>
    %cst_60 = arith.constant dense<0.000000e+00> : vector<8x128xf32>
    %116 = tpu.matmul %101, %115, %cst_60 {dimension_numbers = #tpu.dot_dimension_numbers<[1], [0], [0], [1], [0, 0, 1, 1], [], []>} : vector<8x128xbf16>, vector<128x128xbf16>, vector<8x128xf32> -> vector<8x128xf32>
    %117 = vector.broadcast %104 : vector<1x128xf32> to vector<8x128xf32>
    %118 = arith.addf %116, %117 : vector<8x128xf32>
    %c0_61 = arith.constant 0 : index
    %c0_62 = arith.constant 0 : index
    %119 = vector.load %arg6[%c0_61, %c0_62] : memref<128x128xbf16, #tpu.memory_space<vmem>>, vector<128x128xbf16>
    %cst_63 = arith.constant dense<0.000000e+00> : vector<512x128xf32>
    %120 = tpu.matmul %49, %119, %cst_63 {dimension_numbers = #tpu.dot_dimension_numbers<[1], [0], [0], [1], [0, 0, 1, 1], [], []>} : vector<512x128xbf16>, vector<128x128xbf16>, vector<512x128xf32> -> vector<512x128xf32>
    %121 = vector.broadcast %103 : vector<1x128xf32> to vector<512x128xf32>
    %122 = arith.addf %120, %121 : vector<512x128xf32>
    %c0_64 = arith.constant 0 : index
    %c0_65 = arith.constant 0 : index
    %123 = vector.load %arg8[%c0_64, %c0_65] : memref<128x128xbf16, #tpu.memory_space<vmem>>, vector<128x128xbf16>
    %cst_66 = arith.constant dense<0.000000e+00> : vector<512x128xf32>
    %124 = tpu.matmul %49, %123, %cst_66 {dimension_numbers = #tpu.dot_dimension_numbers<[1], [0], [0], [1], [0, 0, 1, 1], [], []>} : vector<512x128xbf16>, vector<128x128xbf16>, vector<512x128xf32> -> vector<512x128xf32>
    %125 = vector.broadcast %104 : vector<1x128xf32> to vector<512x128xf32>
    %126 = arith.addf %124, %125 : vector<512x128xf32>
    %127 = vector.shape_cast %110 : vector<8x128xf32> to vector<8x1x128xf32>
    %128 = vector.shape_cast %122 : vector<512x128xf32> to vector<8x64x128xf32>
    %129 = vector.broadcast %127 : vector<8x1x128xf32> to vector<8x64x128xf32>
    %130 = arith.mulf %129, %128 : vector<8x64x128xf32>
    %131 = vector.shape_cast %130 : vector<8x64x128xf32> to vector<512x128xf32>
    %132 = arith.truncf %131 : vector<512x128xf32> to vector<512x128xbf16>
    %cst_67 = arith.constant dense<0.000000e+00> : vector<512x4xf32>
    %133 = tpu.matmul %132, %79, %cst_67 {dimension_numbers = #tpu.dot_dimension_numbers<[1], [0], [0], [1], [0, 0, 1, 1], [], []>} : vector<512x128xbf16>, vector<128x4xbf16>, vector<512x4xf32> -> vector<512x4xf32>
    %134 = vector.shape_cast %133 : vector<512x4xf32> to vector<8x64x4xf32>
    %135 = arith.mulf %110, %114 : vector<8x128xf32>
    %136 = arith.truncf %135 : vector<8x128xf32> to vector<8x128xbf16>
    %cst_68 = arith.constant dense<0.000000e+00> : vector<8x4xf32>
    %137 = tpu.matmul %136, %79, %cst_68 {dimension_numbers = #tpu.dot_dimension_numbers<[1], [0], [0], [1], [0, 0, 1, 1], [], []>} : vector<8x128xbf16>, vector<128x4xbf16>, vector<8x4xf32> -> vector<8x4xf32>
    %cst_69 = arith.constant dense<0xFF800000> : vector<8x4xf32>
    %138 = vector.multi_reduction <maximumf>, %134, %cst_69 [1] : vector<8x64x4xf32> to vector<8x4xf32>
    %139 = arith.maximumf %138, %137 : vector<8x4xf32>
    %140 = vector.shape_cast %139 : vector<8x4xf32> to vector<8x1x4xf32>
    %141 = vector.broadcast %140 : vector<8x1x4xf32> to vector<8x64x4xf32>
    %142 = arith.subf %134, %141 : vector<8x64x4xf32>
    %143 = math.exp %142 : vector<8x64x4xf32>
    %144 = arith.subf %137, %139 : vector<8x4xf32>
    %145 = math.exp %144 : vector<8x4xf32>
    %cst_70 = arith.constant dense<0.000000e+00> : vector<8x4xf32>
    %146 = vector.multi_reduction <add>, %143, %cst_70 [1] : vector<8x64x4xf32> to vector<8x4xf32>
    %147 = arith.addf %145, %146 : vector<8x4xf32>
    %148 = tpu.reciprocal %147 {approx = true} : vector<8x4xf32> -> vector<8x4xf32>
    %149 = vector.shape_cast %148 : vector<8x4xf32> to vector<8x1x4xf32>
    %150 = vector.broadcast %149 : vector<8x1x4xf32> to vector<8x64x4xf32>
    %151 = arith.mulf %143, %150 : vector<8x64x4xf32>
    %152 = vector.shape_cast %151 : vector<8x64x4xf32> to vector<512x4xf32>
    %153 = arith.mulf %145, %148 : vector<8x4xf32>
    %154 = arith.truncf %152 : vector<512x4xf32> to vector<512x4xbf16>
    %cst_71 = arith.constant dense<0.000000e+00> : vector<512x128xf32>
    %155 = tpu.matmul %154, %94, %cst_71 {dimension_numbers = #tpu.dot_dimension_numbers<[1], [0], [0], [1], [0, 0, 1, 1], [], []>} : vector<512x4xbf16>, vector<4x128xbf16>, vector<512x128xf32> -> vector<512x128xf32>
    %156 = arith.mulf %155, %126 : vector<512x128xf32>
    %157 = arith.truncf %156 : vector<512x128xf32> to vector<512x128xbf16>
    %cst_72 = arith.constant dense<0.000000e+00> : vector<8x128xf32>
    %158 = tpu.matmul %64, %157, %cst_72 {dimension_numbers = #tpu.dot_dimension_numbers<[1], [0], [0], [1], [0, 0, 1, 1], [], []>} : vector<8x512xbf16>, vector<512x128xbf16>, vector<8x128xf32> -> vector<8x128xf32>
    %159 = arith.truncf %153 : vector<8x4xf32> to vector<8x4xbf16>
    %cst_73 = arith.constant dense<0.000000e+00> : vector<8x128xf32>
    %160 = tpu.matmul %159, %94, %cst_73 {dimension_numbers = #tpu.dot_dimension_numbers<[1], [0], [0], [1], [0, 0, 1, 1], [], []>} : vector<8x4xbf16>, vector<4x128xbf16>, vector<8x128xf32> -> vector<8x128xf32>
    %161 = arith.mulf %160, %118 : vector<8x128xf32>
    %162 = arith.addf %158, %161 : vector<8x128xf32>
    %163 = arith.truncf %162 : vector<8x128xf32> to vector<8x128xbf16>
    %c0_74 = arith.constant 0 : index
    %c0_75 = arith.constant 0 : index
    %164 = vector.load %arg10[%c0_74, %c0_75] : memref<128x128xbf16, #tpu.memory_space<vmem>>, vector<128x128xbf16>
    %cst_76 = arith.constant dense<0.000000e+00> : vector<8x128xf32>
    %165 = tpu.matmul %163, %164, %cst_76 {dimension_numbers = #tpu.dot_dimension_numbers<[1], [0], [0], [1], [0, 0, 1, 1], [], []>} : vector<8x128xbf16>, vector<128x128xbf16>, vector<8x128xf32> -> vector<8x128xf32>
    %c0_77 = arith.constant 0 : index
    %c0_78 = arith.constant 0 : index
    %166 = vector.load %arg11[%c0_77, %c0_78] : memref<1x128xf32, #tpu.memory_space<vmem>>, vector<1x128xf32>
    %167 = vector.broadcast %166 : vector<1x128xf32> to vector<8x128xf32>
    %168 = arith.addf %165, %167 : vector<8x128xf32>
    %c0_79 = arith.constant 0 : index
    %c0_80 = arith.constant 0 : index
    %169 = vector.load %arg12[%c0_79, %c0_80] : memref<8x128xf32, #tpu.memory_space<vmem>>, vector<8x128xf32>
    tpu.vector_store %arg12[%c0_79, %c0_80], %168 {strides = array<i32>} : memref<8x128xf32, #tpu.memory_space<vmem>>, vector<8x128xf32>,
    return
  }
  func.func @transform_0(%arg0: i32) -> (i32, i32, i32) {
    %c0_i32 = arith.constant 0 : i32
    %c0_i32_0 = arith.constant 0 : i32
    %c0_i32_1 = arith.constant 0 : i32
    return %arg0, %c0_i32, %c0_i32_0 : i32, i32, i32
  }
  func.func @transform_1(%arg0: i32) -> (i32, i32) {
    %c0_i32 = arith.constant 0 : i32
    %c0_i32_0 = arith.constant 0 : i32
    %c0_i32_1 = arith.constant 0 : i32
    return %c0_i32, %c0_i32_0 : i32, i32
  }
  func.func @transform_2(%arg0: i32) -> (i32, i32) {
    %c0_i32 = arith.constant 0 : i32
    %c0_i32_0 = arith.constant 0 : i32
    %c0_i32_1 = arith.constant 0 : i32
    return %c0_i32, %c0_i32_0 : i32, i32
  }
  func.func @transform_3(%arg0: i32) -> (i32, i32) {
    %c0_i32 = arith.constant 0 : i32
    %c0_i32_0 = arith.constant 0 : i32
    %c0_i32_1 = arith.constant 0 : i32
    return %c0_i32, %c0_i32_0 : i32, i32
  }
  func.func @transform_4(%arg0: i32) -> (i32, i32) {
    %c0_i32 = arith.constant 0 : i32
    %c0_i32_0 = arith.constant 0 : i32
    %c0_i32_1 = arith.constant 0 : i32
    return %c0_i32, %c0_i32_0 : i32, i32
  }
  func.func @transform_5(%arg0: i32) -> (i32, i32) {
    %c0_i32 = arith.constant 0 : i32
    %c0_i32_0 = arith.constant 0 : i32
    %c0_i32_1 = arith.constant 0 : i32
    return %c0_i32, %c0_i32_0 : i32, i32
  }
  func.func @transform_6(%arg0: i32) -> (i32, i32) {
    %c0_i32 = arith.constant 0 : i32
    %c0_i32_0 = arith.constant 0 : i32
    %c0_i32_1 = arith.constant 0 : i32
    return %c0_i32, %c0_i32_0 : i32, i32
  }
  func.func @transform_7(%arg0: i32) -> (i32, i32) {
    %c0_i32 = arith.constant 0 : i32
    %c0_i32_0 = arith.constant 0 : i32
    %c0_i32_1 = arith.constant 0 : i32
    return %c0_i32, %c0_i32_0 : i32, i32
  }
  func.func @transform_8(%arg0: i32) -> (i32, i32) {
    %c0_i32 = arith.constant 0 : i32
    %c0_i32_0 = arith.constant 0 : i32
    %c0_i32_1 = arith.constant 0 : i32
    return %c0_i32, %c0_i32_0 : i32, i32
  }
  func.func @transform_9(%arg0: i32) -> (i32, i32) {
    %c0_i32 = arith.constant 0 : i32
    %c0_i32_0 = arith.constant 0 : i32
    %c0_i32_1 = arith.constant 0 : i32
    return %c0_i32, %c0_i32_0 : i32, i32
  }
  func.func @transform_10(%arg0: i32) -> (i32, i32) {
    %c0_i32 = arith.constant 0 : i32
    %c0_i32_0 = arith.constant 0 : i32
    %c0_i32_1 = arith.constant 0 : i32
    return %c0_i32, %c0_i32_0 : i32, i32
  }
  func.func @transform_11(%arg0: i32) -> (i32, i32) {
    %c0_i32 = arith.constant 0 : i32
    %c0_i32_0 = arith.constant 0 : i32
    return %arg0, %c0_i32 : i32, i32
  }
}

</mosaic_0001>

<llo_original>
// kernel: tpu_custom_call.1
$region0: #{tpu_custom_call.1}
  #allocation0 [shape = 'u32[]', space=smem, size = 0x4, offset = 0x4, fixed_abs, tag = 'smem constant byte address 0x4 - core index']
  #allocation1 [shape = 'u32[144,128]{1,0:T(1,128)}', space=vmem, size = 0x12000, scoped, tag = 'internal scratch']
  #allocation2 [shape = 'bf16[512,128]{1,0:T(16,128)(2,1)}', space=vmem, size = 0x20000, scoped, tag = 'scratch operand']
  %s0 = inlined_call_operand.hbm [shape: f32[16,128,64], index: 0, kind: input, shape index: {}]
  %s1 = inlined_call_operand.hbm [shape: f32[64,128], index: 1, kind: input, shape index: {}]
  %s2 = inlined_call_operand.hbm [shape: f32[1,128], index: 2, kind: input, shape index: {}]
  %s3 = inlined_call_operand.hbm [shape: bf16[128,128], index: 3, kind: input, shape index: {}]
  %s4 = inlined_call_operand.hbm [shape: f32[1,128], index: 4, kind: input, shape index: {}]
  %s5 = inlined_call_operand.hbm [shape: bf16[128,128], index: 5, kind: input, shape index: {}]
  %s6 = inlined_call_operand.hbm [shape: f32[1,128], index: 6, kind: input, shape index: {}]
  %s7 = inlined_call_operand.hbm [shape: bf16[128,128], index: 7, kind: input, shape index: {}]
  %s8 = inlined_call_operand.hbm [shape: f32[1,128], index: 8, kind: input, shape index: {}]
  %s9 = inlined_call_operand.hbm [shape: bf16[128,128], index: 9, kind: input, shape index: {}]
  %s10 = inlined_call_operand.hbm [shape: f32[1,128], index: 10, kind: input, shape index: {}]
  %s11 = inlined_call_operand.hbm [shape: f32[16,128], index: 11, kind: output, shape index: {}]
  %s12 = sld [smem:[#allocation0]]
  $region121: #{tpu_custom_call.1} parent=0
    _
  %s14 = ssub.s32 1, %s12
  %s15 = scalar_select 0, %s14, %s12
  $region1: #{tpu_custom_call.1} parent=0
    #allocation3 [shape = 'u8[1048576]{0}', space=vmem, size = 0x100000, scoped, tag = 'input window, operand 0']
    #allocation4 [shape = 's32[2]{0}', space=sflag, size = 0x8, scoped, tag = 'scoped memory for tpu_custom_call.1']
    #allocation5 [shape = 's32[2]{0}', space=sflag, size = 0x8, scoped, tag = 'scoped memory for tpu_custom_call.1']
    #allocation6 [shape = 'u8[32768]{0}', space=vmem, size = 0x8000, scoped, tag = 'input window, operand 1, single buffered']
    #allocation7 [shape = 's32[1]{0}', space=sflag, size = 0x4, scoped, tag = 'scoped memory for tpu_custom_call.1']
    #allocation8 [shape = 'u8[512]{0}', space=vmem, size = 0x400, scoped, tag = 'input window, operand 2, single buffered']
    #allocation9 [shape = 'u8[32768]{0}', space=vmem, size = 0x8000, scoped, tag = 'input window, operand 3, single buffered']
    #allocation10 [shape = 's32[1]{0}', space=sflag, size = 0x4, scoped, tag = 'scoped memory for tpu_custom_call.1']
    #allocation11 [shape = 'u8[512]{0}', space=vmem, size = 0x400, scoped, tag = 'input window, operand 4, single buffered']
    #allocation12 [shape = 'u8[32768]{0}', space=vmem, size = 0x8000, scoped, tag = 'input window, operand 5, single buffered']
    #allocation13 [shape = 's32[1]{0}', space=sflag, size = 0x4, scoped, tag = 'scoped memory for tpu_custom_call.1']
    #allocation14 [shape = 'u8[512]{0}', space=vmem, size = 0x400, scoped, tag = 'input window, operand 6, single buffered']
    #allocation15 [shape = 'u8[32768]{0}', space=vmem, size = 0x8000, scoped, tag = 'input window, operand 7, single buffered']
    #allocation16 [shape = 's32[1]{0}', space=sflag, size = 0x4, scoped, tag = 'scoped memory for tpu_custom_call.1']
    #allocation17 [shape = 'u8[512]{0}', space=vmem, size = 0x400, scoped, tag = 'input window, operand 8, single buffered']
    #allocation18 [shape = 'u8[32768]{0}', space=vmem, size = 0x8000, scoped, tag = 'input window, operand 9, single buffered']
    #allocation19 [shape = 's32[1]{0}', space=sflag, size = 0x4, scoped, tag = 'scoped memory for tpu_custom_call.1']
    #allocation20 [shape = 'u8[512]{0}', space=vmem, size = 0x400, scoped, tag = 'input window, operand 10, single buffered']
    #allocation21 [shape = 'u8[8192]{0}', space=vmem, size = 0x2000, scoped, tag = 'output window, operand 0']
    %16 = vsyncpa [#allocation4], 0
    %s17 = scalar_lea.sflag [#allocation4], 1
    %18 = vsyncpa %s17, 0
    %19 = vsyncpa [#allocation7], 0
    %20 = vsyncpa [#allocation10], 0
    %21 = vsyncpa [#allocation13], 0
    %22 = vsyncpa [#allocation16], 0
    %23 = vsyncpa [#allocation19], 0
    %24 = vsyncpa [#allocation5], 0
    %s25 = scalar_lea.sflag [#allocation5], 1
    %26 = vsyncpa %s25, 0
    loop: start=0, step=1, limit=4
    $region2: #{tpu_custom_call.1} parent=1 // loop_pre_header
      _
    $region3: #{tpu_custom_call.1} parent=1 // loop_header
      %s28 = sphi 0, %s32
      %p29 = scmp.ge.s32.totalorder %s28, 4
      %s38 = sphi 0, %s40
      %s41 = sphi 0, %s38
      %s42 = sphi 0, %s41
      %s58 = sphi 0, %s42
      %s62 = sphi 0, %s62
      %s64 = sphi 0, %s62
      %s65 = sphi 0, %s64
      %s79 = sphi 0, %s65
      %s83 = sphi 0, %s83
      %s85 = sphi 0, %s83
      %s86 = sphi 0, %s85
      %s100 = sphi 0, %s86
      %s104 = sphi 0, %s104
      %s106 = sphi 0, %s104
      %s107 = sphi 0, %s106
      %s121 = sphi 0, %s107
      %s125 = sphi 0, %s125
      %s127 = sphi 0, %s125
      %s128 = sphi 0, %s127
      %s142 = sphi 0, %s128
      %s146 = sphi 0, %s146
      %s148 = sphi 0, %s146
      %s149 = sphi 0, %s148
      %s163 = sphi 0, %s149
      %s167 = sphi 0, %s167
      %s169 = sphi 0, %s167
      %s170 = sphi 0, %s169
      %s184 = sphi 0, %s170
      %s188 = sphi 0, %s188
      %s190 = sphi 0, %s188
      %s191 = sphi 0, %s190
      %s205 = sphi 0, %s191
      %s209 = sphi 0, %s209
      %s211 = sphi 0, %s209
      %s212 = sphi 0, %s211
      %s226 = sphi 0, %s212
      %s230 = sphi 0, %s230
      %s232 = sphi 0, %s230
      %s233 = sphi 0, %s232
      %s247 = sphi 0, %s233
      %s251 = sphi 0, %s251
      %s253 = sphi 0, %s251
      %s254 = sphi 0, %s253
      %s268 = sphi 0, %s254
      %s274 = sphi 0, %s276
      %s277 = sphi 0, %s274
      %s278 = sphi 0, %s277
      %s294 = sphi 0, %s278
    $region4: #{tpu_custom_call.1} parent=1 // loop_header_branch
      %31 = sbr.rel (%p29) target = $region8
    $region5: #{tpu_custom_call.1} parent=1 // loop_body
      %s33 = ssub.s32 %s28, 1
      %s34 = ssub.s32 %s28, 2
      %s35 = sadd.s32 %s28, 1
      %s36 = ssub.s32 %s28, %s35
      %p37 = scmp.eq.s32.totalorder %s36, 0
      %s39 = sadd.s32 %s38, 1
      %s40 = scalar_select %p37, %s38, %s39
      %p43 = pneg %p37
      %p44 = scmp.eq.s32.totalorder %s28, 1
      %p45 = por %p43, %p44
      %p46 = scmp.ne.s32.totalorder %s38, %s41
      %p47 = scmp.eq.s32.totalorder %s28, 0
      %p48 = por %p46, %p47
      %p49 = scmp.ne.s32.totalorder %s38, %s41
      %p50 = scmp.eq.s32.totalorder %s33, 1
      %p51 = por %p49, %p50
      %p52 = scmp.ne.s32.totalorder %s41, %s42
      %p53 = scmp.eq.s32.totalorder %s33, 0
      %p54 = por %p52, %p53
      %p55 = scmp.ne.s32.totalorder %s41, %s42
      %p56 = scmp.eq.s32.totalorder %s34, 1
      %p57 = por %p55, %p56
      %p59 = scmp.ne.s32.totalorder %s42, %s58
      %p60 = scmp.eq.s32.totalorder %s34, 0
      %p61 = por %p59, %p60
      %s63 = sadd.s32 %s62, 1
      %p66 = scmp.eq.s32.totalorder %s28, 1
      %p67 = scmp.ne.s32.totalorder %s62, %s64
      %p68 = scmp.eq.s32.totalorder %s28, 0
      %p69 = por %p67, %p68
      %p70 = scmp.ne.s32.totalorder %s62, %s64
      %p71 = scmp.eq.s32.totalorder %s33, 1
      %p72 = por %p70, %p71
      %p73 = scmp.ne.s32.totalorder %s64, %s65
      %p74 = scmp.eq.s32.totalorder %s33, 0
      %p75 = por %p73, %p74
      %p76 = scmp.ne.s32.totalorder %s64, %s65
      %p77 = scmp.eq.s32.totalorder %s34, 1
      %p78 = por %p76, %p77
      %p80 = scmp.ne.s32.totalorder %s65, %s79
      %p81 = scmp.eq.s32.totalorder %s34, 0
      %p82 = por %p80, %p81
      %s84 = sadd.s32 %s83, 1
      %p87 = scmp.eq.s32.totalorder %s28, 1
      %p88 = scmp.ne.s32.totalorder %s83, %s85
      %p89 = scmp.eq.s32.totalorder %s28, 0
      %p90 = por %p88, %p89
      %p91 = scmp.ne.s32.totalorder %s83, %s85
      %p92 = scmp.eq.s32.totalorder %s33, 1
      %p93 = por %p91, %p92
      %p94 = scmp.ne.s32.totalorder %s85, %s86
      %p95 = scmp.eq.s32.totalorder %s33, 0
      %p96 = por %p94, %p95
      %p97 = scmp.ne.s32.totalorder %s85, %s86
      %p98 = scmp.eq.s32.totalorder %s34, 1
      %p99 = por %p97, %p98
      %p101 = scmp.ne.s32.totalorder %s86, %s100
      %p102 = scmp.eq.s32.totalorder %s34, 0
      %p103 = por %p101, %p102
      %s105 = sadd.s32 %s104, 1
      %p108 = scmp.eq.s32.totalorder %s28, 1
      %p109 = scmp.ne.s32.totalorder %s104, %s106
      %p110 = scmp.eq.s32.totalorder %s28, 0
      %p111 = por %p109, %p110
      %p112 = scmp.ne.s32.totalorder %s104, %s106
      %p113 = scmp.eq.s32.totalorder %s33, 1
      %p114 = por %p112, %p113
      %p115 = scmp.ne.s32.totalorder %s106, %s107
      %p116 = scmp.eq.s32.totalorder %s33, 0
      %p117 = por %p115, %p116
      %p118 = scmp.ne.s32.totalorder %s106, %s107
      %p119 = scmp.eq.s32.totalorder %s34, 1
      %p120 = por %p118, %p119
      %p122 = scmp.ne.s32.totalorder %s107, %s121
      %p123 = scmp.eq.s32.totalorder %s34, 0
      %p124 = por %p122, %p123
      %s126 = sadd.s32 %s125, 1
      %p129 = scmp.eq.s32.totalorder %s28, 1
      %p130 = scmp.ne.s32.totalorder %s125, %s127
      %p131 = scmp.eq.s32.totalorder %s28, 0
      %p132 = por %p130, %p131
      %p133 = scmp.ne.s32.totalorder %s125, %s127
      %p134 = scmp.eq.s32.totalorder %s33, 1
      %p135 = por %p133, %p134
      %p136 = scmp.ne.s32.totalorder %s127, %s128
      %p137 = scmp.eq.s32.totalorder %s33, 0
      %p138 = por %p136, %p137
      %p139 = scmp.ne.s32.totalorder %s127, %s128
      %p140 = scmp.eq.s32.totalorder %s34, 1
      %p141 = por %p139, %p140
      %p143 = scmp.ne.s32.totalorder %s128, %s142
      %p144 = scmp.eq.s32.totalorder %s34, 0
      %p145 = por %p143, %p144
      %s147 = sadd.s32 %s146, 1
      %p150 = scmp.eq.s32.totalorder %s28, 1
      %p151 = scmp.ne.s32.totalorder %s146, %s148
      %p152 = scmp.eq.s32.totalorder %s28, 0
      %p153 = por %p151, %p152
      %p154 = scmp.ne.s32.totalorder %s146, %s148
      %p155 = scmp.eq.s32.totalorder %s33, 1
      %p156 = por %p154, %p155
      %p157 = scmp.ne.s32.totalorder %s148, %s149
      %p158 = scmp.eq.s32.totalorder %s33, 0
      %p159 = por %p157, %p158
      %p160 = scmp.ne.s32.totalorder %s148, %s149
      %p161 = scmp.eq.s32.totalorder %s34, 1
      %p162 = por %p160, %p161
      %p164 = scmp.ne.s32.totalorder %s149, %s163
      %p165 = scmp.eq.s32.totalorder %s34, 0
      %p166 = por %p164, %p165
      %s168 = sadd.s32 %s167, 1
      %p171 = scmp.eq.s32.totalorder %s28, 1
      %p172 = scmp.ne.s32.totalorder %s167, %s169
      %p173 = scmp.eq.s32.totalorder %s28, 0
      %p174 = por %p172, %p173
      %p175 = scmp.ne.s32.totalorder %s167, %s169
      %p176 = scmp.eq.s32.totalorder %s33, 1
      %p177 = por %p175, %p176
      %p178 = scmp.ne.s32.totalorder %s169, %s170
      %p179 = scmp.eq.s32.totalorder %s33, 0
      %p180 = por %p178, %p179
      %p181 = scmp.ne.s32.totalorder %s169, %s170
      %p182 = scmp.eq.s32.totalorder %s34, 1
      %p183 = por %p181, %p182
      %p185 = scmp.ne.s32.totalorder %s170, %s184
      %p186 = scmp.eq.s32.totalorder %s34, 0
      %p187 = por %p185, %p186
      %s189 = sadd.s32 %s188, 1
      %p192 = scmp.eq.s32.totalorder %s28, 1
      %p193 = scmp.ne.s32.totalorder %s188, %s190
      %p194 = scmp.eq.s32.totalorder %s28, 0
      %p195 = por %p193, %p194
      %p196 = scmp.ne.s32.totalorder %s188, %s190
      %p197 = scmp.eq.s32.totalorder %s33, 1
      %p198 = por %p196, %p197
      %p199 = scmp.ne.s32.totalorder %s190, %s191
      %p200 = scmp.eq.s32.totalorder %s33, 0
      %p201 = por %p199, %p200
      %p202 = scmp.ne.s32.totalorder %s190, %s191
      %p203 = scmp.eq.s32.totalorder %s34, 1
      %p204 = por %p202, %p203
      %p206 = scmp.ne.s32.totalorder %s191, %s205
      %p207 = scmp.eq.s32.totalorder %s34, 0
      %p208 = por %p206, %p207
      %s210 = sadd.s32 %s209, 1
      %p213 = scmp.eq.s32.totalorder %s28, 1
      %p214 = scmp.ne.s32.totalorder %s209, %s211
      %p215 = scmp.eq.s32.totalorder %s28, 0
      %p216 = por %p214, %p215
      %p217 = scmp.ne.s32.totalorder %s209, %s211
      %p218 = scmp.eq.s32.totalorder %s33, 1
      %p219 = por %p217, %p218
      %p220 = scmp.ne.s32.totalorder %s211, %s212
      %p221 = scmp.eq.s32.totalorder %s33, 0
      %p222 = por %p220, %p221
      %p223 = scmp.ne.s32.totalorder %s211, %s212
      %p224 = scmp.eq.s32.totalorder %s34, 1
      %p225 = por %p223, %p224
      %p227 = scmp.ne.s32.totalorder %s212, %s226
      %p228 = scmp.eq.s32.totalorder %s34, 0
      %p229 = por %p227, %p228
      %s231 = sadd.s32 %s230, 1
      %p234 = scmp.eq.s32.totalorder %s28, 1
      %p235 = scmp.ne.s32.totalorder %s230, %s232
      %p236 = scmp.eq.s32.totalorder %s28, 0
      %p237 = por %p235, %p236
      %p238 = scmp.ne.s32.totalorder %s230, %s232
      %p239 = scmp.eq.s32.totalorder %s33, 1
      %p240 = por %p238, %p239
      %p241 = scmp.ne.s32.totalorder %s232, %s233
      %p242 = scmp.eq.s32.totalorder %s33, 0
      %p243 = por %p241, %p242
      %p244 = scmp.ne.s32.totalorder %s232, %s233
      %p245 = scmp.eq.s32.totalorder %s34, 1
      %p246 = por %p244, %p245
      %p248 = scmp.ne.s32.totalorder %s233, %s247
      %p249 = scmp.eq.s32.totalorder %s34, 0
      %p250 = por %p248, %p249
      %s252 = sadd.s32 %s251, 1
      %p255 = scmp.eq.s32.totalorder %s28, 1
      %p256 = scmp.ne.s32.totalorder %s251, %s253
      %p257 = scmp.eq.s32.totalorder %s28, 0
      %p258 = por %p256, %p257
      %p259 = scmp.ne.s32.totalorder %s251, %s253
      %p260 = scmp.eq.s32.totalorder %s33, 1
      %p261 = por %p259, %p260
      %p262 = scmp.ne.s32.totalorder %s253, %s254
      %p263 = scmp.eq.s32.totalorder %s33, 0
      %p264 = por %p262, %p263
      %p265 = scmp.ne.s32.totalorder %s253, %s254
      %p266 = scmp.eq.s32.totalorder %s34, 1
      %p267 = por %p265, %p266
      %p269 = scmp.ne.s32.totalorder %s254, %s268
      %p270 = scmp.eq.s32.totalorder %s34, 0
      %p271 = por %p269, %p270
      %s272 = ssub.s32 %s28, %s35
      %p273 = scmp.eq.s32.totalorder %s272, 0
      %s275 = sadd.s32 %s274, 1
      %s276 = scalar_select %p273, %s274, %s275
      %p279 = pneg %p273
      %p280 = scmp.eq.s32.totalorder %s28, 1
      %p281 = por %p279, %p280
      %p282 = scmp.ne.s32.totalorder %s274, %s277
      %p283 = scmp.eq.s32.totalorder %s28, 0
      %p284 = por %p282, %p283
      %p285 = scmp.ne.s32.totalorder %s274, %s277
      %p286 = scmp.eq.s32.totalorder %s33, 1
      %p287 = por %p285, %p286
      %p288 = scmp.ne.s32.totalorder %s277, %s278
      %p289 = scmp.eq.s32.totalorder %s33, 0
      %p290 = por %p288, %p289
      %p291 = scmp.ne.s32.totalorder %s277, %s278
      %p292 = scmp.eq.s32.totalorder %s34, 1
      %p293 = por %p291, %p292
      %p295 = scmp.ne.s32.totalorder %s278, %s294
      %p296 = scmp.eq.s32.totalorder %s34, 0
      %p297 = por %p295, %p296
      %p298 = scmp.le.s32.totalorder 1, %s28
      %p299 = scmp.lt.s32.totalorder %s28, 3
      %p300 = pnand %p298, %p299
      %p301 = pneg %p300
      // Predicated region
      $region9: #{tpu_custom_call.1} parent=5 // pred_check
        _
      $region10: #{tpu_custom_call.1} parent=5 // pred_check_branch
        %303 = sbr.rel (%p300) target = $region12
      $region11: #{tpu_custom_call.1} parent=5 // pred_region
        %s304 = ssub.s32 %s28, 1
        // Predicated region
        $region13: #{tpu_custom_call.1} parent=11 // pred_check
          %p305 = pneg %p75
        $region14: #{tpu_custom_call.1} parent=11 // pred_check_branch
          %307 = sbr.rel (%p305) target = $region16
        $region15: #{tpu_custom_call.1} parent=11 // pred_region
          %s309 = ssub.s32 1024, 1024
          %310 = vsyncadd [#allocation7], %s309
          %s311 = sshll.u32 [#allocation6], 4
          %s312 = int_to_ptr.vmem [resolvable:$true] %s311
          %317 = dma.hbm_to_vmem [thread:$0]  %s1, 1024, %s312, [#allocation7], 128, 128, 8
        $region16: #{tpu_custom_call.1} parent=11 // pred_fallthru
          _
        // Predicated region
        $region17: #{tpu_custom_call.1} parent=11 // pred_check
          %p318 = pneg %p96
        $region18: #{tpu_custom_call.1} parent=11 // pred_check_branch
          %320 = sbr.rel (%p318) target = $region20
        $region19: #{tpu_custom_call.1} parent=11 // pred_region
          %s322 = ssub.s32 16, 16
          %323 = vsyncadd [#allocation7], %s322
          %s325 = sshll.u32 [#allocation8], 4
          %s326 = int_to_ptr.vmem [resolvable:$true] %s325
          %328 = dma.hbm_to_vmem [thread:$0]  %s2, 16, %s326, [#allocation7]
        $region20: #{tpu_custom_call.1} parent=11 // pred_fallthru
          _
        // Predicated region
        $region21: #{tpu_custom_call.1} parent=11 // pred_check
          %p329 = pneg %p117
        $region22: #{tpu_custom_call.1} parent=11 // pred_check_branch
          %331 = sbr.rel (%p329) target = $region24
        $region23: #{tpu_custom_call.1} parent=11 // pred_region
          %s333 = ssub.s32 1024, 1024
          %334 = vsyncadd [#allocation10], %s333
          %s335 = sshll.u32 [#allocation9], 4
          %s336 = int_to_ptr.vmem [resolvable:$true] %s335
          %341 = dma.hbm_to_vmem [thread:$0]  %s3, 1024, %s336, [#allocation10], 64, 64, 4
        $region24: #{tpu_custom_call.1} parent=11 // pred_fallthru
          _
        // Predicated region
        $region25: #{tpu_custom_call.1} parent=11 // pred_check
          %p342 = pneg %p138
        $region26: #{tpu_custom_call.1} parent=11 // pred_check_branch
          %344 = sbr.rel (%p342) target = $region28
        $region27: #{tpu_custom_call.1} parent=11 // pred_region
          %s346 = ssub.s32 16, 16
          %347 = vsyncadd [#allocation10], %s346
          %s349 = sshll.u32 [#allocation11], 4
          %s350 = int_to_ptr.vmem [resolvable:$true] %s349
          %352 = dma.hbm_to_vmem [thread:$0]  %s4, 16, %s350, [#allocation10]
        $region28: #{tpu_custom_call.1} parent=11 // pred_fallthru
          _
        // Predicated region
        $region29: #{tpu_custom_call.1} parent=11 // pred_check
          %p353 = pneg %p159
        $region30: #{tpu_custom_call.1} parent=11 // pred_check_branch
          %355 = sbr.rel (%p353) target = $region32
        $region31: #{tpu_custom_call.1} parent=11 // pred_region
          %s357 = ssub.s32 1024, 1024
          %358 = vsyncadd [#allocation13], %s357
          %s359 = sshll.u32 [#allocation12], 4
          %s360 = int_to_ptr.vmem [resolvable:$true] %s359
          %365 = dma.hbm_to_vmem [thread:$0]  %s5, 1024, %s360, [#allocation13], 64, 64, 4
        $region32: #{tpu_custom_call.1} parent=11 // pred_fallthru
          _
        // Predicated region
        $region33: #{tpu_custom_call.1} parent=11 // pred_check
          %p366 = pneg %p180
        $region34: #{tpu_custom_call.1} parent=11 // pred_check_branch
          %368 = sbr.rel (%p366) target = $region36
        $region35: #{tpu_custom_call.1} parent=11 // pred_region
          %s370 = ssub.s32 16, 16
          %371 = vsyncadd [#allocation13], %s370
          %s373 = sshll.u32 [#allocation14], 4
          %s374 = int_to_ptr.vmem [resolvable:$true] %s373
          %376 = dma.hbm_to_vmem [thread:$0]  %s6, 16, %s374, [#allocation13]
        $region36: #{tpu_custom_call.1} parent=11 // pred_fallthru
          _
        // Predicated region
        $region37: #{tpu_custom_call.1} parent=11 // pred_check
          %p377 = pneg %p201
        $region38: #{tpu_custom_call.1} parent=11 // pred_check_branch
          %379 = sbr.rel (%p377) target = $region40
        $region39: #{tpu_custom_call.1} parent=11 // pred_region
          %s381 = ssub.s32 1024, 1024
          %382 = vsyncadd [#allocation16], %s381
          %s383 = sshll.u32 [#allocation15], 4
          %s384 = int_to_ptr.vmem [resolvable:$true] %s383
          %389 = dma.hbm_to_vmem [thread:$0]  %s7, 1024, %s384, [#allocation16], 64, 64, 4
        $region40: #{tpu_custom_call.1} parent=11 // pred_fallthru
          _
        // Predicated region
        $region41: #{tpu_custom_call.1} parent=11 // pred_check
          %p390 = pneg %p222
        $region42: #{tpu_custom_call.1} parent=11 // pred_check_branch
          %392 = sbr.rel (%p390) target = $region44
        $region43: #{tpu_custom_call.1} parent=11 // pred_region
          %s394 = ssub.s32 16, 16
          %395 = vsyncadd [#allocation16], %s394
          %s397 = sshll.u32 [#allocation17], 4
          %s398 = int_to_ptr.vmem [resolvable:$true] %s397
          %400 = dma.hbm_to_vmem [thread:$0]  %s8, 16, %s398, [#allocation16]
        $region44: #{tpu_custom_call.1} parent=11 // pred_fallthru
          _
        // Predicated region
        $region45: #{tpu_custom_call.1} parent=11 // pred_check
          %p401 = pneg %p243
        $region46: #{tpu_custom_call.1} parent=11 // pred_check_branch
          %403 = sbr.rel (%p401) target = $region48
        $region47: #{tpu_custom_call.1} parent=11 // pred_region
          %s405 = ssub.s32 1024, 1024
          %406 = vsyncadd [#allocation19], %s405
          %s407 = sshll.u32 [#allocation18], 4
          %s408 = int_to_ptr.vmem [resolvable:$true] %s407
          %413 = dma.hbm_to_vmem [thread:$0]  %s9, 1024, %s408, [#allocation19], 64, 64, 4
        $region48: #{tpu_custom_call.1} parent=11 // pred_fallthru
          _
        // Predicated region
        $region49: #{tpu_custom_call.1} parent=11 // pred_check
          %p414 = pneg %p264
        $region50: #{tpu_custom_call.1} parent=11 // pred_check_branch
          %416 = sbr.rel (%p414) target = $region52
        $region51: #{tpu_custom_call.1} parent=11 // pred_region
          %s418 = ssub.s32 16, 16
          %419 = vsyncadd [#allocation19], %s418
          %s421 = sshll.u32 [#allocation20], 4
          %s422 = int_to_ptr.vmem [resolvable:$true] %s421
          %424 = dma.hbm_to_vmem [thread:$0]  %s10, 16, %s422, [#allocation19]
        $region52: #{tpu_custom_call.1} parent=11 // pred_fallthru
          _
      $region12: #{tpu_custom_call.1} parent=5 // pred_fallthru
        _
      %p425 = scmp.lt.s32.totalorder %s28, 2
      // Predicated region
      $region53: #{tpu_custom_call.1} parent=5 // pred_check
        %p426 = pneg %p425
      $region54: #{tpu_custom_call.1} parent=5 // pred_check_branch
        %428 = sbr.rel (%p426) target = $region56
      $region55: #{tpu_custom_call.1} parent=5 // pred_region
        // Predicated region
        $region57: #{tpu_custom_call.1} parent=55 // pred_check
          %p429 = pneg %p48
        $region58: #{tpu_custom_call.1} parent=55 // pred_check_branch
          %431 = sbr.rel (%p429) target = $region60
        $region59: #{tpu_custom_call.1} parent=55 // pred_region
          %s432 = sand.u32 %s38, 1
          %s433 = scalar_lea.sflag [#allocation4], %s432
          %s434 = sand.u32 %s38, 1
          %s435 = smul.addr %s434, 1024
          %s436 = scalar_lea.vmem [#allocation3], %s435
          %s437 = smul.u32 8, %s28
          %s439 = ssub.s32 16384, 16384
          %440 = vsyncadd %s433, %s439
          %s441 = smul.addr %s437, 16
          %s442 = smul.addr %s441, 128
          %s443 = scalar_lea.hbm %s0, %s442
          %s444 = sshll.u32 %s436, 4
          %s445 = int_to_ptr.vmem [resolvable:$true] %s444
          %450 = dma.hbm_to_vmem [thread:$0]  %s443, 16384, %s445, %s433, 128, 128, 8
        $region60: #{tpu_custom_call.1} parent=55 // pred_fallthru
          _
      $region56: #{tpu_custom_call.1} parent=5 // pred_fallthru
        _
      %p451 = scmp.le.s32.totalorder 1, %s28
      %p452 = scmp.lt.s32.totalorder %s28, 3
      %p453 = pnand %p451, %p452
      %p454 = pneg %p453
      // Predicated region
      $region61: #{tpu_custom_call.1} parent=5 // pred_check
        _
      $region62: #{tpu_custom_call.1} parent=5 // pred_check_branch
        %456 = sbr.rel (%p453) target = $region64
      $region63: #{tpu_custom_call.1} parent=5 // pred_region
        %s457 = ssub.s32 %s28, 1
        %s458 = sand.u32 %s41, 1
        %s459 = scalar_lea.sflag [#allocation4], %s458
        %s460 = sand.u32 %s41, 1
        %s461 = smul.addr %s460, 1024
        %s462 = scalar_lea.vmem [#allocation3], %s461
        // Predicated region
        $region65: #{tpu_custom_call.1} parent=63 // pred_check
          %p463 = pneg %p54
        $region66: #{tpu_custom_call.1} parent=63 // pred_check_branch
          %465 = sbr.rel (%p463) target = $region68
        $region67: #{tpu_custom_call.1} parent=63 // pred_region
          %466 = dma.done %s459, 16384
        $region68: #{tpu_custom_call.1} parent=63 // pred_fallthru
          _
        // Predicated region
        $region69: #{tpu_custom_call.1} parent=63 // pred_check
          %p467 = pneg %p75
        $region70: #{tpu_custom_call.1} parent=63 // pred_check_branch
          %469 = sbr.rel (%p467) target = $region72
        $region71: #{tpu_custom_call.1} parent=63 // pred_region
          %470 = dma.done [#allocation7], 1024
        $region72: #{tpu_custom_call.1} parent=63 // pred_fallthru
          _
        // Predicated region
        $region73: #{tpu_custom_call.1} parent=63 // pred_check
          %p471 = pneg %p96
        $region74: #{tpu_custom_call.1} parent=63 // pred_check_branch
          %473 = sbr.rel (%p471) target = $region76
        $region75: #{tpu_custom_call.1} parent=63 // pred_region
          %474 = dma.done [#allocation7], 16
        $region76: #{tpu_custom_call.1} parent=63 // pred_fallthru
          _
        // Predicated region
        $region77: #{tpu_custom_call.1} parent=63 // pred_check
          %p475 = pneg %p117
        $region78: #{tpu_custom_call.1} parent=63 // pred_check_branch
          %477 = sbr.rel (%p475) target = $region80
        $region79: #{tpu_custom_call.1} parent=63 // pred_region
          %478 = dma.done [#allocation10], 1024
        $region80: #{tpu_custom_call.1} parent=63 // pred_fallthru
          _
        // Predicated region
        $region81: #{tpu_custom_call.1} parent=63 // pred_check
          %p479 = pneg %p138
        $region82: #{tpu_custom_call.1} parent=63 // pred_check_branch
          %481 = sbr.rel (%p479) target = $region84
        $region83: #{tpu_custom_call.1} parent=63 // pred_region
          %482 = dma.done [#allocation10], 16
        $region84: #{tpu_custom_call.1} parent=63 // pred_fallthru
          _
        // Predicated region
        $region85: #{tpu_custom_call.1} parent=63 // pred_check
          %p483 = pneg %p159
        $region86: #{tpu_custom_call.1} parent=63 // pred_check_branch
          %485 = sbr.rel (%p483) target = $region88
        $region87: #{tpu_custom_call.1} parent=63 // pred_region
          %486 = dma.done [#allocation13], 1024
        $region88: #{tpu_custom_call.1} parent=63 // pred_fallthru
          _
        // Predicated region
        $region89: #{tpu_custom_call.1} parent=63 // pred_check
          %p487 = pneg %p180
        $region90: #{tpu_custom_call.1} parent=63 // pred_check_branch
          %489 = sbr.rel (%p487) target = $region92
        $region91: #{tpu_custom_call.1} parent=63 // pred_region
          %490 = dma.done [#allocation13], 16
        $region92: #{tpu_custom_call.1} parent=63 // pred_fallthru
          _
        // Predicated region
        $region93: #{tpu_custom_call.1} parent=63 // pred_check
          %p491 = pneg %p201
        $region94: #{tpu_custom_call.1} parent=63 // pred_check_branch
          %493 = sbr.rel (%p491) target = $region96
        $region95: #{tpu_custom_call.1} parent=63 // pred_region
          %494 = dma.done [#allocation16], 1024
        $region96: #{tpu_custom_call.1} parent=63 // pred_fallthru
          _
        // Predicated region
        $region97: #{tpu_custom_call.1} parent=63 // pred_check
          %p495 = pneg %p222
        $region98: #{tpu_custom_call.1} parent=63 // pred_check_branch
          %497 = sbr.rel (%p495) target = $region100
        $region99: #{tpu_custom_call.1} parent=63 // pred_region
          %498 = dma.done [#allocation16], 16
        $region100: #{tpu_custom_call.1} parent=63 // pred_fallthru
          _
        // Predicated region
        $region101: #{tpu_custom_call.1} parent=63 // pred_check
          %p499 = pneg %p243
        $region102: #{tpu_custom_call.1} parent=63 // pred_check_branch
          %501 = sbr.rel (%p499) target = $region104
        $region103: #{tpu_custom_call.1} parent=63 // pred_region
          %502 = dma.done [#allocation19], 1024
        $region104: #{tpu_custom_call.1} parent=63 // pred_fallthru
          _
        // Predicated region
        $region105: #{tpu_custom_call.1} parent=63 // pred_check
          %p503 = pneg %p264
        $region106: #{tpu_custom_call.1} parent=63 // pred_check_branch
          %505 = sbr.rel (%p503) target = $region108
        $region107: #{tpu_custom_call.1} parent=63 // pred_region
          %506 = dma.done [#allocation19], 16
        $region108: #{tpu_custom_call.1} parent=63 // pred_fallthru
          _
        %s507 = sand.u32 %s41, 1
        %s508 = scalar_lea.sflag [#allocation4], %s507
        %s509 = sand.u32 %s41, 1
        %s510 = smul.addr %s509, 1024
        %s511 = scalar_lea.vmem [#allocation3], %s510
        %p512 = pneg %p54
        %p513 = pneg %p51
        %p514 = pneg %p75
        %p515 = pneg %p72
        %p516 = pneg %p96
        %p517 = pneg %p93
        %p518 = pneg %p117
        %p519 = pneg %p114
        %p520 = pneg %p138
        %p521 = pneg %p135
        %p522 = pneg %p159
        %p523 = pneg %p156
        %p524 = pneg %p180
        %p525 = pneg %p177
        %p526 = pneg %p201
        %p527 = pneg %p198
        %p528 = pneg %p222
        %p529 = pneg %p219
        %p530 = pneg %p243
        %p531 = pneg %p240
        %p532 = pneg %p264
        %p533 = pneg %p261
        %p534 = pneg %p290
        %p535 = pneg %p287
        %s536 = sand.u32 %s277, 1
        %s537 = scalar_lea.sflag [#allocation5], %s536
        %s538 = sand.u32 %s277, 1
        %s539 = smul.addr %s538, 8
        %s540 = scalar_lea.vmem [#allocation21], %s539
        %s541 = smul.u32 8, %s33
        %v543 = vld [vmem:[#allocation6] sm:$0xff]
        %v544 = vld [vmem:[#allocation6 + $0x8] sm:$0xff]
        %v545 = vld [vmem:[#allocation6 + $0x10] sm:$0xff]
        %v546 = vld [vmem:[#allocation6 + $0x18] sm:$0xff]
        %v547 = vld [vmem:[#allocation6 + $0x20] sm:$0xff]
        %v548 = vld [vmem:[#allocation6 + $0x28] sm:$0xff]
        %v549 = vld [vmem:[#allocation6 + $0x30] sm:$0xff]
        %v550 = vld [vmem:[#allocation6 + $0x38] sm:$0xff]
        %v551 = vld [vmem:[%s462] sm:$0xff]
        %v552 = vld [vmem:[%s462 + $0x8] sm:$0xff]
        %v553 = vld [vmem:[%s462 + $0x10] sm:$0xff]
        %v554 = vld [vmem:[%s462 + $0x18] sm:$0xff]
        %v555 = vld [vmem:[%s462 + $0x20] sm:$0xff]
        %v556 = vld [vmem:[%s462 + $0x28] sm:$0xff]
        %v557 = vld [vmem:[%s462 + $0x30] sm:$0xff]
        %v558 = vld [vmem:[%s462 + $0x38] sm:$0xff]
        %v559 = vld [vmem:[%s462 + $0x40] sm:$0xff]
        %v560 = vld [vmem:[%s462 + $0x48] sm:$0xff]
        %v561 = vld [vmem:[%s462 + $0x50] sm:$0xff]
        %v562 = vld [vmem:[%s462 + $0x58] sm:$0xff]
        %v563 = vld [vmem:[%s462 + $0x60] sm:$0xff]
        %v564 = vld [vmem:[%s462 + $0x68] sm:$0xff]
        %v565 = vld [vmem:[%s462 + $0x70] sm:$0xff]
        %v566 = vld [vmem:[%s462 + $0x78] sm:$0xff]
        %567 = vxpose.xlu0.b32.start [1/16] %v551, 128
        %568 = vxpose.xlu0.b32.cont [2/16] %v552, 128
        %569 = vxpose.xlu0.b32.cont [3/16] %v553, 128
        %570 = vxpose.xlu0.b32.cont [4/16] %v554, 128
        %571 = vxpose.xlu0.b32.cont [5/16] %v555, 128
        %572 = vxpose.xlu0.b32.cont [6/16] %v556, 128
        %573 = vxpose.xlu0.b32.cont [7/16] %v557, 128
        %574 = vxpose.xlu0.b32.cont [8/16] %v558, 128
        %575 = vxpose.xlu0.b32.cont [9/16] %v559, 128
        %576 = vxpose.xlu0.b32.cont [10/16] %v560, 128
        %577 = vxpose.xlu0.b32.cont [11/16] %v561, 128
        %578 = vxpose.xlu0.b32.cont [12/16] %v562, 128
        %579 = vxpose.xlu0.b32.cont [13/16] %v563, 128
        %580 = vxpose.xlu0.b32.cont [14/16] %v564, 128
        %581 = vxpose.xlu0.b32.cont [15/16] %v565, 128
        %582 = vxpose.xlu0.b32.end [16/16] %v566, 128
        %v583 = vpop.trf.xlu0
        %v584 = vpop.trf.xlu0
        %v585 = vpop.trf.xlu0
        %v586 = vpop.trf.xlu0
        %v587 = vpop.trf.xlu0
        %v588 = vpop.trf.xlu0
        %v589 = vpop.trf.xlu0
        %v590 = vpop.trf.xlu0
        %v591 = vpop.trf.xlu0
        %v592 = vpop.trf.xlu0
        %v593 = vpop.trf.xlu0
        %v594 = vpop.trf.xlu0
        %v595 = vpop.trf.xlu0
        %v596 = vpop.trf.xlu0
        %v597 = vpop.trf.xlu0
        %v598 = vpop.trf.xlu0
        %v599 = vadd.f32 %v583, %v543
        %v600 = vadd.f32 %v584, %v544
        %v601 = vadd.f32 %v585, %v545
        %v602 = vadd.f32 %v586, %v546
        %v603 = vadd.f32 %v587, %v547
        %v604 = vadd.f32 %v588, %v548
        %v605 = vadd.f32 %v589, %v549
        %v606 = vadd.f32 %v590, %v550
        %v607 = vpack.c.bf16 %v600, %v599
        %v608 = vpack.c.bf16 %v602, %v601
        %v609 = vpack.c.bf16 %v604, %v603
        %v610 = vpack.c.bf16 %v606, %v605
        %611 = vst [vmem:[#allocation2] sm:$0xff] %v607
        %612 = vst [vmem:[#allocation2 + $0x8] sm:$0xff] %v608
        %613 = vst [vmem:[#allocation2 + $0x10] sm:$0xff] %v609
        %614 = vst [vmem:[#allocation2 + $0x18] sm:$0xff] %v610
        %s615 = scalar_lea.vmem %s462, 128 [#allocation3]
        %v616 = vld [vmem:[%s615] sm:$0xff]
        %v617 = vld [vmem:[%s615 + $0x8] sm:$0xff]
        %v618 = vld [vmem:[%s615 + $0x10] sm:$0xff]
        %v619 = vld [vmem:[%s615 + $0x18] sm:$0xff]
        %v620 = vld [vmem:[%s615 + $0x20] sm:$0xff]
        %v621 = vld [vmem:[%s615 + $0x28] sm:$0xff]
        %v622 = vld [vmem:[%s615 + $0x30] sm:$0xff]
        %v623 = vld [vmem:[%s615 + $0x38] sm:$0xff]
        %v624 = vld [vmem:[%s615 + $0x40] sm:$0xff]
        %v625 = vld [vmem:[%s615 + $0x48] sm:$0xff]
        %v626 = vld [vmem:[%s615 + $0x50] sm:$0xff]
        %v627 = vld [vmem:[%s615 + $0x58] sm:$0xff]
        %v628 = vld [vmem:[%s615 + $0x60] sm:$0xff]
        %v629 = vld [vmem:[%s615 + $0x68] sm:$0xff]
        %v630 = vld [vmem:[%s615 + $0x70] sm:$0xff]
        %v631 = vld [vmem:[%s615 + $0x78] sm:$0xff]
        %632 = vxpose.xlu0.b32.start [1/16] %v616, 128
        %633 = vxpose.xlu0.b32.cont [2/16] %v617, 128
        %634 = vxpose.xlu0.b32.cont [3/16] %v618, 128
        %635 = vxpose.xlu0.b32.cont [4/16] %v619, 128
        %636 = vxpose.xlu0.b32.cont [5/16] %v620, 128
        %637 = vxpose.xlu0.b32.cont [6/16] %v621, 128
        %638 = vxpose.xlu0.b32.cont [7/16] %v622, 128
        %639 = vxpose.xlu0.b32.cont [8/16] %v623, 128
        %640 = vxpose.xlu0.b32.cont [9/16] %v624, 128
        %641 = vxpose.xlu0.b32.cont [10/16] %v625, 128
        %642 = vxpose.xlu0.b32.cont [11/16] %v626, 128
        %643 = vxpose.xlu0.b32.cont [12/16] %v627, 128
        %644 = vxpose.xlu0.b32.cont [13/16] %v628, 128
        %645 = vxpose.xlu0.b32.cont [14/16] %v629, 128
        %646 = vxpose.xlu0.b32.cont [15/16] %v630, 128
        %647 = vxpose.xlu0.b32.end [16/16] %v631, 128
        %v648 = vpop.trf.xlu0
        %v649 = vpop.trf.xlu0
        %v650 = vpop.trf.xlu0
        %v651 = vpop.trf.xlu0
        %v652 = vpop.trf.xlu0
        %v653 = vpop.trf.xlu0
        %v654 = vpop.trf.xlu0
        %v655 = vpop.trf.xlu0
        %v656 = vpop.trf.xlu0
        %v657 = vpop.trf.xlu0
        %v658 = vpop.trf.xlu0
        %v659 = vpop.trf.xlu0
        %v660 = vpop.trf.xlu0
        %v661 = vpop.trf.xlu0
        %v662 = vpop.trf.xlu0
        %v663 = vpop.trf.xlu0
        %v664 = vadd.f32 %v648, %v543
        %v665 = vadd.f32 %v649, %v544
        %v666 = vadd.f32 %v650, %v545
        %v667 = vadd.f32 %v651, %v546
        %v668 = vadd.f32 %v652, %v547
        %v669 = vadd.f32 %v653, %v548
        %v670 = vadd.f32 %v654, %v549
        %v671 = vadd.f32 %v655, %v550
        %v672 = vpack.c.bf16 %v665, %v664
        %v673 = vpack.c.bf16 %v667, %v666
        %v674 = vpack.c.bf16 %v669, %v668
        %v675 = vpack.c.bf16 %v671, %v670
        %676 = vst [vmem:[#allocation2 + $0x20] sm:$0xff] %v672
        %677 = vst [vmem:[#allocation2 + $0x28] sm:$0xff] %v673
        %678 = vst [vmem:[#allocation2 + $0x30] sm:$0xff] %v674
        %679 = vst [vmem:[#allocation2 + $0x38] sm:$0xff] %v675
        %s680 = scalar_lea.vmem %s462, 256 [#allocation3]
        %v681 = vld [vmem:[%s680] sm:$0xff]
        %v682 = vld [vmem:[%s680 + $0x8] sm:$0xff]
        %v683 = vld [vmem:[%s680 + $0x10] sm:$0xff]
        %v684 = vld [vmem:[%s680 + $0x18] sm:$0xff]
        %v685 = vld [vmem:[%s680 + $0x20] sm:$0xff]
        %v686 = vld [vmem:[%s680 + $0x28] sm:$0xff]
        %v687 = vld [vmem:[%s680 + $0x30] sm:$0xff]
        %v688 = vld [vmem:[%s680 + $0x38] sm:$0xff]
        %v689 = vld [vmem:[%s680 + $0x40] sm:$0xff]
        %v690 = vld [vmem:[%s680 + $0x48] sm:$0xff]
        %v691 = vld [vmem:[%s680 + $0x50] sm:$0xff]
        %v692 = vld [vmem:[%s680 + $0x58] sm:$0xff]
        %v693 = vld [vmem:[%s680 + $0x60] sm:$0xff]
        %v694 = vld [vmem:[%s680 + $0x68] sm:$0xff]
        %v695 = vld [vmem:[%s680 + $0x70] sm:$0xff]
        %v696 = vld [vmem:[%s680 + $0x78] sm:$0xff]
        %697 = vxpose.xlu0.b32.start [1/16] %v681, 128
        %698 = vxpose.xlu0.b32.cont [2/16] %v682, 128
        %699 = vxpose.xlu0.b32.cont [3/16] %v683, 128
        %700 = vxpose.xlu0.b32.cont [4/16] %v684, 128
        %701 = vxpose.xlu0.b32.cont [5/16] %v685, 128
        %702 = vxpose.xlu0.b32.cont [6/16] %v686, 128
        %703 = vxpose.xlu0.b32.cont [7/16] %v687, 128
        %704 = vxpose.xlu0.b32.cont [8/16] %v688, 128
        %705 = vxpose.xlu0.b32.cont [9/16] %v689, 128
        %706 = vxpose.xlu0.b32.cont [10/16] %v690, 128
        %707 = vxpose.xlu0.b32.cont [11/16] %v691, 128
        %708 = vxpose.xlu0.b32.cont [12/16] %v692, 128
        %709 = vxpose.xlu0.b32.cont [13/16] %v693, 128
        %710 = vxpose.xlu0.b32.cont [14/16] %v694, 128
        %711 = vxpose.xlu0.b32.cont [15/16] %v695, 128
        %712 = vxpose.xlu0.b32.end [16/16] %v696, 128
        %v713 = vpop.trf.xlu0
        %v714 = vpop.trf.xlu0
        %v715 = vpop.trf.xlu0
        %v716 = vpop.trf.xlu0
        %v717 = vpop.trf.xlu0
        %v718 = vpop.trf.xlu0
        %v719 = vpop.trf.xlu0
        %v720 = vpop.trf.xlu0
        %v721 = vpop.trf.xlu0
        %v722 = vpop.trf.xlu0
        %v723 = vpop.trf.xlu0
        %v724 = vpop.trf.xlu0
        %v725 = vpop.trf.xlu0
        %v726 = vpop.trf.xlu0
        %v727 = vpop.trf.xlu0
        %v728 = vpop.trf.xlu0
        %v729 = vadd.f32 %v713, %v543
        %v730 = vadd.f32 %v714, %v544
        %v731 = vadd.f32 %v715, %v545
        %v732 = vadd.f32 %v716, %v546
        %v733 = vadd.f32 %v717, %v547
        %v734 = vadd.f32 %v718, %v548
        %v735 = vadd.f32 %v719, %v549
        %v736 = vadd.f32 %v720, %v550
        %v737 = vpack.c.bf16 %v730, %v729
        %v738 = vpack.c.bf16 %v732, %v731
        %v739 = vpack.c.bf16 %v734, %v733
        %v740 = vpack.c.bf16 %v736, %v735
        %741 = vst [vmem:[#allocation2 + $0x40] sm:$0xff] %v737
        %742 = vst [vmem:[#allocation2 + $0x48] sm:$0xff] %v738
        %743 = vst [vmem:[#allocation2 + $0x50] sm:$0xff] %v739
        %744 = vst [vmem:[#allocation2 + $0x58] sm:$0xff] %v740
        %s745 = scalar_lea.vmem %s462, 384 [#allocation3]
        %v746 = vld [vmem:[%s745] sm:$0xff]
        %v747 = vld [vmem:[%s745 + $0x8] sm:$0xff]
        %v748 = vld [vmem:[%s745 + $0x10] sm:$0xff]
        %v749 = vld [vmem:[%s745 + $0x18] sm:$0xff]
        %v750 = vld [vmem:[%s745 + $0x20] sm:$0xff]
        %v751 = vld [vmem:[%s745 + $0x28] sm:$0xff]
        %v752 = vld [vmem:[%s745 + $0x30] sm:$0xff]
        %v753 = vld [vmem:[%s745 + $0x38] sm:$0xff]
        %v754 = vld [vmem:[%s745 + $0x40] sm:$0xff]
        %v755 = vld [vmem:[%s745 + $0x48] sm:$0xff]
        %v756 = vld [vmem:[%s745 + $0x50] sm:$0xff]
        %v757 = vld [vmem:[%s745 + $0x58] sm:$0xff]
        %v758 = vld [vmem:[%s745 + $0x60] sm:$0xff]
        %v759 = vld [vmem:[%s745 + $0x68] sm:$0xff]
        %v760 = vld [vmem:[%s745 + $0x70] sm:$0xff]
        %v761 = vld [vmem:[%s745 + $0x78] sm:$0xff]
        %762 = vxpose.xlu0.b32.start [1/16] %v746, 128
        %763 = vxpose.xlu0.b32.cont [2/16] %v747, 128
        %764 = vxpose.xlu0.b32.cont [3/16] %v748, 128
        %765 = vxpose.xlu0.b32.cont [4/16] %v749, 128
        %766 = vxpose.xlu0.b32.cont [5/16] %v750, 128
        %767 = vxpose.xlu0.b32.cont [6/16] %v751, 128
        %768 = vxpose.xlu0.b32.cont [7/16] %v752, 128
        %769 = vxpose.xlu0.b32.cont [8/16] %v753, 128
        %770 = vxpose.xlu0.b32.cont [9/16] %v754, 128
        %771 = vxpose.xlu0.b32.cont [10/16] %v755, 128
        %772 = vxpose.xlu0.b32.cont [11/16] %v756, 128
        %773 = vxpose.xlu0.b32.cont [12/16] %v757, 128
        %774 = vxpose.xlu0.b32.cont [13/16] %v758, 128
        %775 = vxpose.xlu0.b32.cont [14/16] %v759, 128
        %776 = vxpose.xlu0.b32.cont [15/16] %v760, 128
        %777 = vxpose.xlu0.b32.end [16/16] %v761, 128
        %v778 = vpop.trf.xlu0
        %v779 = vpop.trf.xlu0
        %v780 = vpop.trf.xlu0
        %v781 = vpop.trf.xlu0
        %v782 = vpop.trf.xlu0
        %v783 = vpop.trf.xlu0
        %v784 = vpop.trf.xlu0
        %v785 = vpop.trf.xlu0
        %v786 = vpop.trf.xlu0
        %v787 = vpop.trf.xlu0
        %v788 = vpop.trf.xlu0
        %v789 = vpop.trf.xlu0
        %v790 = vpop.trf.xlu0
        %v791 = vpop.trf.xlu0
        %v792 = vpop.trf.xlu0
        %v793 = vpop.trf.xlu0
        %v794 = vadd.f32 %v778, %v543
        %v795 = vadd.f32 %v779, %v544
        %v796 = vadd.f32 %v780, %v545
        %v797 = vadd.f32 %v781, %v546
        %v798 = vadd.f32 %v782, %v547
        %v799 = vadd.f32 %v783, %v548
        %v800 = vadd.f32 %v784, %v549
        %v801 = vadd.f32 %v785, %v550
        %v802 = vpack.c.bf16 %v795, %v794
        %v803 = vpack.c.bf16 %v797, %v796
        %v804 = vpack.c.bf16 %v799, %v798
        %v805 = vpack.c.bf16 %v801, %v800
        %806 = vst [vmem:[#allocation2 + $0x60] sm:$0xff] %v802
        %807 = vst [vmem:[#allocation2 + $0x68] sm:$0xff] %v803
        %808 = vst [vmem:[#allocation2 + $0x70] sm:$0xff] %v804
        %809 = vst [vmem:[#allocation2 + $0x78] sm:$0xff] %v805
        %s810 = scalar_lea.vmem %s462, 512 [#allocation3]
        %v811 = vld [vmem:[%s810] sm:$0xff]
        %v812 = vld [vmem:[%s810 + $0x8] sm:$0xff]
        %v813 = vld [vmem:[%s810 + $0x10] sm:$0xff]
        %v814 = vld [vmem:[%s810 + $0x18] sm:$0xff]
        %v815 = vld [vmem:[%s810 + $0x20] sm:$0xff]
        %v816 = vld [vmem:[%s810 + $0x28] sm:$0xff]
        %v817 = vld [vmem:[%s810 + $0x30] sm:$0xff]
        %v818 = vld [vmem:[%s810 + $0x38] sm:$0xff]
        %v819 = vld [vmem:[%s810 + $0x40] sm:$0xff]
        %v820 = vld [vmem:[%s810 + $0x48] sm:$0xff]
        %v821 = vld [vmem:[%s810 + $0x50] sm:$0xff]
        %v822 = vld [vmem:[%s810 + $0x58] sm:$0xff]
        %v823 = vld [vmem:[%s810 + $0x60] sm:$0xff]
        %v824 = vld [vmem:[%s810 + $0x68] sm:$0xff]
        %v825 = vld [vmem:[%s810 + $0x70] sm:$0xff]
        %v826 = vld [vmem:[%s810 + $0x78] sm:$0xff]
        %827 = vxpose.xlu0.b32.start [1/16] %v811, 128
        %828 = vxpose.xlu0.b32.cont [2/16] %v812, 128
        %829 = vxpose.xlu0.b32.cont [3/16] %v813, 128
        %830 = vxpose.xlu0.b32.cont [4/16] %v814, 128
        %831 = vxpose.xlu0.b32.cont [5/16] %v815, 128
        %832 = vxpose.xlu0.b32.cont [6/16] %v816, 128
        %833 = vxpose.xlu0.b32.cont [7/16] %v817, 128
        %834 = vxpose.xlu0.b32.cont [8/16] %v818, 128
        %835 = vxpose.xlu0.b32.cont [9/16] %v819, 128
        %836 = vxpose.xlu0.b32.cont [10/16] %v820, 128
        %837 = vxpose.xlu0.b32.cont [11/16] %v821, 128
        %838 = vxpose.xlu0.b32.cont [12/16] %v822, 128
        %839 = vxpose.xlu0.b32.cont [13/16] %v823, 128
        %840 = vxpose.xlu0.b32.cont [14/16] %v824, 128
        %841 = vxpose.xlu0.b32.cont [15/16] %v825, 128
        %842 = vxpose.xlu0.b32.end [16/16] %v826, 128
        %v843 = vpop.trf.xlu0
        %v844 = vpop.trf.xlu0
        %v845 = vpop.trf.xlu0
        %v846 = vpop.trf.xlu0
        %v847 = vpop.trf.xlu0
        %v848 = vpop.trf.xlu0
        %v849 = vpop.trf.xlu0
        %v850 = vpop.trf.xlu0
        %v851 = vpop.trf.xlu0
        %v852 = vpop.trf.xlu0
        %v853 = vpop.trf.xlu0
        %v854 = vpop.trf.xlu0
        %v855 = vpop.trf.xlu0
        %v856 = vpop.trf.xlu0
        %v857 = vpop.trf.xlu0
        %v858 = vpop.trf.xlu0
        %v859 = vadd.f32 %v843, %v543
        %v860 = vadd.f32 %v844, %v544
        %v861 = vadd.f32 %v845, %v545
        %v862 = vadd.f32 %v846, %v546
        %v863 = vadd.f32 %v847, %v547
        %v864 = vadd.f32 %v848, %v548
        %v865 = vadd.f32 %v849, %v549
        %v866 = vadd.f32 %v850, %v550
        %v867 = vpack.c.bf16 %v860, %v859
        %v868 = vpack.c.bf16 %v862, %v861
        %v869 = vpack.c.bf16 %v864, %v863
        %v870 = vpack.c.bf16 %v866, %v865
        %871 = vst [vmem:[#allocation2 + $0x80] sm:$0xff] %v867
        %872 = vst [vmem:[#allocation2 + $0x88] sm:$0xff] %v868
        %873 = vst [vmem:[#allocation2 + $0x90] sm:$0xff] %v869
        %874 = vst [vmem:[#allocation2 + $0x98] sm:$0xff] %v870
        %s875 = scalar_lea.vmem %s462, 640 [#allocation3]
        %v876 = vld [vmem:[%s875] sm:$0xff]
        %v877 = vld [vmem:[%s875 + $0x8] sm:$0xff]
        %v878 = vld [vmem:[%s875 + $0x10] sm:$0xff]
        %v879 = vld [vmem:[%s875 + $0x18] sm:$0xff]
        %v880 = vld [vmem:[%s875 + $0x20] sm:$0xff]
        %v881 = vld [vmem:[%s875 + $0x28] sm:$0xff]
        %v882 = vld [vmem:[%s875 + $0x30] sm:$0xff]
        %v883 = vld [vmem:[%s875 + $0x38] sm:$0xff]
        %v884 = vld [vmem:[%s875 + $0x40] sm:$0xff]
        %v885 = vld [vmem:[%s875 + $0x48] sm:$0xff]
        %v886 = vld [vmem:[%s875 + $0x50] sm:$0xff]
        %v887 = vld [vmem:[%s875 + $0x58] sm:$0xff]
        %v888 = vld [vmem:[%s875 + $0x60] sm:$0xff]
        %v889 = vld [vmem:[%s875 + $0x68] sm:$0xff]
        %v890 = vld [vmem:[%s875 + $0x70] sm:$0xff]
        %v891 = vld [vmem:[%s875 + $0x78] sm:$0xff]
        %892 = vxpose.xlu0.b32.start [1/16] %v876, 128
        %893 = vxpose.xlu0.b32.cont [2/16] %v877, 128
        %894 = vxpose.xlu0.b32.cont [3/16] %v878, 128
        %895 = vxpose.xlu0.b32.cont [4/16] %v879, 128
        %896 = vxpose.xlu0.b32.cont [5/16] %v880, 128
        %897 = vxpose.xlu0.b32.cont [6/16] %v881, 128
        %898 = vxpose.xlu0.b32.cont [7/16] %v882, 128
        %899 = vxpose.xlu0.b32.cont [8/16] %v883, 128
        %900 = vxpose.xlu0.b32.cont [9/16] %v884, 128
        %901 = vxpose.xlu0.b32.cont [10/16] %v885, 128
        %902 = vxpose.xlu0.b32.cont [11/16] %v886, 128
        %903 = vxpose.xlu0.b32.cont [12/16] %v887, 128
        %904 = vxpose.xlu0.b32.cont [13/16] %v888, 128
        %905 = vxpose.xlu0.b32.cont [14/16] %v889, 128
        %906 = vxpose.xlu0.b32.cont [15/16] %v890, 128
        %907 = vxpose.xlu0.b32.end [16/16] %v891, 128
        %v908 = vpop.trf.xlu0
        %v909 = vpop.trf.xlu0
        %v910 = vpop.trf.xlu0
        %v911 = vpop.trf.xlu0
        %v912 = vpop.trf.xlu0
        %v913 = vpop.trf.xlu0
        %v914 = vpop.trf.xlu0
        %v915 = vpop.trf.xlu0
        %v916 = vpop.trf.xlu0
        %v917 = vpop.trf.xlu0
        %v918 = vpop.trf.xlu0
        %v919 = vpop.trf.xlu0
        %v920 = vpop.trf.xlu0
        %v921 = vpop.trf.xlu0
        %v922 = vpop.trf.xlu0
        %v923 = vpop.trf.xlu0
        %v924 = vadd.f32 %v908, %v543
        %v925 = vadd.f32 %v909, %v544
        %v926 = vadd.f32 %v910, %v545
        %v927 = vadd.f32 %v911, %v546
        %v928 = vadd.f32 %v912, %v547
        %v929 = vadd.f32 %v913, %v548
        %v930 = vadd.f32 %v914, %v549
        %v931 = vadd.f32 %v915, %v550
        %v932 = vpack.c.bf16 %v925, %v924
        %v933 = vpack.c.bf16 %v927, %v926
        %v934 = vpack.c.bf16 %v929, %v928
        %v935 = vpack.c.bf16 %v931, %v930
        %936 = vst [vmem:[#allocation2 + $0xa0] sm:$0xff] %v932
        %937 = vst [vmem:[#allocation2 + $0xa8] sm:$0xff] %v933
        %938 = vst [vmem:[#allocation2 + $0xb0] sm:$0xff] %v934
        %939 = vst [vmem:[#allocation2 + $0xb8] sm:$0xff] %v935
        %s940 = scalar_lea.vmem %s462, 768 [#allocation3]
        %v941 = vld [vmem:[%s940] sm:$0xff]
        %v942 = vld [vmem:[%s940 + $0x8] sm:$0xff]
        %v943 = vld [vmem:[%s940 + $0x10] sm:$0xff]
        %v944 = vld [vmem:[%s940 + $0x18] sm:$0xff]
        %v945 = vld [vmem:[%s940 + $0x20] sm:$0xff]
        %v946 = vld [vmem:[%s940 + $0x28] sm:$0xff]
        %v947 = vld [vmem:[%s940 + $0x30] sm:$0xff]
        %v948 = vld [vmem:[%s940 + $0x38] sm:$0xff]
        %v949 = vld [vmem:[%s940 + $0x40] sm:$0xff]
        %v950 = vld [vmem:[%s940 + $0x48] sm:$0xff]
        %v951 = vld [vmem:[%s940 + $0x50] sm:$0xff]
        %v952 = vld [vmem:[%s940 + $0x58] sm:$0xff]
        %v953 = vld [vmem:[%s940 + $0x60] sm:$0xff]
        %v954 = vld [vmem:[%s940 + $0x68] sm:$0xff]
        %v955 = vld [vmem:[%s940 + $0x70] sm:$0xff]
        %v956 = vld [vmem:[%s940 + $0x78] sm:$0xff]
        %957 = vxpose.xlu0.b32.start [1/16] %v941, 128
        %958 = vxpose.xlu0.b32.cont [2/16] %v942, 128
        %959 = vxpose.xlu0.b32.cont [3/16] %v943, 128
        %960 = vxpose.xlu0.b32.cont [4/16] %v944, 128
        %961 = vxpose.xlu0.b32.cont [5/16] %v945, 128
        %962 = vxpose.xlu0.b32.cont [6/16] %v946, 128
        %963 = vxpose.xlu0.b32.cont [7/16] %v947, 128
        %964 = vxpose.xlu0.b32.cont [8/16] %v948, 128
        %965 = vxpose.xlu0.b32.cont [9/16] %v949, 128
        %966 = vxpose.xlu0.b32.cont [10/16] %v950, 128
        %967 = vxpose.xlu0.b32.cont [11/16] %v951, 128
        %968 = vxpose.xlu0.b32.cont [12/16] %v952, 128
        %969 = vxpose.xlu0.b32.cont [13/16] %v953, 128
        %970 = vxpose.xlu0.b32.cont [14/16] %v954, 128
        %971 = vxpose.xlu0.b32.cont [15/16] %v955, 128
        %972 = vxpose.xlu0.b32.end [16/16] %v956, 128
        %v973 = vpop.trf.xlu0
        %v974 = vpop.trf.xlu0
        %v975 = vpop.trf.xlu0
        %v976 = vpop.trf.xlu0
        %v977 = vpop.trf.xlu0
        %v978 = vpop.trf.xlu0
        %v979 = vpop.trf.xlu0
        %v980 = vpop.trf.xlu0
        %v981 = vpop.trf.xlu0
        %v982 = vpop.trf.xlu0
        %v983 = vpop.trf.xlu0
        %v984 = vpop.trf.xlu0
        %v985 = vpop.trf.xlu0
        %v986 = vpop.trf.xlu0
        %v987 = vpop.trf.xlu0
        %v988 = vpop.trf.xlu0
        %v989 = vadd.f32 %v973, %v543
        %v990 = vadd.f32 %v974, %v544
        %v991 = vadd.f32 %v975, %v545
        %v992 = vadd.f32 %v976, %v546
        %v993 = vadd.f32 %v977, %v547
        %v994 = vadd.f32 %v978, %v548
        %v995 = vadd.f32 %v979, %v549
        %v996 = vadd.f32 %v980, %v550
        %v997 = vpack.c.bf16 %v990, %v989
        %v998 = vpack.c.bf16 %v992, %v991
        %v999 = vpack.c.bf16 %v994, %v993
        %v1000 = vpack.c.bf16 %v996, %v995
        %1001 = vst [vmem:[#allocation2 + $0xc0] sm:$0xff] %v997
        %1002 = vst [vmem:[#allocation2 + $0xc8] sm:$0xff] %v998
        %1003 = vst [vmem:[#allocation2 + $0xd0] sm:$0xff] %v999
        %1004 = vst [vmem:[#allocation2 + $0xd8] sm:$0xff] %v1000
        %s1005 = scalar_lea.vmem %s462, 896 [#allocation3]
        %v1006 = vld [vmem:[%s1005] sm:$0xff]
        %v1007 = vld [vmem:[%s1005 + $0x8] sm:$0xff]
        %v1008 = vld [vmem:[%s1005 + $0x10] sm:$0xff]
        %v1009 = vld [vmem:[%s1005 + $0x18] sm:$0xff]
        %v1010 = vld [vmem:[%s1005 + $0x20] sm:$0xff]
        %v1011 = vld [vmem:[%s1005 + $0x28] sm:$0xff]
        %v1012 = vld [vmem:[%s1005 + $0x30] sm:$0xff]
        %v1013 = vld [vmem:[%s1005 + $0x38] sm:$0xff]
        %v1014 = vld [vmem:[%s1005 + $0x40] sm:$0xff]
        %v1015 = vld [vmem:[%s1005 + $0x48] sm:$0xff]
        %v1016 = vld [vmem:[%s1005 + $0x50] sm:$0xff]
        %v1017 = vld [vmem:[%s1005 + $0x58] sm:$0xff]
        %v1018 = vld [vmem:[%s1005 + $0x60] sm:$0xff]
        %v1019 = vld [vmem:[%s1005 + $0x68] sm:$0xff]
        %v1020 = vld [vmem:[%s1005 + $0x70] sm:$0xff]
        %v1021 = vld [vmem:[%s1005 + $0x78] sm:$0xff]
        %1022 = vxpose.xlu0.b32.start [1/16] %v1006, 128
        %1023 = vxpose.xlu0.b32.cont [2/16] %v1007, 128
        %1024 = vxpose.xlu0.b32.cont [3/16] %v1008, 128
        %1025 = vxpose.xlu0.b32.cont [4/16] %v1009, 128
        %1026 = vxpose.xlu0.b32.cont [5/16] %v1010, 128
        %1027 = vxpose.xlu0.b32.cont [6/16] %v1011, 128
        %1028 = vxpose.xlu0.b32.cont [7/16] %v1012, 128
        %1029 = vxpose.xlu0.b32.cont [8/16] %v1013, 128
        %1030 = vxpose.xlu0.b32.cont [9/16] %v1014, 128
        %1031 = vxpose.xlu0.b32.cont [10/16] %v1015, 128
        %1032 = vxpose.xlu0.b32.cont [11/16] %v1016, 128
        %1033 = vxpose.xlu0.b32.cont [12/16] %v1017, 128
        %1034 = vxpose.xlu0.b32.cont [13/16] %v1018, 128
        %1035 = vxpose.xlu0.b32.cont [14/16] %v1019, 128
        %1036 = vxpose.xlu0.b32.cont [15/16] %v1020, 128
        %1037 = vxpose.xlu0.b32.end [16/16] %v1021, 128
        %v1038 = vpop.trf.xlu0
        %v1039 = vpop.trf.xlu0
        %v1040 = vpop.trf.xlu0
        %v1041 = vpop.trf.xlu0
        %v1042 = vpop.trf.xlu0
        %v1043 = vpop.trf.xlu0
        %v1044 = vpop.trf.xlu0
        %v1045 = vpop.trf.xlu0
        %v1046 = vpop.trf.xlu0
        %v1047 = vpop.trf.xlu0
        %v1048 = vpop.trf.xlu0
        %v1049 = vpop.trf.xlu0
        %v1050 = vpop.trf.xlu0
        %v1051 = vpop.trf.xlu0
        %v1052 = vpop.trf.xlu0
        %v1053 = vpop.trf.xlu0
        %v1054 = vadd.f32 %v1038, %v543
        %v1055 = vadd.f32 %v1039, %v544
        %v1056 = vadd.f32 %v1040, %v545
        %v1057 = vadd.f32 %v1041, %v546
        %v1058 = vadd.f32 %v1042, %v547
        %v1059 = vadd.f32 %v1043, %v548
        %v1060 = vadd.f32 %v1044, %v549
        %v1061 = vadd.f32 %v1045, %v550
        %v1062 = vpack.c.bf16 %v1055, %v1054
        %v1063 = vpack.c.bf16 %v1057, %v1056
        %v1064 = vpack.c.bf16 %v1059, %v1058
        %v1065 = vpack.c.bf16 %v1061, %v1060
        %1066 = vst [vmem:[#allocation2 + $0xe0] sm:$0xff] %v1062
        %1067 = vst [vmem:[#allocation2 + $0xe8] sm:$0xff] %v1063
        %1068 = vst [vmem:[#allocation2 + $0xf0] sm:$0xff] %v1064
        %1069 = vst [vmem:[#allocation2 + $0xf8] sm:$0xff] %v1065
        %v1070 = vld [vmem:[#allocation2] sm:$0xff]
        %v1071 = vld [vmem:[#allocation2 + $0x8] sm:$0xff]
        %v1072 = vld [vmem:[#allocation2 + $0x10] sm:$0xff]
        %v1073 = vld [vmem:[#allocation2 + $0x18] sm:$0xff]
        %v1074 = vld [vmem:[#allocation2 + $0x20] sm:$0xff]
        %v1075 = vld [vmem:[#allocation2 + $0x28] sm:$0xff]
        %v1076 = vld [vmem:[#allocation2 + $0x30] sm:$0xff]
        %v1077 = vld [vmem:[#allocation2 + $0x38] sm:$0xff]
        %v1078 = vld [vmem:[#allocation2 + $0x40] sm:$0xff]
        %v1079 = vld [vmem:[#allocation2 + $0x48] sm:$0xff]
        %v1080 = vld [vmem:[#allocation2 + $0x50] sm:$0xff]
        %v1081 = vld [vmem:[#allocation2 + $0x58] sm:$0xff]
        %v1082 = vld [vmem:[#allocation2 + $0x60] sm:$0xff]
        %v1083 = vld [vmem:[#allocation2 + $0x68] sm:$0xff]
        %v1084 = vld [vmem:[#allocation2 + $0x70] sm:$0xff]
        %v1085 = vld [vmem:[#allocation2 + $0x78] sm:$0xff]
        %v1086 = vld [vmem:[#allocation2 + $0x80] sm:$0xff]
        %v1087 = vld [vmem:[#allocation2 + $0x88] sm:$0xff]
        %v1088 = vld [vmem:[#allocation2 + $0x90] sm:$0xff]
        %v1089 = vld [vmem:[#allocation2 + $0x98] sm:$0xff]
        %v1090 = vld [vmem:[#allocation2 + $0xa0] sm:$0xff]
        %v1091 = vld [vmem:[#allocation2 + $0xa8] sm:$0xff]
        %v1092 = vld [vmem:[#allocation2 + $0xb0] sm:$0xff]
        %v1093 = vld [vmem:[#allocation2 + $0xb8] sm:$0xff]
        %v1094 = vld [vmem:[#allocation2 + $0xc0] sm:$0xff]
        %v1095 = vld [vmem:[#allocation2 + $0xc8] sm:$0xff]
        %v1096 = vld [vmem:[#allocation2 + $0xd0] sm:$0xff]
        %v1097 = vld [vmem:[#allocation2 + $0xd8] sm:$0xff]
        %v1098 = vld [vmem:[#allocation2 + $0xe0] sm:$0xff]
        %v1099 = vld [vmem:[#allocation2 + $0xe8] sm:$0xff]
        %v1100 = vld [vmem:[#allocation2 + $0xf0] sm:$0xff]
        %v1101 = vld [vmem:[#allocation2 + $0xf8] sm:$0xff]
        %v1102 = vlaneseq
        %v1103 = vshrl.u32 %v1102, 7
        %v1104 = vlaneseq
        %v1105 = vand.u32 %v1104, 127
        %v1106 = vadd.s32 %v1105, 128
        %v1107 = vadd.s32 %v1105, 256
        %v1108 = vadd.s32 %v1105, 384
        %v1109 = vmul.u32 %v1103, 64
        %vm1110 = vcmp.ge.s32.totalorder %v1105, %v1109
        %vm1111 = vcmp.ge.s32.totalorder %v1106, %v1109
        %vm1112 = vcmp.ge.s32.totalorder %v1107, %v1109
        %vm1113 = vcmp.ge.s32.totalorder %v1108, %v1109
        %v1114 = vadd.s32 %v1109, 64
        %vm1115 = vcmp.lt.s32.totalorder %v1105, %v1114
        %vm1116 = vcmp.lt.s32.totalorder %v1106, %v1114
        %vm1117 = vcmp.lt.s32.totalorder %v1107, %v1114
        %vm1118 = vcmp.lt.s32.totalorder %v1108, %v1114
        %vm1119 = vmand %vm1110, %vm1115
        %vm1120 = vmand %vm1111, %vm1116
        %vm1121 = vmand %vm1112, %vm1117
        %vm1122 = vmand %vm1113, %vm1118
        %v1123 = vsel %vm1119, 1.0, 0.0
        %v1124 = vsel %vm1120, 1.0, 0.0
        %v1125 = vsel %vm1121, 1.0, 0.0
        %v1126 = vsel %vm1122, 1.0, 0.0
        %v1127 = vpack.c.bf16 %v1123, %v1123
        %v1128 = vpack.c.bf16 %v1124, %v1124
        %v1129 = vpack.c.bf16 %v1125, %v1125
        %v1130 = vpack.c.bf16 %v1126, %v1126
        %v1131 = vadd.s32 %v1103, 8
        %v1132 = vadd.s32 %v1103, 16
        %v1133 = vadd.s32 %v1103, 24
        %v1134 = vadd.s32 %v1103, 32
        %v1135 = vadd.s32 %v1103, 40
        %v1136 = vadd.s32 %v1103, 48
        %v1137 = vadd.s32 %v1103, 56
        %v1138 = vadd.s32 %v1103, 64
        %v1139 = vadd.s32 %v1103, 72
        %v1140 = vadd.s32 %v1103, 80
        %v1141 = vadd.s32 %v1103, 88
        %v1142 = vadd.s32 %v1103, 96
        %v1143 = vadd.s32 %v1103, 104
        %v1144 = vadd.s32 %v1103, 112
        %v1145 = vadd.s32 %v1103, 120
        %v1146 = vmul.u32 %v1105, 32
        %vm1147 = vcmp.ge.s32.totalorder %v1103, %v1146
        %vm1148 = vcmp.ge.s32.totalorder %v1131, %v1146
        %vm1149 = vcmp.ge.s32.totalorder %v1132, %v1146
        %vm1150 = vcmp.ge.s32.totalorder %v1133, %v1146
        %vm1151 = vcmp.ge.s32.totalorder %v1134, %v1146
        %vm1152 = vcmp.ge.s32.totalorder %v1135, %v1146
        %vm1153 = vcmp.ge.s32.totalorder %v1136, %v1146
        %vm1154 = vcmp.ge.s32.totalorder %v1137, %v1146
        %vm1155 = vcmp.ge.s32.totalorder %v1138, %v1146
        %vm1156 = vcmp.ge.s32.totalorder %v1139, %v1146
        %vm1157 = vcmp.ge.s32.totalorder %v1140, %v1146
        %vm1158 = vcmp.ge.s32.totalorder %v1141, %v1146
        %vm1159 = vcmp.ge.s32.totalorder %v1142, %v1146
        %vm1160 = vcmp.ge.s32.totalorder %v1143, %v1146
        %vm1161 = vcmp.ge.s32.totalorder %v1144, %v1146
        %vm1162 = vcmp.ge.s32.totalorder %v1145, %v1146
        %v1163 = vadd.s32 %v1146, 32
        %vm1164 = vcmp.lt.s32.totalorder %v1103, %v1163
        %vm1165 = vcmp.lt.s32.totalorder %v1131, %v1163
        %vm1166 = vcmp.lt.s32.totalorder %v1132, %v1163
        %vm1167 = vcmp.lt.s32.totalorder %v1133, %v1163
        %vm1168 = vcmp.lt.s32.totalorder %v1134, %v1163
        %vm1169 = vcmp.lt.s32.totalorder %v1135, %v1163
        %vm1170 = vcmp.lt.s32.totalorder %v1136, %v1163
        %vm1171 = vcmp.lt.s32.totalorder %v1137, %v1163
        %vm1172 = vcmp.lt.s32.totalorder %v1138, %v1163
        %vm1173 = vcmp.lt.s32.totalorder %v1139, %v1163
        %vm1174 = vcmp.lt.s32.totalorder %v1140, %v1163
        %vm1175 = vcmp.lt.s32.totalorder %v1141, %v1163
        %vm1176 = vcmp.lt.s32.totalorder %v1142, %v1163
        %vm1177 = vcmp.lt.s32.totalorder %v1143, %v1163
        %vm1178 = vcmp.lt.s32.totalorder %v1144, %v1163
        %vm1179 = vcmp.lt.s32.totalorder %v1145, %v1163
        %vm1180 = vmand %vm1147, %vm1164
        %vm1181 = vmand %vm1148, %vm1165
        %vm1182 = vmand %vm1149, %vm1166
        %vm1183 = vmand %vm1150, %vm1167
        %vm1184 = vmand %vm1151, %vm1168
        %vm1185 = vmand %vm1152, %vm1169
        %vm1186 = vmand %vm1153, %vm1170
        %vm1187 = vmand %vm1154, %vm1171
        %vm1188 = vmand %vm1155, %vm1172
        %vm1189 = vmand %vm1156, %vm1173
        %vm1190 = vmand %vm1157, %vm1174
        %vm1191 = vmand %vm1158, %vm1175
        %vm1192 = vmand %vm1159, %vm1176
        %vm1193 = vmand %vm1160, %vm1177
        %vm1194 = vmand %vm1161, %vm1178
        %vm1195 = vmand %vm1162, %vm1179
        %v1196 = vsel %vm1180, 1.0, 0.0
        %v1197 = vsel %vm1181, 1.0, 0.0
        %v1198 = vsel %vm1182, 1.0, 0.0
        %v1199 = vsel %vm1183, 1.0, 0.0
        %v1200 = vsel %vm1184, 1.0, 0.0
        %v1201 = vsel %vm1185, 1.0, 0.0
        %v1202 = vsel %vm1186, 1.0, 0.0
        %v1203 = vsel %vm1187, 1.0, 0.0
        %v1204 = vsel %vm1188, 1.0, 0.0
        %v1205 = vsel %vm1189, 1.0, 0.0
        %v1206 = vsel %vm1190, 1.0, 0.0
        %v1207 = vsel %vm1191, 1.0, 0.0
        %v1208 = vsel %vm1192, 1.0, 0.0
        %v1209 = vsel %vm1193, 1.0, 0.0
        %v1210 = vsel %vm1194, 1.0, 0.0
        %v1211 = vsel %vm1195, 1.0, 0.0
        %v1212 = vpack.c.bf16 %v1197, %v1196
        %v1213 = vpack.c.bf16 %v1199, %v1198
        %v1214 = vpack.c.bf16 %v1201, %v1200
        %v1215 = vpack.c.bf16 %v1203, %v1202
        %v1216 = vpack.c.bf16 %v1205, %v1204
        %v1217 = vpack.c.bf16 %v1207, %v1206
        %v1218 = vpack.c.bf16 %v1209, %v1208
        %v1219 = vpack.c.bf16 %v1211, %v1210
        %v1220 = vmul.u32 %v1103, 32
        %vm1221 = vcmp.ge.s32.totalorder %v1105, %v1220
        %v1222 = vadd.s32 %v1220, 32
        %vm1223 = vcmp.lt.s32.totalorder %v1105, %v1222
        %vm1224 = vmand %vm1221, %vm1223
        %v1225 = vsel %vm1224, 1.0, 0.0
        %v1226 = vpack.c.bf16 %v1225, %v1225
        %1227 = vmatprep.subr.bf16.mxu0 0
        %1228 = vmatpush1.bf16.msra.mxu0 %v1070
        %1229 = vmatprep.subr.bf16.mxu0 0
        %1230 = vmatpush1.bf16.msra.mxu0 %v1071
        %1231 = vmatprep.subr.bf16.mxu0 0
        %1232 = vmatpush1.bf16.msra.mxu0 %v1072
        %1233 = vmatprep.subr.bf16.mxu0 0
        %1234 = vmatpush1.bf16.msra.mxu0 %v1073
        %1235 = vmatprep.subr.bf16.mxu0 0
        %1236 = vmatpush1.bf16.msra.mxu0 %v1074
        %1237 = vmatprep.subr.bf16.mxu0 0
        %1238 = vmatpush1.bf16.msra.mxu0 %v1075
        %1239 = vmatprep.subr.bf16.mxu0 0
        %1240 = vmatpush1.bf16.msra.mxu0 %v1076
        %1241 = vmatprep.subr.bf16.mxu0 0
        %1242 = vmatpush1.bf16.msra.mxu0 %v1077
        %1243 = vmatprep.subr.bf16.mxu0 0
        %1244 = vmatpush1.bf16.msra.mxu0 %v1078
        %1245 = vmatprep.subr.bf16.mxu0 0
        %1246 = vmatpush1.bf16.msra.mxu0 %v1079
        %1247 = vmatprep.subr.bf16.mxu0 0
        %1248 = vmatpush1.bf16.msra.mxu0 %v1080
        %1249 = vmatprep.subr.bf16.mxu0 0
        %1250 = vmatpush1.bf16.msra.mxu0 %v1081
        %1251 = vmatprep.subr.bf16.mxu0 0
        %1252 = vmatpush1.bf16.msra.mxu0 %v1082
        %1253 = vmatprep.subr.bf16.mxu0 0
        %1254 = vmatpush1.bf16.msra.mxu0 %v1083
        %1255 = vmatprep.subr.bf16.mxu0 0
        %1256 = vmatpush1.bf16.msra.mxu0 %v1084
        %1257 = vmatprep.subr.bf16.mxu0 0
        %1258 = vmatpush1.bf16.msra.mxu0 %v1085
        %1259 = vmatprep.mubr.bf16.mxu0 %v1128
        %1260 = vmatmul.mubr.bf16.gmra.mrb[0].mxu0 %v1127
        %v1261 = vpop.f32.mrb[0].mxu0
        %v1262 = vadd.f32 0.0, %v1261
        %v1263 = vpop.f32.mrb[0].mxu0
        %v1264 = vpop.f32.mrb[0].mxu0
        %v1265 = vpop.f32.mrb[0].mxu0
        %1266 = vdwg.mxu0
        %1267 = vmatprep.subr.bf16.mxu0 0
        %1268 = vmatpush1.bf16.msra.mxu0 %v1086
        %1269 = vmatprep.subr.bf16.mxu0 0
        %1270 = vmatpush1.bf16.msra.mxu0 %v1087
        %1271 = vmatprep.subr.bf16.mxu0 0
        %1272 = vmatpush1.bf16.msra.mxu0 %v1088
        %1273 = vmatprep.subr.bf16.mxu0 0
        %1274 = vmatpush1.bf16.msra.mxu0 %v1089
        %1275 = vmatprep.subr.bf16.mxu0 0
        %1276 = vmatpush1.bf16.msra.mxu0 %v1090
        %1277 = vmatprep.subr.bf16.mxu0 0
        %1278 = vmatpush1.bf16.msra.mxu0 %v1091
        %1279 = vmatprep.subr.bf16.mxu0 0
        %1280 = vmatpush1.bf16.msra.mxu0 %v1092
        %1281 = vmatprep.subr.bf16.mxu0 0
        %1282 = vmatpush1.bf16.msra.mxu0 %v1093
        %1283 = vmatprep.subr.bf16.mxu0 0
        %1284 = vmatpush1.bf16.msra.mxu0 %v1094
        %1285 = vmatprep.subr.bf16.mxu0 0
        %1286 = vmatpush1.bf16.msra.mxu0 %v1095
        %1287 = vmatprep.subr.bf16.mxu0 0
        %1288 = vmatpush1.bf16.msra.mxu0 %v1096
        %1289 = vmatprep.subr.bf16.mxu0 0
        %1290 = vmatpush1.bf16.msra.mxu0 %v1097
        %1291 = vmatprep.subr.bf16.mxu0 0
        %1292 = vmatpush1.bf16.msra.mxu0 %v1098
        %1293 = vmatprep.subr.bf16.mxu0 0
        %1294 = vmatpush1.bf16.msra.mxu0 %v1099
        %1295 = vmatprep.subr.bf16.mxu0 0
        %1296 = vmatpush1.bf16.msra.mxu0 %v1100
        %1297 = vmatprep.subr.bf16.mxu0 0
        %1298 = vmatpush1.bf16.msra.mxu0 %v1101
        %1299 = vmatprep.mubr.bf16.mxu0 %v1130
        %1300 = vmatmul.mubr.bf16.gmra.mrb[0].mxu0 %v1129
        %v1301 = vpop.f32.mrb[0].mxu0
        %v1302 = vadd.f32 %v1262, %v1301
        %v1303 = vpop.f32.mrb[0].mxu0
        %v1304 = vpop.f32.mrb[0].mxu0
        %v1305 = vpop.f32.mrb[0].mxu0
        %1306 = vdwg.mxu0
        %v1307 = vmul.f32 %v1302, 0.015625
        %v1308 = vld [vmem:[#allocation8] sm:$0x1]
        %v1310 = vlaneseq
        %v1311 = vshrl.u32 %v1310, 7
        %v1312 = vsub.s32 0, %v1311
        %v1313 = vrot.slane %v1308, %v1312
        %v1315 = vadd.f32 %v1307, %v1313
        %v1316 = vpack.c.bf16 %v1315, %v1315
        %v1317 = vld [vmem:[#allocation11] sm:$0x1]
        %v1318 = vld [vmem:[#allocation14] sm:$0x1]
        %v1319 = vld [vmem:[#allocation17] sm:$0x1]
        %v1320 = vld [vmem:[#allocation9] sm:$0xf]
        %v1321 = vld [vmem:[#allocation9 + $0x4] sm:$0xf]
        %v1322 = vld [vmem:[#allocation9 + $0x8] sm:$0xf]
        %v1323 = vld [vmem:[#allocation9 + $0xc] sm:$0xf]
        %v1324 = vld [vmem:[#allocation9 + $0x10] sm:$0xf]
        %v1325 = vld [vmem:[#allocation9 + $0x14] sm:$0xf]
        %v1326 = vld [vmem:[#allocation9 + $0x18] sm:$0xf]
        %v1327 = vld [vmem:[#allocation9 + $0x1c] sm:$0xf]
        %v1328 = vld [vmem:[#allocation9 + $0x20] sm:$0xf]
        %v1329 = vld [vmem:[#allocation9 + $0x24] sm:$0xf]
        %v1330 = vld [vmem:[#allocation9 + $0x28] sm:$0xf]
        %v1331 = vld [vmem:[#allocation9 + $0x2c] sm:$0xf]
        %v1332 = vld [vmem:[#allocation9 + $0x30] sm:$0xf]
        %v1333 = vld [vmem:[#allocation9 + $0x34] sm:$0xf]
        %v1334 = vld [vmem:[#allocation9 + $0x38] sm:$0xf]
        %v1335 = vld [vmem:[#allocation9 + $0x3c] sm:$0xf]
        %v1337 = vlaneseq
        %v1338 = vshrl.u32 %v1337, 7
        %v1339 = vsub.s32 0, %v1338
        %v1340 = vrot.slane %v1317, %v1339
        %v1358 = vunpack.c.l.b16 %v1320
        %v1359 = vunpack.c.l.b16 %v1321
        %v1360 = vunpack.c.l.b16 %v1322
        %v1361 = vunpack.c.l.b16 %v1323
        %v1362 = vunpack.c.l.b16 %v1324
        %v1363 = vunpack.c.l.b16 %v1325
        %v1364 = vunpack.c.l.b16 %v1326
        %v1365 = vunpack.c.l.b16 %v1327
        %v1366 = vunpack.c.l.b16 %v1328
        %v1367 = vunpack.c.l.b16 %v1329
        %v1368 = vunpack.c.l.b16 %v1330
        %v1369 = vunpack.c.l.b16 %v1331
        %v1370 = vunpack.c.l.b16 %v1332
        %v1371 = vunpack.c.l.b16 %v1333
        %v1372 = vunpack.c.l.b16 %v1334
        %v1373 = vunpack.c.l.b16 %v1335
        %v1374 = vpack.c.b16 %v1359, %v1358
        %v1375 = vpack.c.b16 %v1361, %v1360
        %v1376 = vpack.c.b16 %v1363, %v1362
        %v1377 = vpack.c.b16 %v1365, %v1364
        %v1378 = vpack.c.b16 %v1367, %v1366
        %v1379 = vpack.c.b16 %v1369, %v1368
        %v1380 = vpack.c.b16 %v1371, %v1370
        %v1381 = vpack.c.b16 %v1373, %v1372
        %1390 = vmatprep.subr.bf16.mxu0 0
        %1391 = vmatpush1.bf16.msra.mxu0 %v1374
        %1392 = vmatprep.subr.bf16.mxu0 0
        %1393 = vmatpush1.bf16.msra.mxu0 %v1375
        %1394 = vmatprep.subr.bf16.mxu0 0
        %1395 = vmatpush1.bf16.msra.mxu0 %v1376
        %1396 = vmatprep.subr.bf16.mxu0 0
        %1397 = vmatpush1.bf16.msra.mxu0 %v1377
        %1398 = vmatprep.subr.bf16.mxu0 0
        %1399 = vmatpush1.bf16.msra.mxu0 %v1378
        %1400 = vmatprep.subr.bf16.mxu0 0
        %1401 = vmatpush1.bf16.msra.mxu0 %v1379
        %1402 = vmatprep.subr.bf16.mxu0 0
        %1403 = vmatpush1.bf16.msra.mxu0 %v1380
        %1404 = vmatprep.subr.bf16.mxu0 0
        %1405 = vmatpush1.bf16.msra.mxu0 %v1381
        %1406 = vmatprep.subr.bf16.mxu0 0
        %1407 = vmatpush1.bf16.msra.mxu0 0
        %1408 = vmatprep.subr.bf16.mxu0 0
        %1409 = vmatpush1.bf16.msra.mxu0 0
        %1410 = vmatprep.subr.bf16.mxu0 0
        %1411 = vmatpush1.bf16.msra.mxu0 0
        %1412 = vmatprep.subr.bf16.mxu0 0
        %1413 = vmatpush1.bf16.msra.mxu0 0
        %1414 = vmatprep.subr.bf16.mxu0 0
        %1415 = vmatpush1.bf16.msra.mxu0 0
        %1416 = vmatprep.subr.bf16.mxu0 0
        %1417 = vmatpush1.bf16.msra.mxu0 0
        %1418 = vmatprep.subr.bf16.mxu0 0
        %1419 = vmatpush1.bf16.msra.mxu0 0
        %1420 = vmatprep.subr.bf16.mxu0 0
        %1421 = vmatpush1.bf16.msra.mxu0 0
        %1422 = vmatprep.mubr.bf16.mxu0 0
        %1423 = vmatmul.mubr.bf16.gmra.mrb[0].mxu0 %v1316
        %v1424 = vpop.f32.mrb[0].mxu0
        %v1425 = vadd.f32 %v1340, %v1424
        %v1426 = vpop.f32.mrb[0].mxu0
        %v1427 = vpop.f32.mrb[0].mxu0
        %v1428 = vpop.f32.mrb[0].mxu0
        %1429 = vdwg.mxu0
        %v1430 = vmul.f32 %v1425, 0.17677669
        %v1431 = vld [vmem:[#allocation12] sm:$0xf]
        %v1432 = vld [vmem:[#allocation12 + $0x4] sm:$0xf]
        %v1433 = vld [vmem:[#allocation12 + $0x8] sm:$0xf]
        %v1434 = vld [vmem:[#allocation12 + $0xc] sm:$0xf]
        %v1435 = vld [vmem:[#allocation12 + $0x10] sm:$0xf]
        %v1436 = vld [vmem:[#allocation12 + $0x14] sm:$0xf]
        %v1437 = vld [vmem:[#allocation12 + $0x18] sm:$0xf]
        %v1438 = vld [vmem:[#allocation12 + $0x1c] sm:$0xf]
        %v1439 = vld [vmem:[#allocation12 + $0x20] sm:$0xf]
        %v1440 = vld [vmem:[#allocation12 + $0x24] sm:$0xf]
        %v1441 = vld [vmem:[#allocation12 + $0x28] sm:$0xf]
        %v1442 = vld [vmem:[#allocation12 + $0x2c] sm:$0xf]
        %v1443 = vld [vmem:[#allocation12 + $0x30] sm:$0xf]
        %v1444 = vld [vmem:[#allocation12 + $0x34] sm:$0xf]
        %v1445 = vld [vmem:[#allocation12 + $0x38] sm:$0xf]
        %v1446 = vld [vmem:[#allocation12 + $0x3c] sm:$0xf]
        %v1448 = vlaneseq
        %v1449 = vshrl.u32 %v1448, 7
        %v1450 = vsub.s32 0, %v1449
        %v1451 = vrot.slane %v1318, %v1450
        %v1469 = vunpack.c.l.b16 %v1431
        %v1470 = vunpack.c.l.b16 %v1432
        %v1471 = vunpack.c.l.b16 %v1433
        %v1472 = vunpack.c.l.b16 %v1434
        %v1473 = vunpack.c.l.b16 %v1435
        %v1474 = vunpack.c.l.b16 %v1436
        %v1475 = vunpack.c.l.b16 %v1437
        %v1476 = vunpack.c.l.b16 %v1438
        %v1477 = vunpack.c.l.b16 %v1439
        %v1478 = vunpack.c.l.b16 %v1440
        %v1479 = vunpack.c.l.b16 %v1441
        %v1480 = vunpack.c.l.b16 %v1442
        %v1481 = vunpack.c.l.b16 %v1443
        %v1482 = vunpack.c.l.b16 %v1444
        %v1483 = vunpack.c.l.b16 %v1445
        %v1484 = vunpack.c.l.b16 %v1446
        %v1485 = vpack.c.b16 %v1470, %v1469
        %v1486 = vpack.c.b16 %v1472, %v1471
        %v1487 = vpack.c.b16 %v1474, %v1473
        %v1488 = vpack.c.b16 %v1476, %v1475
        %v1489 = vpack.c.b16 %v1478, %v1477
        %v1490 = vpack.c.b16 %v1480, %v1479
        %v1491 = vpack.c.b16 %v1482, %v1481
        %v1492 = vpack.c.b16 %v1484, %v1483
        %1501 = vmatprep.subr.bf16.mxu0 0
        %1502 = vmatpush1.bf16.msra.mxu0 %v1485
        %1503 = vmatprep.subr.bf16.mxu0 0
        %1504 = vmatpush1.bf16.msra.mxu0 %v1486
        %1505 = vmatprep.subr.bf16.mxu0 0
        %1506 = vmatpush1.bf16.msra.mxu0 %v1487
        %1507 = vmatprep.subr.bf16.mxu0 0
        %1508 = vmatpush1.bf16.msra.mxu0 %v1488
        %1509 = vmatprep.subr.bf16.mxu0 0
        %1510 = vmatpush1.bf16.msra.mxu0 %v1489
        %1511 = vmatprep.subr.bf16.mxu0 0
        %1512 = vmatpush1.bf16.msra.mxu0 %v1490
        %1513 = vmatprep.subr.bf16.mxu0 0
        %1514 = vmatpush1.bf16.msra.mxu0 %v1491
        %1515 = vmatprep.subr.bf16.mxu0 0
        %1516 = vmatpush1.bf16.msra.mxu0 %v1492
        %1517 = vmatprep.subr.bf16.mxu0 0
        %1518 = vmatpush1.bf16.msra.mxu0 0
        %1519 = vmatprep.subr.bf16.mxu0 0
        %1520 = vmatpush1.bf16.msra.mxu0 0
        %1521 = vmatprep.subr.bf16.mxu0 0
        %1522 = vmatpush1.bf16.msra.mxu0 0
        %1523 = vmatprep.subr.bf16.mxu0 0
        %1524 = vmatpush1.bf16.msra.mxu0 0
        %1525 = vmatprep.subr.bf16.mxu0 0
        %1526 = vmatpush1.bf16.msra.mxu0 0
        %1527 = vmatprep.subr.bf16.mxu0 0
        %1528 = vmatpush1.bf16.msra.mxu0 0
        %1529 = vmatprep.subr.bf16.mxu0 0
        %1530 = vmatpush1.bf16.msra.mxu0 0
        %1531 = vmatprep.subr.bf16.mxu0 0
        %1532 = vmatpush1.bf16.msra.mxu0 0
        %1533 = vmatprep.mubr.bf16.mxu0 0
        %1534 = vmatmul.mubr.bf16.gmra.mrb[0].mxu0 %v1316
        %v1535 = vpop.f32.mrb[0].mxu0
        %v1536 = vadd.f32 %v1451, %v1535
        %v1537 = vpop.f32.mrb[0].mxu0
        %v1538 = vpop.f32.mrb[0].mxu0
        %v1539 = vpop.f32.mrb[0].mxu0
        %1540 = vdwg.mxu0
        %v1541 = vld [vmem:[#allocation15] sm:$0xf]
        %v1542 = vld [vmem:[#allocation15 + $0x4] sm:$0xf]
        %v1543 = vld [vmem:[#allocation15 + $0x8] sm:$0xf]
        %v1544 = vld [vmem:[#allocation15 + $0xc] sm:$0xf]
        %v1545 = vld [vmem:[#allocation15 + $0x10] sm:$0xf]
        %v1546 = vld [vmem:[#allocation15 + $0x14] sm:$0xf]
        %v1547 = vld [vmem:[#allocation15 + $0x18] sm:$0xf]
        %v1548 = vld [vmem:[#allocation15 + $0x1c] sm:$0xf]
        %v1549 = vld [vmem:[#allocation15 + $0x20] sm:$0xf]
        %v1550 = vld [vmem:[#allocation15 + $0x24] sm:$0xf]
        %v1551 = vld [vmem:[#allocation15 + $0x28] sm:$0xf]
        %v1552 = vld [vmem:[#allocation15 + $0x2c] sm:$0xf]
        %v1553 = vld [vmem:[#allocation15 + $0x30] sm:$0xf]
        %v1554 = vld [vmem:[#allocation15 + $0x34] sm:$0xf]
        %v1555 = vld [vmem:[#allocation15 + $0x38] sm:$0xf]
        %v1556 = vld [vmem:[#allocation15 + $0x3c] sm:$0xf]
        %v1558 = vlaneseq
        %v1559 = vshrl.u32 %v1558, 7
        %v1560 = vsub.s32 0, %v1559
        %v1561 = vrot.slane %v1319, %v1560
        %v1579 = vunpack.c.l.b16 %v1541
        %v1580 = vunpack.c.l.b16 %v1542
        %v1581 = vunpack.c.l.b16 %v1543
        %v1582 = vunpack.c.l.b16 %v1544
        %v1583 = vunpack.c.l.b16 %v1545
        %v1584 = vunpack.c.l.b16 %v1546
        %v1585 = vunpack.c.l.b16 %v1547
        %v1586 = vunpack.c.l.b16 %v1548
        %v1587 = vunpack.c.l.b16 %v1549
        %v1588 = vunpack.c.l.b16 %v1550
        %v1589 = vunpack.c.l.b16 %v1551
        %v1590 = vunpack.c.l.b16 %v1552
        %v1591 = vunpack.c.l.b16 %v1553
        %v1592 = vunpack.c.l.b16 %v1554
        %v1593 = vunpack.c.l.b16 %v1555
        %v1594 = vunpack.c.l.b16 %v1556
        %v1595 = vpack.c.b16 %v1580, %v1579
        %v1596 = vpack.c.b16 %v1582, %v1581
        %v1597 = vpack.c.b16 %v1584, %v1583
        %v1598 = vpack.c.b16 %v1586, %v1585
        %v1599 = vpack.c.b16 %v1588, %v1587
        %v1600 = vpack.c.b16 %v1590, %v1589
        %v1601 = vpack.c.b16 %v1592, %v1591
        %v1602 = vpack.c.b16 %v1594, %v1593
        %1611 = vmatprep.subr.bf16.mxu0 0
        %1612 = vmatpush1.bf16.msra.mxu0 %v1595
        %1613 = vmatprep.subr.bf16.mxu0 0
        %1614 = vmatpush1.bf16.msra.mxu0 %v1596
        %1615 = vmatprep.subr.bf16.mxu0 0
        %1616 = vmatpush1.bf16.msra.mxu0 %v1597
        %1617 = vmatprep.subr.bf16.mxu0 0
        %1618 = vmatpush1.bf16.msra.mxu0 %v1598
        %1619 = vmatprep.subr.bf16.mxu0 0
        %1620 = vmatpush1.bf16.msra.mxu0 %v1599
        %1621 = vmatprep.subr.bf16.mxu0 0
        %1622 = vmatpush1.bf16.msra.mxu0 %v1600
        %1623 = vmatprep.subr.bf16.mxu0 0
        %1624 = vmatpush1.bf16.msra.mxu0 %v1601
        %1625 = vmatprep.subr.bf16.mxu0 0
        %1626 = vmatpush1.bf16.msra.mxu0 %v1602
        %1627 = vmatprep.subr.bf16.mxu0 0
        %1628 = vmatpush1.bf16.msra.mxu0 0
        %1629 = vmatprep.subr.bf16.mxu0 0
        %1630 = vmatpush1.bf16.msra.mxu0 0
        %1631 = vmatprep.subr.bf16.mxu0 0
        %1632 = vmatpush1.bf16.msra.mxu0 0
        %1633 = vmatprep.subr.bf16.mxu0 0
        %1634 = vmatpush1.bf16.msra.mxu0 0
        %1635 = vmatprep.subr.bf16.mxu0 0
        %1636 = vmatpush1.bf16.msra.mxu0 0
        %1637 = vmatprep.subr.bf16.mxu0 0
        %1638 = vmatpush1.bf16.msra.mxu0 0
        %1639 = vmatprep.subr.bf16.mxu0 0
        %1640 = vmatpush1.bf16.msra.mxu0 0
        %1641 = vmatprep.subr.bf16.mxu0 0
        %1642 = vmatpush1.bf16.msra.mxu0 0
        %1643 = vmatprep.mubr.bf16.mxu0 0
        %1644 = vmatmul.mubr.bf16.gmra.mrb[0].mxu0 %v1316
        %v1645 = vpop.f32.mrb[0].mxu0
        %v1646 = vadd.f32 %v1561, %v1645
        %v1647 = vpop.f32.mrb[0].mxu0
        %v1648 = vpop.f32.mrb[0].mxu0
        %v1649 = vpop.f32.mrb[0].mxu0
        %1650 = vdwg.mxu0
        %1651 = vmatprep.subr.bf16.mxu0 0
        %1652 = vmatpush1.bf16.msra.mxu0 %v1485
        %1653 = vmatprep.subr.bf16.mxu0 0
        %1654 = vmatpush1.bf16.msra.mxu0 %v1486
        %1655 = vmatprep.subr.bf16.mxu0 0
        %1656 = vmatpush1.bf16.msra.mxu0 %v1487
        %1657 = vmatprep.subr.bf16.mxu0 0
        %1658 = vmatpush1.bf16.msra.mxu0 %v1488
        %1659 = vmatprep.subr.bf16.mxu0 0
        %1660 = vmatpush1.bf16.msra.mxu0 %v1489
        %1661 = vmatprep.subr.bf16.mxu0 0
        %1662 = vmatpush1.bf16.msra.mxu0 %v1490
        %1663 = vmatprep.subr.bf16.mxu0 0
        %1664 = vmatpush1.bf16.msra.mxu0 %v1491
        %1665 = vmatprep.subr.bf16.mxu0 0
        %1666 = vmatpush1.bf16.msra.mxu0 %v1492
        %1667 = vmatprep.subr.bf16.mxu0 0
        %1668 = vmatpush1.bf16.msra.mxu0 0
        %1669 = vmatprep.subr.bf16.mxu0 0
        %1670 = vmatpush1.bf16.msra.mxu0 0
        %1671 = vmatprep.subr.bf16.mxu0 0
        %1672 = vmatpush1.bf16.msra.mxu0 0
        %1673 = vmatprep.subr.bf16.mxu0 0
        %1674 = vmatpush1.bf16.msra.mxu0 0
        %1675 = vmatprep.subr.bf16.mxu0 0
        %1676 = vmatpush1.bf16.msra.mxu0 0
        %1677 = vmatprep.subr.bf16.mxu0 0
        %1678 = vmatpush1.bf16.msra.mxu0 0
        %1679 = vmatprep.subr.bf16.mxu0 0
        %1680 = vmatpush1.bf16.msra.mxu0 0
        %1681 = vmatprep.subr.bf16.mxu0 0
        %1682 = vmatpush1.bf16.msra.mxu0 0
        %1683 = vmatprep.mubr.bf16.mxu0 0
        %1684 = vmatmul.mubr.bf16.gmra.mrb[0].mxu0 %v1070
        %v1685 = vpop.f32.mrb[0].mxu0
        %v1686 = vadd.f32 %v1451, %v1685
        %v1687 = vpop.f32.mrb[0].mxu0
        %v1688 = vpop.f32.mrb[0].mxu0
        %v1689 = vadd.f32 %v1451, %v1688
        %v1690 = vpop.f32.mrb[0].mxu0
        %1691 = vmatprep.mubr.bf16.mxu0 0
        %1692 = vmatmul.mubr.bf16.gmra.mrb[0].mxu0 %v1071
        %v1693 = vpop.f32.mrb[0].mxu0
        %v1694 = vadd.f32 %v1451, %v1693
        %v1695 = vpop.f32.mrb[0].mxu0
        %v1696 = vpop.f32.mrb[0].mxu0
        %v1697 = vadd.f32 %v1451, %v1696
        %v1698 = vpop.f32.mrb[0].mxu0
        %1699 = vmatprep.mubr.bf16.mxu0 0
        %1700 = vmatmul.mubr.bf16.gmra.mrb[0].mxu0 %v1072
        %v1701 = vpop.f32.mrb[0].mxu0
        %v1702 = vadd.f32 %v1451, %v1701
        %v1703 = vpop.f32.mrb[0].mxu0
        %v1704 = vpop.f32.mrb[0].mxu0
        %v1705 = vadd.f32 %v1451, %v1704
        %v1706 = vpop.f32.mrb[0].mxu0
        %1707 = vmatprep.mubr.bf16.mxu0 0
        %1708 = vmatmul.mubr.bf16.gmra.mrb[0].mxu0 %v1073
        %v1709 = vpop.f32.mrb[0].mxu0
        %v1710 = vadd.f32 %v1451, %v1709
        %v1711 = vpop.f32.mrb[0].mxu0
        %v1712 = vpop.f32.mrb[0].mxu0
        %v1713 = vadd.f32 %v1451, %v1712
        %v1714 = vpop.f32.mrb[0].mxu0
        %1715 = vmatprep.mubr.bf16.mxu0 0
        %1716 = vmatmul.mubr.bf16.gmra.mrb[0].mxu0 %v1074
        %v1717 = vpop.f32.mrb[0].mxu0
        %v1718 = vadd.f32 %v1451, %v1717
        %v1719 = vpop.f32.mrb[0].mxu0
        %v1720 = vpop.f32.mrb[0].mxu0
        %v1721 = vadd.f32 %v1451, %v1720
        %v1722 = vpop.f32.mrb[0].mxu0
        %1723 = vmatprep.mubr.bf16.mxu0 0
        %1724 = vmatmul.mubr.bf16.gmra.mrb[0].mxu0 %v1075
        %v1725 = vpop.f32.mrb[0].mxu0
        %v1726 = vadd.f32 %v1451, %v1725
        %v1727 = vpop.f32.mrb[0].mxu0
        %v1728 = vpop.f32.mrb[0].mxu0
        %v1729 = vadd.f32 %v1451, %v1728
        %v1730 = vpop.f32.mrb[0].mxu0
        %1731 = vmatprep.mubr.bf16.mxu0 0
        %1732 = vmatmul.mubr.bf16.gmra.mrb[0].mxu0 %v1076
        %v1733 = vpop.f32.mrb[0].mxu0
        %v1734 = vadd.f32 %v1451, %v1733
        %v1735 = vpop.f32.mrb[0].mxu0
        %v1736 = vpop.f32.mrb[0].mxu0
        %v1737 = vadd.f32 %v1451, %v1736
        %v1738 = vpop.f32.mrb[0].mxu0
        %1739 = vmatprep.mubr.bf16.mxu0 0
        %1740 = vmatmul.mubr.bf16.gmra.mrb[0].mxu0 %v1077
        %v1741 = vpop.f32.mrb[0].mxu0
        %v1742 = vadd.f32 %v1451, %v1741
        %v1743 = vpop.f32.mrb[0].mxu0
        %v1744 = vpop.f32.mrb[0].mxu0
        %v1745 = vadd.f32 %v1451, %v1744
        %v1746 = vpop.f32.mrb[0].mxu0
        %1747 = vmatprep.mubr.bf16.mxu0 0
        %1748 = vmatmul.mubr.bf16.gmra.mrb[0].mxu0 %v1078
        %v1749 = vpop.f32.mrb[0].mxu0
        %v1750 = vadd.f32 %v1451, %v1749
        %v1751 = vpop.f32.mrb[0].mxu0
        %v1752 = vpop.f32.mrb[0].mxu0
        %v1753 = vadd.f32 %v1451, %v1752
        %v1754 = vpop.f32.mrb[0].mxu0
        %1755 = vmatprep.mubr.bf16.mxu0 0
        %1756 = vmatmul.mubr.bf16.gmra.mrb[0].mxu0 %v1079
        %v1757 = vpop.f32.mrb[0].mxu0
        %v1758 = vadd.f32 %v1451, %v1757
        %v1759 = vpop.f32.mrb[0].mxu0
        %v1760 = vpop.f32.mrb[0].mxu0
        %v1761 = vadd.f32 %v1451, %v1760
        %v1762 = vpop.f32.mrb[0].mxu0
        %1763 = vmatprep.mubr.bf16.mxu0 0
        %1764 = vmatmul.mubr.bf16.gmra.mrb[0].mxu0 %v1080
        %v1765 = vpop.f32.mrb[0].mxu0
        %v1766 = vadd.f32 %v1451, %v1765
        %v1767 = vpop.f32.mrb[0].mxu0
        %v1768 = vpop.f32.mrb[0].mxu0
        %v1769 = vadd.f32 %v1451, %v1768
        %v1770 = vpop.f32.mrb[0].mxu0
        %1771 = vmatprep.mubr.bf16.mxu0 0
        %1772 = vmatmul.mubr.bf16.gmra.mrb[0].mxu0 %v1081
        %v1773 = vpop.f32.mrb[0].mxu0
        %v1774 = vadd.f32 %v1451, %v1773
        %v1775 = vpop.f32.mrb[0].mxu0
        %v1776 = vpop.f32.mrb[0].mxu0
        %v1777 = vadd.f32 %v1451, %v1776
        %v1778 = vpop.f32.mrb[0].mxu0
        %1779 = vmatprep.mubr.bf16.mxu0 0
        %1780 = vmatmul.mubr.bf16.gmra.mrb[0].mxu0 %v1082
        %v1781 = vpop.f32.mrb[0].mxu0
        %v1782 = vadd.f32 %v1451, %v1781
        %v1783 = vpop.f32.mrb[0].mxu0
        %v1784 = vpop.f32.mrb[0].mxu0
        %v1785 = vadd.f32 %v1451, %v1784
        %v1786 = vpop.f32.mrb[0].mxu0
        %1787 = vmatprep.mubr.bf16.mxu0 0
        %1788 = vmatmul.mubr.bf16.gmra.mrb[0].mxu0 %v1083
        %v1789 = vpop.f32.mrb[0].mxu0
        %v1790 = vadd.f32 %v1451, %v1789
        %v1791 = vpop.f32.mrb[0].mxu0
        %v1792 = vpop.f32.mrb[0].mxu0
        %v1793 = vadd.f32 %v1451, %v1792
        %v1794 = vpop.f32.mrb[0].mxu0
        %1795 = vmatprep.mubr.bf16.mxu0 0
        %1796 = vmatmul.mubr.bf16.gmra.mrb[0].mxu0 %v1084
        %v1797 = vpop.f32.mrb[0].mxu0
        %v1798 = vadd.f32 %v1451, %v1797
        %v1799 = vpop.f32.mrb[0].mxu0
        %v1800 = vpop.f32.mrb[0].mxu0
        %v1801 = vadd.f32 %v1451, %v1800
        %v1802 = vpop.f32.mrb[0].mxu0
        %1803 = vmatprep.mubr.bf16.mxu0 0
        %1804 = vmatmul.mubr.bf16.gmra.mrb[0].mxu0 %v1085
        %v1805 = vpop.f32.mrb[0].mxu0
        %v1806 = vadd.f32 %v1451, %v1805
        %v1807 = vpop.f32.mrb[0].mxu0
        %v1808 = vpop.f32.mrb[0].mxu0
        %v1809 = vadd.f32 %v1451, %v1808
        %v1810 = vpop.f32.mrb[0].mxu0
        %1811 = vmatprep.mubr.bf16.mxu0 0
        %1812 = vmatmul.mubr.bf16.gmra.mrb[0].mxu0 %v1086
        %v1813 = vpop.f32.mrb[0].mxu0
        %v1814 = vadd.f32 %v1451, %v1813
        %v1815 = vpop.f32.mrb[0].mxu0
        %v1816 = vpop.f32.mrb[0].mxu0
        %v1817 = vadd.f32 %v1451, %v1816
        %v1818 = vpop.f32.mrb[0].mxu0
        %1819 = vmatprep.mubr.bf16.mxu0 0
        %1820 = vmatmul.mubr.bf16.gmra.mrb[0].mxu0 %v1087
        %v1821 = vpop.f32.mrb[0].mxu0
        %v1822 = vadd.f32 %v1451, %v1821
        %v1823 = vpop.f32.mrb[0].mxu0
        %v1824 = vpop.f32.mrb[0].mxu0
        %v1825 = vadd.f32 %v1451, %v1824
        %v1826 = vpop.f32.mrb[0].mxu0
        %1827 = vmatprep.mubr.bf16.mxu0 0
        %1828 = vmatmul.mubr.bf16.gmra.mrb[0].mxu0 %v1088
        %v1829 = vpop.f32.mrb[0].mxu0
        %v1830 = vadd.f32 %v1451, %v1829
        %v1831 = vpop.f32.mrb[0].mxu0
        %v1832 = vpop.f32.mrb[0].mxu0
        %v1833 = vadd.f32 %v1451, %v1832
        %v1834 = vpop.f32.mrb[0].mxu0
        %1835 = vmatprep.mubr.bf16.mxu0 0
        %1836 = vmatmul.mubr.bf16.gmra.mrb[0].mxu0 %v1089
        %v1837 = vpop.f32.mrb[0].mxu0
        %v1838 = vadd.f32 %v1451, %v1837
        %v1839 = vpop.f32.mrb[0].mxu0
        %v1840 = vpop.f32.mrb[0].mxu0
        %v1841 = vadd.f32 %v1451, %v1840
        %v1842 = vpop.f32.mrb[0].mxu0
        %1843 = vmatprep.mubr.bf16.mxu0 0
        %1844 = vmatmul.mubr.bf16.gmra.mrb[0].mxu0 %v1090
        %v1845 = vpop.f32.mrb[0].mxu0
        %v1846 = vadd.f32 %v1451, %v1845
        %v1847 = vpop.f32.mrb[0].mxu0
        %v1848 = vpop.f32.mrb[0].mxu0
        %v1849 = vadd.f32 %v1451, %v1848
        %v1850 = vpop.f32.mrb[0].mxu0
        %1851 = vmatprep.mubr.bf16.mxu0 0
        %1852 = vmatmul.mubr.bf16.gmra.mrb[0].mxu0 %v1091
        %v1853 = vpop.f32.mrb[0].mxu0
        %v1854 = vadd.f32 %v1451, %v1853
        %v1855 = vpop.f32.mrb[0].mxu0
        %v1856 = vpop.f32.mrb[0].mxu0
        %v1857 = vadd.f32 %v1451, %v1856
        %v1858 = vpop.f32.mrb[0].mxu0
        %1859 = vmatprep.mubr.bf16.mxu0 0
        %1860 = vmatmul.mubr.bf16.gmra.mrb[0].mxu0 %v1092
        %v1861 = vpop.f32.mrb[0].mxu0
        %v1862 = vadd.f32 %v1451, %v1861
        %v1863 = vpop.f32.mrb[0].mxu0
        %v1864 = vpop.f32.mrb[0].mxu0
        %v1865 = vadd.f32 %v1451, %v1864
        %v1866 = vpop.f32.mrb[0].mxu0
        %1867 = vmatprep.mubr.bf16.mxu0 0
        %1868 = vmatmul.mubr.bf16.gmra.mrb[0].mxu0 %v1093
        %v1869 = vpop.f32.mrb[0].mxu0
        %v1870 = vadd.f32 %v1451, %v1869
        %v1871 = vpop.f32.mrb[0].mxu0
        %v1872 = vpop.f32.mrb[0].mxu0
        %v1873 = vadd.f32 %v1451, %v1872
        %v1874 = vpop.f32.mrb[0].mxu0
        %1875 = vmatprep.mubr.bf16.mxu0 0
        %1876 = vmatmul.mubr.bf16.gmra.mrb[0].mxu0 %v1094
        %v1877 = vpop.f32.mrb[0].mxu0
        %v1878 = vadd.f32 %v1451, %v1877
        %v1879 = vpop.f32.mrb[0].mxu0
        %v1880 = vpop.f32.mrb[0].mxu0
        %v1881 = vadd.f32 %v1451, %v1880
        %v1882 = vpop.f32.mrb[0].mxu0
        %1883 = vmatprep.mubr.bf16.mxu0 0
        %1884 = vmatmul.mubr.bf16.gmra.mrb[0].mxu0 %v1095
        %v1885 = vpop.f32.mrb[0].mxu0
        %v1886 = vadd.f32 %v1451, %v1885
        %v1887 = vpop.f32.mrb[0].mxu0
        %v1888 = vpop.f32.mrb[0].mxu0
        %v1889 = vadd.f32 %v1451, %v1888
        %v1890 = vpop.f32.mrb[0].mxu0
        %1891 = vmatprep.mubr.bf16.mxu0 0
        %1892 = vmatmul.mubr.bf16.gmra.mrb[0].mxu0 %v1096
        %v1893 = vpop.f32.mrb[0].mxu0
        %v1894 = vadd.f32 %v1451, %v1893
        %v1895 = vpop.f32.mrb[0].mxu0
        %v1896 = vpop.f32.mrb[0].mxu0
        %v1897 = vadd.f32 %v1451, %v1896
        %v1898 = vpop.f32.mrb[0].mxu0
        %1899 = vmatprep.mubr.bf16.mxu0 0
        %1900 = vmatmul.mubr.bf16.gmra.mrb[0].mxu0 %v1097
        %v1901 = vpop.f32.mrb[0].mxu0
        %v1902 = vadd.f32 %v1451, %v1901
        %v1903 = vpop.f32.mrb[0].mxu0
        %v1904 = vpop.f32.mrb[0].mxu0
        %v1905 = vadd.f32 %v1451, %v1904
        %v1906 = vpop.f32.mrb[0].mxu0
        %1907 = vmatprep.mubr.bf16.mxu0 0
        %1908 = vmatmul.mubr.bf16.gmra.mrb[0].mxu0 %v1098
        %v1909 = vpop.f32.mrb[0].mxu0
        %v1910 = vadd.f32 %v1451, %v1909
        %v1911 = vpop.f32.mrb[0].mxu0
        %v1912 = vpop.f32.mrb[0].mxu0
        %v1913 = vadd.f32 %v1451, %v1912
        %v1914 = vpop.f32.mrb[0].mxu0
        %1915 = vmatprep.mubr.bf16.mxu0 0
        %1916 = vmatmul.mubr.bf16.gmra.mrb[0].mxu0 %v1099
        %v1917 = vpop.f32.mrb[0].mxu0
        %v1918 = vadd.f32 %v1451, %v1917
        %v1919 = vpop.f32.mrb[0].mxu0
        %v1920 = vpop.f32.mrb[0].mxu0
        %v1921 = vadd.f32 %v1451, %v1920
        %v1922 = vpop.f32.mrb[0].mxu0
        %1923 = vmatprep.mubr.bf16.mxu0 0
        %1924 = vmatmul.mubr.bf16.gmra.mrb[0].mxu0 %v1100
        %v1925 = vpop.f32.mrb[0].mxu0
        %v1926 = vadd.f32 %v1451, %v1925
        %v1927 = vpop.f32.mrb[0].mxu0
        %v1928 = vpop.f32.mrb[0].mxu0
        %v1929 = vadd.f32 %v1451, %v1928
        %v1930 = vpop.f32.mrb[0].mxu0
        %1931 = vmatprep.mubr.bf16.mxu0 0
        %1932 = vmatmul.mubr.bf16.gmra.mrb[0].mxu0 %v1101
        %v1933 = vpop.f32.mrb[0].mxu0
        %v1934 = vadd.f32 %v1451, %v1933
        %v1935 = vpop.f32.mrb[0].mxu0
        %v1936 = vpop.f32.mrb[0].mxu0
        %v1937 = vadd.f32 %v1451, %v1936
        %v1938 = vpop.f32.mrb[0].mxu0
        %1939 = vdwg.mxu0
        %1940 = vmatprep.subr.bf16.mxu0 0
        %1941 = vmatpush1.bf16.msra.mxu0 %v1595
        %1942 = vmatprep.subr.bf16.mxu0 0
        %1943 = vmatpush1.bf16.msra.mxu0 %v1596
        %1944 = vmatprep.subr.bf16.mxu0 0
        %1945 = vmatpush1.bf16.msra.mxu0 %v1597
        %1946 = vmatprep.subr.bf16.mxu0 0
        %1947 = vmatpush1.bf16.msra.mxu0 %v1598
        %1948 = vmatprep.subr.bf16.mxu0 0
        %1949 = vmatpush1.bf16.msra.mxu0 %v1599
        %1950 = vmatprep.subr.bf16.mxu0 0
        %1951 = vmatpush1.bf16.msra.mxu0 %v1600
        %1952 = vmatprep.subr.bf16.mxu0 0
        %1953 = vmatpush1.bf16.msra.mxu0 %v1601
        %1954 = vmatprep.subr.bf16.mxu0 0
        %1955 = vmatpush1.bf16.msra.mxu0 %v1602
        %1956 = vmatprep.subr.bf16.mxu0 0
        %1957 = vmatpush1.bf16.msra.mxu0 0
        %1958 = vmatprep.subr.bf16.mxu0 0
        %1959 = vmatpush1.bf16.msra.mxu0 0
        %1960 = vmatprep.subr.bf16.mxu0 0
        %1961 = vmatpush1.bf16.msra.mxu0 0
        %1962 = vmatprep.subr.bf16.mxu0 0
        %1963 = vmatpush1.bf16.msra.mxu0 0
        %1964 = vmatprep.subr.bf16.mxu0 0
        %1965 = vmatpush1.bf16.msra.mxu0 0
        %1966 = vmatprep.subr.bf16.mxu0 0
        %1967 = vmatpush1.bf16.msra.mxu0 0
        %1968 = vmatprep.subr.bf16.mxu0 0
        %1969 = vmatpush1.bf16.msra.mxu0 0
        %1970 = vmatprep.subr.bf16.mxu0 0
        %1971 = vmatpush1.bf16.msra.mxu0 0
        %1972 = vmatprep.mubr.bf16.mxu0 0
        %1973 = vmatmul.mubr.bf16.gmra.mrb[0].mxu0 %v1070
        %v1974 = vpop.f32.mrb[0].mxu0
        %v1975 = vadd.f32 %v1561, %v1974
        %v1976 = vpop.f32.mrb[0].mxu0
        %v1977 = vpop.f32.mrb[0].mxu0
        %v1978 = vadd.f32 %v1561, %v1977
        %v1979 = vpop.f32.mrb[0].mxu0
        %1980 = vmatprep.mubr.bf16.mxu0 0
        %1981 = vmatmul.mubr.bf16.gmra.mrb[0].mxu0 %v1071
        %v1982 = vpop.f32.mrb[0].mxu0
        %v1983 = vadd.f32 %v1561, %v1982
        %v1984 = vpop.f32.mrb[0].mxu0
        %v1985 = vpop.f32.mrb[0].mxu0
        %v1986 = vadd.f32 %v1561, %v1985
        %v1987 = vpop.f32.mrb[0].mxu0
        %1988 = vmatprep.mubr.bf16.mxu0 0
        %1989 = vmatmul.mubr.bf16.gmra.mrb[0].mxu0 %v1072
        %v1990 = vpop.f32.mrb[0].mxu0
        %v1991 = vadd.f32 %v1561, %v1990
        %v1992 = vpop.f32.mrb[0].mxu0
        %v1993 = vpop.f32.mrb[0].mxu0
        %v1994 = vadd.f32 %v1561, %v1993
        %v1995 = vpop.f32.mrb[0].mxu0
        %1996 = vmatprep.mubr.bf16.mxu0 0
        %1997 = vmatmul.mubr.bf16.gmra.mrb[0].mxu0 %v1073
        %v1998 = vpop.f32.mrb[0].mxu0
        %v1999 = vadd.f32 %v1561, %v1998
        %v2000 = vpop.f32.mrb[0].mxu0
        %v2001 = vpop.f32.mrb[0].mxu0
        %v2002 = vadd.f32 %v1561, %v2001
        %v2003 = vpop.f32.mrb[0].mxu0
        %2004 = vmatprep.mubr.bf16.mxu0 0
        %2005 = vmatmul.mubr.bf16.gmra.mrb[0].mxu0 %v1074
        %v2006 = vpop.f32.mrb[0].mxu0
        %v2007 = vadd.f32 %v1561, %v2006
        %v2008 = vpop.f32.mrb[0].mxu0
        %v2009 = vpop.f32.mrb[0].mxu0
        %v2010 = vadd.f32 %v1561, %v2009
        %v2011 = vpop.f32.mrb[0].mxu0
        %2012 = vmatprep.mubr.bf16.mxu0 0
        %2013 = vmatmul.mubr.bf16.gmra.mrb[0].mxu0 %v1075
        %v2014 = vpop.f32.mrb[0].mxu0
        %v2015 = vadd.f32 %v1561, %v2014
        %v2016 = vpop.f32.mrb[0].mxu0
        %v2017 = vpop.f32.mrb[0].mxu0
        %v2018 = vadd.f32 %v1561, %v2017
        %v2019 = vpop.f32.mrb[0].mxu0
        %2020 = vmatprep.mubr.bf16.mxu0 0
        %2021 = vmatmul.mubr.bf16.gmra.mrb[0].mxu0 %v1076
        %v2022 = vpop.f32.mrb[0].mxu0
        %v2023 = vadd.f32 %v1561, %v2022
        %v2024 = vpop.f32.mrb[0].mxu0
        %v2025 = vpop.f32.mrb[0].mxu0
        %v2026 = vadd.f32 %v1561, %v2025
        %v2027 = vpop.f32.mrb[0].mxu0
        %2028 = vmatprep.mubr.bf16.mxu0 0
        %2029 = vmatmul.mubr.bf16.gmra.mrb[0].mxu0 %v1077
        %v2030 = vpop.f32.mrb[0].mxu0
        %v2031 = vadd.f32 %v1561, %v2030
        %v2032 = vpop.f32.mrb[0].mxu0
        %v2033 = vpop.f32.mrb[0].mxu0
        %v2034 = vadd.f32 %v1561, %v2033
        %v2035 = vpop.f32.mrb[0].mxu0
        %2036 = vmatprep.mubr.bf16.mxu0 0
        %2037 = vmatmul.mubr.bf16.gmra.mrb[0].mxu0 %v1078
        %v2038 = vpop.f32.mrb[0].mxu0
        %v2039 = vadd.f32 %v1561, %v2038
        %v2040 = vpop.f32.mrb[0].mxu0
        %v2041 = vpop.f32.mrb[0].mxu0
        %v2042 = vadd.f32 %v1561, %v2041
        %v2043 = vpop.f32.mrb[0].mxu0
        %2044 = vmatprep.mubr.bf16.mxu0 0
        %2045 = vmatmul.mubr.bf16.gmra.mrb[0].mxu0 %v1079
        %v2046 = vpop.f32.mrb[0].mxu0
        %v2047 = vadd.f32 %v1561, %v2046
        %v2048 = vpop.f32.mrb[0].mxu0
        %v2049 = vpop.f32.mrb[0].mxu0
        %v2050 = vadd.f32 %v1561, %v2049
        %v2051 = vpop.f32.mrb[0].mxu0
        %2052 = vmatprep.mubr.bf16.mxu0 0
        %2053 = vmatmul.mubr.bf16.gmra.mrb[0].mxu0 %v1080
        %v2054 = vpop.f32.mrb[0].mxu0
        %v2055 = vadd.f32 %v1561, %v2054
        %v2056 = vpop.f32.mrb[0].mxu0
        %v2057 = vpop.f32.mrb[0].mxu0
        %v2058 = vadd.f32 %v1561, %v2057
        %v2059 = vpop.f32.mrb[0].mxu0
        %2060 = vmatprep.mubr.bf16.mxu0 0
        %2061 = vmatmul.mubr.bf16.gmra.mrb[0].mxu0 %v1081
        %v2062 = vpop.f32.mrb[0].mxu0
        %v2063 = vadd.f32 %v1561, %v2062
        %v2064 = vpop.f32.mrb[0].mxu0
        %v2065 = vpop.f32.mrb[0].mxu0
        %v2066 = vadd.f32 %v1561, %v2065
        %v2067 = vpop.f32.mrb[0].mxu0
        %2068 = vmatprep.mubr.bf16.mxu0 0
        %2069 = vmatmul.mubr.bf16.gmra.mrb[0].mxu0 %v1082
        %v2070 = vpop.f32.mrb[0].mxu0
        %v2071 = vadd.f32 %v1561, %v2070
        %v2072 = vpop.f32.mrb[0].mxu0
        %v2073 = vpop.f32.mrb[0].mxu0
        %v2074 = vadd.f32 %v1561, %v2073
        %v2075 = vpop.f32.mrb[0].mxu0
        %2076 = vmatprep.mubr.bf16.mxu0 0
        %2077 = vmatmul.mubr.bf16.gmra.mrb[0].mxu0 %v1083
        %v2078 = vpop.f32.mrb[0].mxu0
        %v2079 = vadd.f32 %v1561, %v2078
        %v2080 = vpop.f32.mrb[0].mxu0
        %v2081 = vpop.f32.mrb[0].mxu0
        %v2082 = vadd.f32 %v1561, %v2081
        %v2083 = vpop.f32.mrb[0].mxu0
        %2084 = vmatprep.mubr.bf16.mxu0 0
        %2085 = vmatmul.mubr.bf16.gmra.mrb[0].mxu0 %v1084
        %v2086 = vpop.f32.mrb[0].mxu0
        %v2087 = vadd.f32 %v1561, %v2086
        %v2088 = vpop.f32.mrb[0].mxu0
        %v2089 = vpop.f32.mrb[0].mxu0
        %v2090 = vadd.f32 %v1561, %v2089
        %v2091 = vpop.f32.mrb[0].mxu0
        %2092 = vmatprep.mubr.bf16.mxu0 0
        %2093 = vmatmul.mubr.bf16.gmra.mrb[0].mxu0 %v1085
        %v2094 = vpop.f32.mrb[0].mxu0
        %v2095 = vadd.f32 %v1561, %v2094
        %v2096 = vpop.f32.mrb[0].mxu0
        %v2097 = vpop.f32.mrb[0].mxu0
        %v2098 = vadd.f32 %v1561, %v2097
        %v2099 = vpop.f32.mrb[0].mxu0
        %2100 = vmatprep.mubr.bf16.mxu0 0
        %2101 = vmatmul.mubr.bf16.gmra.mrb[0].mxu0 %v1086
        %v2102 = vpop.f32.mrb[0].mxu0
        %v2103 = vadd.f32 %v1561, %v2102
        %v2104 = vpop.f32.mrb[0].mxu0
        %v2105 = vpop.f32.mrb[0].mxu0
        %v2106 = vadd.f32 %v1561, %v2105
        %v2107 = vpop.f32.mrb[0].mxu0
        %2108 = vmatprep.mubr.bf16.mxu0 0
        %2109 = vmatmul.mubr.bf16.gmra.mrb[0].mxu0 %v1087
        %v2110 = vpop.f32.mrb[0].mxu0
        %v2111 = vadd.f32 %v1561, %v2110
        %v2112 = vpop.f32.mrb[0].mxu0
        %v2113 = vpop.f32.mrb[0].mxu0
        %v2114 = vadd.f32 %v1561, %v2113
        %v2115 = vpop.f32.mrb[0].mxu0
        %2116 = vmatprep.mubr.bf16.mxu0 0
        %2117 = vmatmul.mubr.bf16.gmra.mrb[0].mxu0 %v1088
        %v2118 = vpop.f32.mrb[0].mxu0
        %v2119 = vadd.f32 %v1561, %v2118
        %v2120 = vpop.f32.mrb[0].mxu0
        %v2121 = vpop.f32.mrb[0].mxu0
        %v2122 = vadd.f32 %v1561, %v2121
        %v2123 = vpop.f32.mrb[0].mxu0
        %2124 = vmatprep.mubr.bf16.mxu0 0
        %2125 = vmatmul.mubr.bf16.gmra.mrb[0].mxu0 %v1089
        %v2126 = vpop.f32.mrb[0].mxu0
        %v2127 = vadd.f32 %v1561, %v2126
        %v2128 = vpop.f32.mrb[0].mxu0
        %v2129 = vpop.f32.mrb[0].mxu0
        %v2130 = vadd.f32 %v1561, %v2129
        %v2131 = vpop.f32.mrb[0].mxu0
        %2132 = vmatprep.mubr.bf16.mxu0 0
        %2133 = vmatmul.mubr.bf16.gmra.mrb[0].mxu0 %v1090
        %v2134 = vpop.f32.mrb[0].mxu0
        %v2135 = vadd.f32 %v1561, %v2134
        %v2136 = vpop.f32.mrb[0].mxu0
        %v2137 = vpop.f32.mrb[0].mxu0
        %v2138 = vadd.f32 %v1561, %v2137
        %v2139 = vpop.f32.mrb[0].mxu0
        %2140 = vmatprep.mubr.bf16.mxu0 0
        %2141 = vmatmul.mubr.bf16.gmra.mrb[0].mxu0 %v1091
        %v2142 = vpop.f32.mrb[0].mxu0
        %v2143 = vadd.f32 %v1561, %v2142
        %v2144 = vpop.f32.mrb[0].mxu0
        %v2145 = vpop.f32.mrb[0].mxu0
        %v2146 = vadd.f32 %v1561, %v2145
        %v2147 = vpop.f32.mrb[0].mxu0
        %2148 = vmatprep.mubr.bf16.mxu0 0
        %2149 = vmatmul.mubr.bf16.gmra.mrb[0].mxu0 %v1092
        %v2150 = vpop.f32.mrb[0].mxu0
        %v2151 = vadd.f32 %v1561, %v2150
        %v2152 = vpop.f32.mrb[0].mxu0
        %v2153 = vpop.f32.mrb[0].mxu0
        %v2154 = vadd.f32 %v1561, %v2153
        %v2155 = vpop.f32.mrb[0].mxu0
        %2156 = vmatprep.mubr.bf16.mxu0 0
        %2157 = vmatmul.mubr.bf16.gmra.mrb[0].mxu0 %v1093
        %v2158 = vpop.f32.mrb[0].mxu0
        %v2159 = vadd.f32 %v1561, %v2158
        %v2160 = vpop.f32.mrb[0].mxu0
        %v2161 = vpop.f32.mrb[0].mxu0
        %v2162 = vadd.f32 %v1561, %v2161
        %v2163 = vpop.f32.mrb[0].mxu0
        %2164 = vmatprep.mubr.bf16.mxu0 0
        %2165 = vmatmul.mubr.bf16.gmra.mrb[0].mxu0 %v1094
        %v2166 = vpop.f32.mrb[0].mxu0
        %v2167 = vadd.f32 %v1561, %v2166
        %v2168 = vpop.f32.mrb[0].mxu0
        %v2169 = vpop.f32.mrb[0].mxu0
        %v2170 = vadd.f32 %v1561, %v2169
        %v2171 = vpop.f32.mrb[0].mxu0
        %2172 = vmatprep.mubr.bf16.mxu0 0
        %2173 = vmatmul.mubr.bf16.gmra.mrb[0].mxu0 %v1095
        %v2174 = vpop.f32.mrb[0].mxu0
        %v2175 = vadd.f32 %v1561, %v2174
        %v2176 = vpop.f32.mrb[0].mxu0
        %v2177 = vpop.f32.mrb[0].mxu0
        %v2178 = vadd.f32 %v1561, %v2177
        %v2179 = vpop.f32.mrb[0].mxu0
        %2180 = vmatprep.mubr.bf16.mxu0 0
        %2181 = vmatmul.mubr.bf16.gmra.mrb[0].mxu0 %v1096
        %v2182 = vpop.f32.mrb[0].mxu0
        %v2183 = vadd.f32 %v1561, %v2182
        %v2184 = vpop.f32.mrb[0].mxu0
        %v2185 = vpop.f32.mrb[0].mxu0
        %v2186 = vadd.f32 %v1561, %v2185
        %v2187 = vpop.f32.mrb[0].mxu0
        %2188 = vmatprep.mubr.bf16.mxu0 0
        %2189 = vmatmul.mubr.bf16.gmra.mrb[0].mxu0 %v1097
        %v2190 = vpop.f32.mrb[0].mxu0
        %v2191 = vadd.f32 %v1561, %v2190
        %v2192 = vpop.f32.mrb[0].mxu0
        %v2193 = vpop.f32.mrb[0].mxu0
        %v2194 = vadd.f32 %v1561, %v2193
        %v2195 = vpop.f32.mrb[0].mxu0
        %2196 = vmatprep.mubr.bf16.mxu0 0
        %2197 = vmatmul.mubr.bf16.gmra.mrb[0].mxu0 %v1098
        %v2198 = vpop.f32.mrb[0].mxu0
        %v2199 = vadd.f32 %v1561, %v2198
        %v2200 = vpop.f32.mrb[0].mxu0
        %v2201 = vpop.f32.mrb[0].mxu0
        %v2202 = vadd.f32 %v1561, %v2201
        %v2203 = vpop.f32.mrb[0].mxu0
        %2204 = vmatprep.mubr.bf16.mxu0 0
        %2205 = vmatmul.mubr.bf16.gmra.mrb[0].mxu0 %v1099
        %v2206 = vpop.f32.mrb[0].mxu0
        %v2207 = vadd.f32 %v1561, %v2206
        %v2208 = vpop.f32.mrb[0].mxu0
        %v2209 = vpop.f32.mrb[0].mxu0
        %v2210 = vadd.f32 %v1561, %v2209
        %v2211 = vpop.f32.mrb[0].mxu0
        %2212 = vmatprep.mubr.bf16.mxu0 0
        %2213 = vmatmul.mubr.bf16.gmra.mrb[0].mxu0 %v1100
        %v2214 = vpop.f32.mrb[0].mxu0
        %v2215 = vadd.f32 %v1561, %v2214
        %v2216 = vpop.f32.mrb[0].mxu0
        %v2217 = vpop.f32.mrb[0].mxu0
        %v2218 = vadd.f32 %v1561, %v2217
        %v2219 = vpop.f32.mrb[0].mxu0
        %2220 = vmatprep.mubr.bf16.mxu0 0
        %2221 = vmatmul.mubr.bf16.gmra.mrb[0].mxu0 %v1101
        %v2222 = vpop.f32.mrb[0].mxu0
        %v2223 = vadd.f32 %v1561, %v2222
        %v2224 = vpop.f32.mrb[0].mxu0
        %v2225 = vpop.f32.mrb[0].mxu0
        %v2226 = vadd.f32 %v1561, %v2225
        %v2227 = vpop.f32.mrb[0].mxu0
        %2228 = vdwg.mxu0
        %v2230 = vcombine.high %v1430, %v1430
        %v2232 = vunpack.c.l.s4 1966171168
        %v2233 = vunpack.c.0.s8 %v2232
        %v2234 = vlaneseq
        %v2235 = vshrl.u32 %v2234, 7
        %v2236 = vsub.s32 %v2233, %v2235
        %v2237 = vrot.slane %v1430, %v2236
        %v2239 = vunpack.c.l.s4 1966171168
        %v2240 = vunpack.c.0.s8 %v2239
        %v2241 = vlaneseq
        %v2242 = vshrl.u32 %v2241, 7
        %v2243 = vsub.s32 %v2240, %v2242
        %v2244 = vrot.slane %v2230, %v2243
        %v2245 = vcombine.high %v2237, %v2237
        %v2246 = vcombine.high %v2244, %v2244
        %v2248 = vunpack.c.l.s4 1966171168
        %v2249 = vunpack.c.0.s8 %v2248
        %v2250 = vlaneseq
        %v2251 = vshrl.u32 %v2250, 7
        %v2252 = vsub.s32 %v2249, %v2251
        %v2253 = vrot.slane %v2237, %v2252
        %v2255 = vunpack.c.l.s4 1966171168
        %v2256 = vunpack.c.0.s8 %v2255
        %v2257 = vlaneseq
        %v2258 = vshrl.u32 %v2257, 7
        %v2259 = vsub.s32 %v2256, %v2258
        %v2260 = vrot.slane %v2244, %v2259
        %v2262 = vunpack.c.l.s4 1966171168
        %v2263 = vunpack.c.0.s8 %v2262
        %v2264 = vlaneseq
        %v2265 = vshrl.u32 %v2264, 7
        %v2266 = vsub.s32 %v2263, %v2265
        %v2267 = vrot.slane %v2245, %v2266
        %v2269 = vunpack.c.l.s4 1966171168
        %v2270 = vunpack.c.0.s8 %v2269
        %v2271 = vlaneseq
        %v2272 = vshrl.u32 %v2271, 7
        %v2273 = vsub.s32 %v2270, %v2272
        %v2274 = vrot.slane %v2246, %v2273
        %v2275 = vcombine.high %v2253, %v2253
        %v2276 = vcombine.high %v2260, %v2260
        %v2277 = vcombine.high %v2267, %v2267
        %v2278 = vcombine.high %v2274, %v2274
        %v2279 = vlaneseq
        %v2280 = vshrl.u32 %v2279, 7
        %v2281 = vsub.s32 0, %v2280
        %v2282 = vrot.slane %v2253, %v2281
        %v2283 = vlaneseq
        %v2284 = vshrl.u32 %v2283, 7
        %v2285 = vsub.s32 0, %v2284
        %v2286 = vrot.slane %v2267, %v2285
        %v2287 = vlaneseq
        %v2288 = vshrl.u32 %v2287, 7
        %v2289 = vsub.s32 0, %v2288
        %v2290 = vrot.slane %v2275, %v2289
        %v2291 = vlaneseq
        %v2292 = vshrl.u32 %v2291, 7
        %v2293 = vsub.s32 0, %v2292
        %v2294 = vrot.slane %v2277, %v2293
        %v2295 = vlaneseq
        %v2296 = vshrl.u32 %v2295, 7
        %v2297 = vsub.s32 0, %v2296
        %v2298 = vrot.slane %v2260, %v2297
        %v2299 = vlaneseq
        %v2300 = vshrl.u32 %v2299, 7
        %v2301 = vsub.s32 0, %v2300
        %v2302 = vrot.slane %v2274, %v2301
        %v2303 = vlaneseq
        %v2304 = vshrl.u32 %v2303, 7
        %v2305 = vsub.s32 0, %v2304
        %v2306 = vrot.slane %v2276, %v2305
        %v2307 = vlaneseq
        %v2308 = vshrl.u32 %v2307, 7
        %v2309 = vsub.s32 0, %v2308
        %v2310 = vrot.slane %v2278, %v2309
        %v2319 = vmul.f32 %v2282, %v1686
        %v2320 = vmul.f32 %v2282, %v1689
        %v2321 = vmul.f32 %v2282, %v1694
        %v2322 = vmul.f32 %v2282, %v1697
        %v2323 = vmul.f32 %v2282, %v1702
        %v2324 = vmul.f32 %v2282, %v1705
        %v2325 = vmul.f32 %v2282, %v1710
        %v2326 = vmul.f32 %v2282, %v1713
        %v2327 = vmul.f32 %v2286, %v1718
        %v2328 = vmul.f32 %v2286, %v1721
        %v2329 = vmul.f32 %v2286, %v1726
        %v2330 = vmul.f32 %v2286, %v1729
        %v2331 = vmul.f32 %v2286, %v1734
        %v2332 = vmul.f32 %v2286, %v1737
        %v2333 = vmul.f32 %v2286, %v1742
        %v2334 = vmul.f32 %v2286, %v1745
        %v2335 = vmul.f32 %v2290, %v1750
        %v2336 = vmul.f32 %v2290, %v1753
        %v2337 = vmul.f32 %v2290, %v1758
        %v2338 = vmul.f32 %v2290, %v1761
        %v2339 = vmul.f32 %v2290, %v1766
        %v2340 = vmul.f32 %v2290, %v1769
        %v2341 = vmul.f32 %v2290, %v1774
        %v2342 = vmul.f32 %v2290, %v1777
        %v2343 = vmul.f32 %v2294, %v1782
        %v2344 = vmul.f32 %v2294, %v1785
        %v2345 = vmul.f32 %v2294, %v1790
        %v2346 = vmul.f32 %v2294, %v1793
        %v2347 = vmul.f32 %v2294, %v1798
        %v2348 = vmul.f32 %v2294, %v1801
        %v2349 = vmul.f32 %v2294, %v1806
        %v2350 = vmul.f32 %v2294, %v1809
        %v2351 = vmul.f32 %v2298, %v1814
        %v2352 = vmul.f32 %v2298, %v1817
        %v2353 = vmul.f32 %v2298, %v1822
        %v2354 = vmul.f32 %v2298, %v1825
        %v2355 = vmul.f32 %v2298, %v1830
        %v2356 = vmul.f32 %v2298, %v1833
        %v2357 = vmul.f32 %v2298, %v1838
        %v2358 = vmul.f32 %v2298, %v1841
        %v2359 = vmul.f32 %v2302, %v1846
        %v2360 = vmul.f32 %v2302, %v1849
        %v2361 = vmul.f32 %v2302, %v1854
        %v2362 = vmul.f32 %v2302, %v1857
        %v2363 = vmul.f32 %v2302, %v1862
        %v2364 = vmul.f32 %v2302, %v1865
        %v2365 = vmul.f32 %v2302, %v1870
        %v2366 = vmul.f32 %v2302, %v1873
        %v2367 = vmul.f32 %v2306, %v1878
        %v2368 = vmul.f32 %v2306, %v1881
        %v2369 = vmul.f32 %v2306, %v1886
        %v2370 = vmul.f32 %v2306, %v1889
        %v2371 = vmul.f32 %v2306, %v1894
        %v2372 = vmul.f32 %v2306, %v1897
        %v2373 = vmul.f32 %v2306, %v1902
        %v2374 = vmul.f32 %v2306, %v1905
        %v2375 = vmul.f32 %v2310, %v1910
        %v2376 = vmul.f32 %v2310, %v1913
        %v2377 = vmul.f32 %v2310, %v1918
        %v2378 = vmul.f32 %v2310, %v1921
        %v2379 = vmul.f32 %v2310, %v1926
        %v2380 = vmul.f32 %v2310, %v1929
        %v2381 = vmul.f32 %v2310, %v1934
        %v2382 = vmul.f32 %v2310, %v1937
        %v2383 = vpack.c.bf16 %v2320, %v2319
        %v2384 = vpack.c.bf16 %v2322, %v2321
        %v2385 = vpack.c.bf16 %v2324, %v2323
        %v2386 = vpack.c.bf16 %v2326, %v2325
        %v2387 = vpack.c.bf16 %v2328, %v2327
        %v2388 = vpack.c.bf16 %v2330, %v2329
        %v2389 = vpack.c.bf16 %v2332, %v2331
        %v2390 = vpack.c.bf16 %v2334, %v2333
        %v2391 = vpack.c.bf16 %v2336, %v2335
        %v2392 = vpack.c.bf16 %v2338, %v2337
        %v2393 = vpack.c.bf16 %v2340, %v2339
        %v2394 = vpack.c.bf16 %v2342, %v2341
        %v2395 = vpack.c.bf16 %v2344, %v2343
        %v2396 = vpack.c.bf16 %v2346, %v2345
        %v2397 = vpack.c.bf16 %v2348, %v2347
        %v2398 = vpack.c.bf16 %v2350, %v2349
        %v2399 = vpack.c.bf16 %v2352, %v2351
        %v2400 = vpack.c.bf16 %v2354, %v2353
        %v2401 = vpack.c.bf16 %v2356, %v2355
        %v2402 = vpack.c.bf16 %v2358, %v2357
        %v2403 = vpack.c.bf16 %v2360, %v2359
        %v2404 = vpack.c.bf16 %v2362, %v2361
        %v2405 = vpack.c.bf16 %v2364, %v2363
        %v2406 = vpack.c.bf16 %v2366, %v2365
        %v2407 = vpack.c.bf16 %v2368, %v2367
        %v2408 = vpack.c.bf16 %v2370, %v2369
        %v2409 = vpack.c.bf16 %v2372, %v2371
        %v2410 = vpack.c.bf16 %v2374, %v2373
        %v2411 = vpack.c.bf16 %v2376, %v2375
        %v2412 = vpack.c.bf16 %v2378, %v2377
        %v2413 = vpack.c.bf16 %v2380, %v2379
        %v2414 = vpack.c.bf16 %v2382, %v2381
        %2415 = vmatprep.subr.bf16.mxu0 0
        %2416 = vmatpush1.bf16.msra.mxu0 %v1212
        %2417 = vmatprep.subr.bf16.mxu0 0
        %2418 = vmatpush1.bf16.msra.mxu0 %v1213
        %2419 = vmatprep.subr.bf16.mxu0 0
        %2420 = vmatpush1.bf16.msra.mxu0 %v1214
        %2421 = vmatprep.subr.bf16.mxu0 0
        %2422 = vmatpush1.bf16.msra.mxu0 %v1215
        %2423 = vmatprep.subr.bf16.mxu0 0
        %2424 = vmatpush1.bf16.msra.mxu0 %v1216
        %2425 = vmatprep.subr.bf16.mxu0 0
        %2426 = vmatpush1.bf16.msra.mxu0 %v1217
        %2427 = vmatprep.subr.bf16.mxu0 0
        %2428 = vmatpush1.bf16.msra.mxu0 %v1218
        %2429 = vmatprep.subr.bf16.mxu0 0
        %2430 = vmatpush1.bf16.msra.mxu0 %v1219
        %2431 = vmatprep.subr.bf16.mxu0 0
        %2432 = vmatpush1.bf16.msra.mxu0 0
        %2433 = vmatprep.subr.bf16.mxu0 0
        %2434 = vmatpush1.bf16.msra.mxu0 0
        %2435 = vmatprep.subr.bf16.mxu0 0
        %2436 = vmatpush1.bf16.msra.mxu0 0
        %2437 = vmatprep.subr.bf16.mxu0 0
        %2438 = vmatpush1.bf16.msra.mxu0 0
        %2439 = vmatprep.subr.bf16.mxu0 0
        %2440 = vmatpush1.bf16.msra.mxu0 0
        %2441 = vmatprep.subr.bf16.mxu0 0
        %2442 = vmatpush1.bf16.msra.mxu0 0
        %2443 = vmatprep.subr.bf16.mxu0 0
        %2444 = vmatpush1.bf16.msra.mxu0 0
        %2445 = vmatprep.subr.bf16.mxu0 0
        %2446 = vmatpush1.bf16.msra.mxu0 0
        %2447 = vmatprep.mubr.bf16.mxu0 0
        %2448 = vmatmul.mubr.bf16.gmra.mrb[0].mxu0 %v2383
        %v2449 = vpop.f32.mrb[0].mxu0
        %v2450 = vadd.f32 0.0, %v2449
        %v2451 = vpop.f32.mrb[0].mxu0
        %v2452 = vpop.f32.mrb[0].mxu0
        %v2453 = vadd.f32 0.0, %v2452
        %v2454 = vpop.f32.mrb[0].mxu0
        %2455 = vmatprep.mubr.bf16.mxu0 0
        %2456 = vmatmul.mubr.bf16.gmra.mrb[0].mxu0 %v2384
        %v2457 = vpop.f32.mrb[0].mxu0
        %v2458 = vadd.f32 0.0, %v2457
        %v2459 = vpop.f32.mrb[0].mxu0
        %v2460 = vpop.f32.mrb[0].mxu0
        %v2461 = vadd.f32 0.0, %v2460
        %v2462 = vpop.f32.mrb[0].mxu0
        %2463 = vmatprep.mubr.bf16.mxu0 0
        %2464 = vmatmul.mubr.bf16.gmra.mrb[0].mxu0 %v2385
        %v2465 = vpop.f32.mrb[0].mxu0
        %v2466 = vadd.f32 0.0, %v2465
        %v2467 = vpop.f32.mrb[0].mxu0
        %v2468 = vpop.f32.mrb[0].mxu0
        %v2469 = vadd.f32 0.0, %v2468
        %v2470 = vpop.f32.mrb[0].mxu0
        %2471 = vmatprep.mubr.bf16.mxu0 0
        %2472 = vmatmul.mubr.bf16.gmra.mrb[0].mxu0 %v2386
        %v2473 = vpop.f32.mrb[0].mxu0
        %v2474 = vadd.f32 0.0, %v2473
        %v2475 = vpop.f32.mrb[0].mxu0
        %v2476 = vpop.f32.mrb[0].mxu0
        %v2477 = vadd.f32 0.0, %v2476
        %v2478 = vpop.f32.mrb[0].mxu0
        %2479 = vmatprep.mubr.bf16.mxu0 0
        %2480 = vmatmul.mubr.bf16.gmra.mrb[0].mxu0 %v2387
        %v2481 = vpop.f32.mrb[0].mxu0
        %v2482 = vadd.f32 0.0, %v2481
        %v2483 = vpop.f32.mrb[0].mxu0
        %v2484 = vpop.f32.mrb[0].mxu0
        %v2485 = vadd.f32 0.0, %v2484
        %v2486 = vpop.f32.mrb[0].mxu0
        %2487 = vmatprep.mubr.bf16.mxu0 0
        %2488 = vmatmul.mubr.bf16.gmra.mrb[0].mxu0 %v2388
        %v2489 = vpop.f32.mrb[0].mxu0
        %v2490 = vadd.f32 0.0, %v2489
        %v2491 = vpop.f32.mrb[0].mxu0
        %v2492 = vpop.f32.mrb[0].mxu0
        %v2493 = vadd.f32 0.0, %v2492
        %v2494 = vpop.f32.mrb[0].mxu0
        %2495 = vmatprep.mubr.bf16.mxu0 0
        %2496 = vmatmul.mubr.bf16.gmra.mrb[0].mxu0 %v2389
        %v2497 = vpop.f32.mrb[0].mxu0
        %v2498 = vadd.f32 0.0, %v2497
        %v2499 = vpop.f32.mrb[0].mxu0
        %v2500 = vpop.f32.mrb[0].mxu0
        %v2501 = vadd.f32 0.0, %v2500
        %v2502 = vpop.f32.mrb[0].mxu0
        %2503 = vmatprep.mubr.bf16.mxu0 0
        %2504 = vmatmul.mubr.bf16.gmra.mrb[0].mxu0 %v2390
        %v2505 = vpop.f32.mrb[0].mxu0
        %v2506 = vadd.f32 0.0, %v2505
        %v2507 = vpop.f32.mrb[0].mxu0
        %v2508 = vpop.f32.mrb[0].mxu0
        %v2509 = vadd.f32 0.0, %v2508
        %v2510 = vpop.f32.mrb[0].mxu0
        %2511 = vmatprep.mubr.bf16.mxu0 0
        %2512 = vmatmul.mubr.bf16.gmra.mrb[0].mxu0 %v2391
        %v2513 = vpop.f32.mrb[0].mxu0
        %v2514 = vadd.f32 0.0, %v2513
        %v2515 = vpop.f32.mrb[0].mxu0
        %v2516 = vpop.f32.mrb[0].mxu0
        %v2517 = vadd.f32 0.0, %v2516
        %v2518 = vpop.f32.mrb[0].mxu0
        %2519 = vmatprep.mubr.bf16.mxu0 0
        %2520 = vmatmul.mubr.bf16.gmra.mrb[0].mxu0 %v2392
        %v2521 = vpop.f32.mrb[0].mxu0
        %v2522 = vadd.f32 0.0, %v2521
        %v2523 = vpop.f32.mrb[0].mxu0
        %v2524 = vpop.f32.mrb[0].mxu0
        %v2525 = vadd.f32 0.0, %v2524
        %v2526 = vpop.f32.mrb[0].mxu0
        %2527 = vmatprep.mubr.bf16.mxu0 0
        %2528 = vmatmul.mubr.bf16.gmra.mrb[0].mxu0 %v2393
        %v2529 = vpop.f32.mrb[0].mxu0
        %v2530 = vadd.f32 0.0, %v2529
        %v2531 = vpop.f32.mrb[0].mxu0
        %v2532 = vpop.f32.mrb[0].mxu0
        %v2533 = vadd.f32 0.0, %v2532
        %v2534 = vpop.f32.mrb[0].mxu0
        %2535 = vmatprep.mubr.bf16.mxu0 0
        %2536 = vmatmul.mubr.bf16.gmra.mrb[0].mxu0 %v2394
        %v2537 = vpop.f32.mrb[0].mxu0
        %v2538 = vadd.f32 0.0, %v2537
        %v2539 = vpop.f32.mrb[0].mxu0
        %v2540 = vpop.f32.mrb[0].mxu0
        %v2541 = vadd.f32 0.0, %v2540
        %v2542 = vpop.f32.mrb[0].mxu0
        %2543 = vmatprep.mubr.bf16.mxu0 0
        %2544 = vmatmul.mubr.bf16.gmra.mrb[0].mxu0 %v2395
        %v2545 = vpop.f32.mrb[0].mxu0
        %v2546 = vadd.f32 0.0, %v2545
        %v2547 = vpop.f32.mrb[0].mxu0
        %v2548 = vpop.f32.mrb[0].mxu0
        %v2549 = vadd.f32 0.0, %v2548
        %v2550 = vpop.f32.mrb[0].mxu0
        %2551 = vmatprep.mubr.bf16.mxu0 0
        %2552 = vmatmul.mubr.bf16.gmra.mrb[0].mxu0 %v2396
        %v2553 = vpop.f32.mrb[0].mxu0
        %v2554 = vadd.f32 0.0, %v2553
        %v2555 = vpop.f32.mrb[0].mxu0
        %v2556 = vpop.f32.mrb[0].mxu0
        %v2557 = vadd.f32 0.0, %v2556
        %v2558 = vpop.f32.mrb[0].mxu0
        %2559 = vmatprep.mubr.bf16.mxu0 0
        %2560 = vmatmul.mubr.bf16.gmra.mrb[0].mxu0 %v2397
        %v2561 = vpop.f32.mrb[0].mxu0
        %v2562 = vadd.f32 0.0, %v2561
        %v2563 = vpop.f32.mrb[0].mxu0
        %v2564 = vpop.f32.mrb[0].mxu0
        %v2565 = vadd.f32 0.0, %v2564
        %v2566 = vpop.f32.mrb[0].mxu0
        %2567 = vmatprep.mubr.bf16.mxu0 0
        %2568 = vmatmul.mubr.bf16.gmra.mrb[0].mxu0 %v2398
        %v2569 = vpop.f32.mrb[0].mxu0
        %v2570 = vadd.f32 0.0, %v2569
        %v2571 = vpop.f32.mrb[0].mxu0
        %v2572 = vpop.f32.mrb[0].mxu0
        %v2573 = vadd.f32 0.0, %v2572
        %v2574 = vpop.f32.mrb[0].mxu0
        %2575 = vmatprep.mubr.bf16.mxu0 0
        %2576 = vmatmul.mubr.bf16.gmra.mrb[0].mxu0 %v2399
        %v2577 = vpop.f32.mrb[0].mxu0
        %v2578 = vadd.f32 0.0, %v2577
        %v2579 = vpop.f32.mrb[0].mxu0
        %v2580 = vpop.f32.mrb[0].mxu0
        %v2581 = vadd.f32 0.0, %v2580
        %v2582 = vpop.f32.mrb[0].mxu0
        %2583 = vmatprep.mubr.bf16.mxu0 0
        %2584 = vmatmul.mubr.bf16.gmra.mrb[0].mxu0 %v2400
        %v2585 = vpop.f32.mrb[0].mxu0
        %v2586 = vadd.f32 0.0, %v2585
        %v2587 = vpop.f32.mrb[0].mxu0
        %v2588 = vpop.f32.mrb[0].mxu0
        %v2589 = vadd.f32 0.0, %v2588
        %v2590 = vpop.f32.mrb[0].mxu0
        %2591 = vmatprep.mubr.bf16.mxu0 0
        %2592 = vmatmul.mubr.bf16.gmra.mrb[0].mxu0 %v2401
        %v2593 = vpop.f32.mrb[0].mxu0
        %v2594 = vadd.f32 0.0, %v2593
        %v2595 = vpop.f32.mrb[0].mxu0
        %v2596 = vpop.f32.mrb[0].mxu0
        %v2597 = vadd.f32 0.0, %v2596
        %v2598 = vpop.f32.mrb[0].mxu0
        %2599 = vmatprep.mubr.bf16.mxu0 0
        %2600 = vmatmul.mubr.bf16.gmra.mrb[0].mxu0 %v2402
        %v2601 = vpop.f32.mrb[0].mxu0
        %v2602 = vadd.f32 0.0, %v2601
        %v2603 = vpop.f32.mrb[0].mxu0
        %v2604 = vpop.f32.mrb[0].mxu0
        %v2605 = vadd.f32 0.0, %v2604
        %v2606 = vpop.f32.mrb[0].mxu0
        %2607 = vmatprep.mubr.bf16.mxu0 0
        %2608 = vmatmul.mubr.bf16.gmra.mrb[0].mxu0 %v2403
        %v2609 = vpop.f32.mrb[0].mxu0
        %v2610 = vadd.f32 0.0, %v2609
        %v2611 = vpop.f32.mrb[0].mxu0
        %v2612 = vpop.f32.mrb[0].mxu0
        %v2613 = vadd.f32 0.0, %v2612
        %v2614 = vpop.f32.mrb[0].mxu0
        %2615 = vmatprep.mubr.bf16.mxu0 0
        %2616 = vmatmul.mubr.bf16.gmra.mrb[0].mxu0 %v2404
        %v2617 = vpop.f32.mrb[0].mxu0
        %v2618 = vadd.f32 0.0, %v2617
        %v2619 = vpop.f32.mrb[0].mxu0
        %v2620 = vpop.f32.mrb[0].mxu0
        %v2621 = vadd.f32 0.0, %v2620
        %v2622 = vpop.f32.mrb[0].mxu0
        %2623 = vmatprep.mubr.bf16.mxu0 0
        %2624 = vmatmul.mubr.bf16.gmra.mrb[0].mxu0 %v2405
        %v2625 = vpop.f32.mrb[0].mxu0
        %v2626 = vadd.f32 0.0, %v2625
        %v2627 = vpop.f32.mrb[0].mxu0
        %v2628 = vpop.f32.mrb[0].mxu0
        %v2629 = vadd.f32 0.0, %v2628
        %v2630 = vpop.f32.mrb[0].mxu0
        %2631 = vmatprep.mubr.bf16.mxu0 0
        %2632 = vmatmul.mubr.bf16.gmra.mrb[0].mxu0 %v2406
        %v2633 = vpop.f32.mrb[0].mxu0
        %v2634 = vadd.f32 0.0, %v2633
        %v2635 = vpop.f32.mrb[0].mxu0
        %v2636 = vpop.f32.mrb[0].mxu0
        %v2637 = vadd.f32 0.0, %v2636
        %v2638 = vpop.f32.mrb[0].mxu0
        %2639 = vmatprep.mubr.bf16.mxu0 0
        %2640 = vmatmul.mubr.bf16.gmra.mrb[0].mxu0 %v2407
        %v2641 = vpop.f32.mrb[0].mxu0
        %v2642 = vadd.f32 0.0, %v2641
        %v2643 = vpop.f32.mrb[0].mxu0
        %v2644 = vpop.f32.mrb[0].mxu0
        %v2645 = vadd.f32 0.0, %v2644
        %v2646 = vpop.f32.mrb[0].mxu0
        %2647 = vmatprep.mubr.bf16.mxu0 0
        %2648 = vmatmul.mubr.bf16.gmra.mrb[0].mxu0 %v2408
        %v2649 = vpop.f32.mrb[0].mxu0
        %v2650 = vadd.f32 0.0, %v2649
        %v2651 = vpop.f32.mrb[0].mxu0
        %v2652 = vpop.f32.mrb[0].mxu0
        %v2653 = vadd.f32 0.0, %v2652
        %v2654 = vpop.f32.mrb[0].mxu0
        %2655 = vmatprep.mubr.bf16.mxu0 0
        %2656 = vmatmul.mubr.bf16.gmra.mrb[0].mxu0 %v2409
        %v2657 = vpop.f32.mrb[0].mxu0
        %v2658 = vadd.f32 0.0, %v2657
        %v2659 = vpop.f32.mrb[0].mxu0
        %v2660 = vpop.f32.mrb[0].mxu0
        %v2661 = vadd.f32 0.0, %v2660
        %v2662 = vpop.f32.mrb[0].mxu0
        %2663 = vmatprep.mubr.bf16.mxu0 0
        %2664 = vmatmul.mubr.bf16.gmra.mrb[0].mxu0 %v2410
        %v2665 = vpop.f32.mrb[0].mxu0
        %v2666 = vadd.f32 0.0, %v2665
        %v2667 = vpop.f32.mrb[0].mxu0
        %v2668 = vpop.f32.mrb[0].mxu0
        %v2669 = vadd.f32 0.0, %v2668
        %v2670 = vpop.f32.mrb[0].mxu0
        %2671 = vmatprep.mubr.bf16.mxu0 0
        %2672 = vmatmul.mubr.bf16.gmra.mrb[0].mxu0 %v2411
        %v2673 = vpop.f32.mrb[0].mxu0
        %v2674 = vadd.f32 0.0, %v2673
        %v2675 = vpop.f32.mrb[0].mxu0
        %v2676 = vpop.f32.mrb[0].mxu0
        %v2677 = vadd.f32 0.0, %v2676
        %v2678 = vpop.f32.mrb[0].mxu0
        %2679 = vmatprep.mubr.bf16.mxu0 0
        %2680 = vmatmul.mubr.bf16.gmra.mrb[0].mxu0 %v2412
        %v2681 = vpop.f32.mrb[0].mxu0
        %v2682 = vadd.f32 0.0, %v2681
        %v2683 = vpop.f32.mrb[0].mxu0
        %v2684 = vpop.f32.mrb[0].mxu0
        %v2685 = vadd.f32 0.0, %v2684
        %v2686 = vpop.f32.mrb[0].mxu0
        %2687 = vmatprep.mubr.bf16.mxu0 0
        %2688 = vmatmul.mubr.bf16.gmra.mrb[0].mxu0 %v2413
        %v2689 = vpop.f32.mrb[0].mxu0
        %v2690 = vadd.f32 0.0, %v2689
        %v2691 = vpop.f32.mrb[0].mxu0
        %v2692 = vpop.f32.mrb[0].mxu0
        %v2693 = vadd.f32 0.0, %v2692
        %v2694 = vpop.f32.mrb[0].mxu0
        %2695 = vmatprep.mubr.bf16.mxu0 0
        %2696 = vmatmul.mubr.bf16.gmra.mrb[0].mxu0 %v2414
        %v2697 = vpop.f32.mrb[0].mxu0
        %v2698 = vadd.f32 0.0, %v2697
        %v2699 = vpop.f32.mrb[0].mxu0
        %v2700 = vpop.f32.mrb[0].mxu0
        %v2701 = vadd.f32 0.0, %v2700
        %v2702 = vpop.f32.mrb[0].mxu0
        %2703 = vdwg.mxu0
        %v2704 = vmul.f32 %v1430, %v1536
        %v2705 = vpack.c.bf16 %v2704, %v2704
        %2706 = vmatprep.subr.bf16.mxu0 0
        %2707 = vmatpush1.bf16.msra.mxu0 %v1212
        %2708 = vmatprep.subr.bf16.mxu0 0
        %2709 = vmatpush1.bf16.msra.mxu0 %v1213
        %2710 = vmatprep.subr.bf16.mxu0 0
        %2711 = vmatpush1.bf16.msra.mxu0 %v1214
        %2712 = vmatprep.subr.bf16.mxu0 0
        %2713 = vmatpush1.bf16.msra.mxu0 %v1215
        %2714 = vmatprep.subr.bf16.mxu0 0
        %2715 = vmatpush1.bf16.msra.mxu0 %v1216
        %2716 = vmatprep.subr.bf16.mxu0 0
        %2717 = vmatpush1.bf16.msra.mxu0 %v1217
        %2718 = vmatprep.subr.bf16.mxu0 0
        %2719 = vmatpush1.bf16.msra.mxu0 %v1218
        %2720 = vmatprep.subr.bf16.mxu0 0
        %2721 = vmatpush1.bf16.msra.mxu0 %v1219
        %2722 = vmatprep.subr.bf16.mxu0 0
        %2723 = vmatpush1.bf16.msra.mxu0 0
        %2724 = vmatprep.subr.bf16.mxu0 0
        %2725 = vmatpush1.bf16.msra.mxu0 0
        %2726 = vmatprep.subr.bf16.mxu0 0
        %2727 = vmatpush1.bf16.msra.mxu0 0
        %2728 = vmatprep.subr.bf16.mxu0 0
        %2729 = vmatpush1.bf16.msra.mxu0 0
        %2730 = vmatprep.subr.bf16.mxu0 0
        %2731 = vmatpush1.bf16.msra.mxu0 0
        %2732 = vmatprep.subr.bf16.mxu0 0
        %2733 = vmatpush1.bf16.msra.mxu0 0
        %2734 = vmatprep.subr.bf16.mxu0 0
        %2735 = vmatpush1.bf16.msra.mxu0 0
        %2736 = vmatprep.subr.bf16.mxu0 0
        %2737 = vmatpush1.bf16.msra.mxu0 0
        %2738 = vmatprep.mubr.bf16.mxu0 0
        %2739 = vmatmul.mubr.bf16.gmra.mrb[0].mxu0 %v2705
        %v2740 = vpop.f32.mrb[0].mxu0
        %v2741 = vadd.f32 0.0, %v2740
        %v2742 = vpop.f32.mrb[0].mxu0
        %v2743 = vpop.f32.mrb[0].mxu0
        %v2744 = vpop.f32.mrb[0].mxu0
        %2745 = vdwg.mxu0
        %vm2746 = vcmask 31744
        %v2747 = vsel %vm2746, %v2450, -inf
        %v2748 = vsel %vm2746, %v2453, -inf
        %v2749 = vmax.f32 %v2747, %v2748
        %v2750 = vsel %vm2746, %v2458, -inf
        %v2751 = vmax.f32 %v2749, %v2750
        %v2752 = vsel %vm2746, %v2461, -inf
        %v2753 = vmax.f32 %v2751, %v2752
        %v2754 = vsel %vm2746, %v2466, -inf
        %v2755 = vmax.f32 %v2753, %v2754
        %v2756 = vsel %vm2746, %v2469, -inf
        %v2757 = vmax.f32 %v2755, %v2756
        %v2758 = vsel %vm2746, %v2474, -inf
        %v2759 = vmax.f32 %v2757, %v2758
        %v2760 = vsel %vm2746, %v2477, -inf
        %v2761 = vmax.f32 %v2759, %v2760
        %v2762 = vrot.slane %v2761, 4
        %v2763 = vmax.f32 %v2761, %v2762
        %v2764 = vrot.slane %v2763, 2
        %v2765 = vmax.f32 %v2763, %v2764
        %v2766 = vrot.slane %v2765, 1
        %v2767 = vmax.f32 %v2765, %v2766
        %v2768 = vsel %vm2746, %v2482, -inf
        %v2769 = vsel %vm2746, %v2485, -inf
        %v2770 = vmax.f32 %v2768, %v2769
        %v2771 = vsel %vm2746, %v2490, -inf
        %v2772 = vmax.f32 %v2770, %v2771
        %v2773 = vsel %vm2746, %v2493, -inf
        %v2774 = vmax.f32 %v2772, %v2773
        %v2775 = vsel %vm2746, %v2498, -inf
        %v2776 = vmax.f32 %v2774, %v2775
        %v2777 = vsel %vm2746, %v2501, -inf
        %v2778 = vmax.f32 %v2776, %v2777
        %v2779 = vsel %vm2746, %v2506, -inf
        %v2780 = vmax.f32 %v2778, %v2779
        %v2781 = vsel %vm2746, %v2509, -inf
        %v2782 = vmax.f32 %v2780, %v2781
        %v2783 = vrot.slane %v2782, 4
        %v2784 = vmax.f32 %v2782, %v2783
        %v2785 = vrot.slane %v2784, 2
        %v2786 = vmax.f32 %v2784, %v2785
        %v2787 = vrot.slane %v2786, 1
        %v2788 = vmax.f32 %v2786, %v2787
        %v2789 = vsel %vm2746, %v2514, -inf
        %v2790 = vsel %vm2746, %v2517, -inf
        %v2791 = vmax.f32 %v2789, %v2790
        %v2792 = vsel %vm2746, %v2522, -inf
        %v2793 = vmax.f32 %v2791, %v2792
        %v2794 = vsel %vm2746, %v2525, -inf
        %v2795 = vmax.f32 %v2793, %v2794
        %v2796 = vsel %vm2746, %v2530, -inf
        %v2797 = vmax.f32 %v2795, %v2796
        %v2798 = vsel %vm2746, %v2533, -inf
        %v2799 = vmax.f32 %v2797, %v2798
        %v2800 = vsel %vm2746, %v2538, -inf
        %v2801 = vmax.f32 %v2799, %v2800
        %v2802 = vsel %vm2746, %v2541, -inf
        %v2803 = vmax.f32 %v2801, %v2802
        %v2804 = vrot.slane %v2803, 4
        %v2805 = vmax.f32 %v2803, %v2804
        %v2806 = vrot.slane %v2805, 2
        %v2807 = vmax.f32 %v2805, %v2806
        %v2808 = vrot.slane %v2807, 1
        %v2809 = vmax.f32 %v2807, %v2808
        %v2810 = vsel %vm2746, %v2546, -inf
        %v2811 = vsel %vm2746, %v2549, -inf
        %v2812 = vmax.f32 %v2810, %v2811
        %v2813 = vsel %vm2746, %v2554, -inf
        %v2814 = vmax.f32 %v2812, %v2813
        %v2815 = vsel %vm2746, %v2557, -inf
        %v2816 = vmax.f32 %v2814, %v2815
        %v2817 = vsel %vm2746, %v2562, -inf
        %v2818 = vmax.f32 %v2816, %v2817
        %v2819 = vsel %vm2746, %v2565, -inf
        %v2820 = vmax.f32 %v2818, %v2819
        %v2821 = vsel %vm2746, %v2570, -inf
        %v2822 = vmax.f32 %v2820, %v2821
        %v2823 = vsel %vm2746, %v2573, -inf
        %v2824 = vmax.f32 %v2822, %v2823
        %v2825 = vrot.slane %v2824, 4
        %v2826 = vmax.f32 %v2824, %v2825
        %v2827 = vrot.slane %v2826, 2
        %v2828 = vmax.f32 %v2826, %v2827
        %v2829 = vrot.slane %v2828, 1
        %v2830 = vmax.f32 %v2828, %v2829
        %v2831 = vsel %vm2746, %v2578, -inf
        %v2832 = vsel %vm2746, %v2581, -inf
        %v2833 = vmax.f32 %v2831, %v2832
        %v2834 = vsel %vm2746, %v2586, -inf
        %v2835 = vmax.f32 %v2833, %v2834
        %v2836 = vsel %vm2746, %v2589, -inf
        %v2837 = vmax.f32 %v2835, %v2836
        %v2838 = vsel %vm2746, %v2594, -inf
        %v2839 = vmax.f32 %v2837, %v2838
        %v2840 = vsel %vm2746, %v2597, -inf
        %v2841 = vmax.f32 %v2839, %v2840
        %v2842 = vsel %vm2746, %v2602, -inf
        %v2843 = vmax.f32 %v2841, %v2842
        %v2844 = vsel %vm2746, %v2605, -inf
        %v2845 = vmax.f32 %v2843, %v2844
        %v2846 = vrot.slane %v2845, 4
        %v2847 = vmax.f32 %v2845, %v2846
        %v2848 = vrot.slane %v2847, 2
        %v2849 = vmax.f32 %v2847, %v2848
        %v2850 = vrot.slane %v2849, 1
        %v2851 = vmax.f32 %v2849, %v2850
        %v2852 = vsel %vm2746, %v2610, -inf
        %v2853 = vsel %vm2746, %v2613, -inf
        %v2854 = vmax.f32 %v2852, %v2853
        %v2855 = vsel %vm2746, %v2618, -inf
        %v2856 = vmax.f32 %v2854, %v2855
        %v2857 = vsel %vm2746, %v2621, -inf
        %v2858 = vmax.f32 %v2856, %v2857
        %v2859 = vsel %vm2746, %v2626, -inf
        %v2860 = vmax.f32 %v2858, %v2859
        %v2861 = vsel %vm2746, %v2629, -inf
        %v2862 = vmax.f32 %v2860, %v2861
        %v2863 = vsel %vm2746, %v2634, -inf
        %v2864 = vmax.f32 %v2862, %v2863
        %v2865 = vsel %vm2746, %v2637, -inf
        %v2866 = vmax.f32 %v2864, %v2865
        %v2867 = vrot.slane %v2866, 4
        %v2868 = vmax.f32 %v2866, %v2867
        %v2869 = vrot.slane %v2868, 2
        %v2870 = vmax.f32 %v2868, %v2869
        %v2871 = vrot.slane %v2870, 1
        %v2872 = vmax.f32 %v2870, %v2871
        %v2873 = vsel %vm2746, %v2642, -inf
        %v2874 = vsel %vm2746, %v2645, -inf
        %v2875 = vmax.f32 %v2873, %v2874
        %v2876 = vsel %vm2746, %v2650, -inf
        %v2877 = vmax.f32 %v2875, %v2876
        %v2878 = vsel %vm2746, %v2653, -inf
        %v2879 = vmax.f32 %v2877, %v2878
        %v2880 = vsel %vm2746, %v2658, -inf
        %v2881 = vmax.f32 %v2879, %v2880
        %v2882 = vsel %vm2746, %v2661, -inf
        %v2883 = vmax.f32 %v2881, %v2882
        %v2884 = vsel %vm2746, %v2666, -inf
        %v2885 = vmax.f32 %v2883, %v2884
        %v2886 = vsel %vm2746, %v2669, -inf
        %v2887 = vmax.f32 %v2885, %v2886
        %v2888 = vrot.slane %v2887, 4
        %v2889 = vmax.f32 %v2887, %v2888
        %v2890 = vrot.slane %v2889, 2
        %v2891 = vmax.f32 %v2889, %v2890
        %v2892 = vrot.slane %v2891, 1
        %v2893 = vmax.f32 %v2891, %v2892
        %v2894 = vsel %vm2746, %v2674, -inf
        %v2895 = vsel %vm2746, %v2677, -inf
        %v2896 = vmax.f32 %v2894, %v2895
        %v2897 = vsel %vm2746, %v2682, -inf
        %v2898 = vmax.f32 %v2896, %v2897
        %v2899 = vsel %vm2746, %v2685, -inf
        %v2900 = vmax.f32 %v2898, %v2899
        %v2901 = vsel %vm2746, %v2690, -inf
        %v2902 = vmax.f32 %v2900, %v2901
        %v2903 = vsel %vm2746, %v2693, -inf
        %v2904 = vmax.f32 %v2902, %v2903
        %v2905 = vsel %vm2746, %v2698, -inf
        %v2906 = vmax.f32 %v2904, %v2905
        %v2907 = vsel %vm2746, %v2701, -inf
        %v2908 = vmax.f32 %v2906, %v2907
        %v2909 = vrot.slane %v2908, 4
        %v2910 = vmax.f32 %v2908, %v2909
        %v2911 = vrot.slane %v2910, 2
        %v2912 = vmax.f32 %v2910, %v2911
        %v2913 = vrot.slane %v2912, 1
        %v2914 = vmax.f32 %v2912, %v2913
        %v2916 = vrot.slane %v2741, 1
        %v2917 = vrot.slane %v2741, 2
        %v2918 = vrot.slane %v2741, 3
        %v2919 = vrot.slane %v2741, 4
        %v2920 = vrot.slane %v2741, 5
        %v2921 = vrot.slane %v2741, 6
        %v2922 = vrot.slane %v2741, 7
        %v2931 = vmax.f32 %v2767, %v2741
        %v2932 = vmax.f32 %v2788, %v2916
        %v2933 = vmax.f32 %v2809, %v2917
        %v2934 = vmax.f32 %v2830, %v2918
        %v2935 = vmax.f32 %v2851, %v2919
        %v2936 = vmax.f32 %v2872, %v2920
        %v2937 = vmax.f32 %v2893, %v2921
        %v2938 = vmax.f32 %v2914, %v2922
        %v2939 = vlaneseq
        %v2940 = vshrl.u32 %v2939, 7
        %v2941 = vsub.s32 0, %v2940
        %v2942 = vrot.slane %v2931, %v2941
        %v2943 = vlaneseq
        %v2944 = vshrl.u32 %v2943, 7
        %v2945 = vsub.s32 0, %v2944
        %v2946 = vrot.slane %v2932, %v2945
        %v2947 = vlaneseq
        %v2948 = vshrl.u32 %v2947, 7
        %v2949 = vsub.s32 0, %v2948
        %v2950 = vrot.slane %v2933, %v2949
        %v2951 = vlaneseq
        %v2952 = vshrl.u32 %v2951, 7
        %v2953 = vsub.s32 0, %v2952
        %v2954 = vrot.slane %v2934, %v2953
        %v2955 = vlaneseq
        %v2956 = vshrl.u32 %v2955, 7
        %v2957 = vsub.s32 0, %v2956
        %v2958 = vrot.slane %v2935, %v2957
        %v2959 = vlaneseq
        %v2960 = vshrl.u32 %v2959, 7
        %v2961 = vsub.s32 0, %v2960
        %v2962 = vrot.slane %v2936, %v2961
        %v2963 = vlaneseq
        %v2964 = vshrl.u32 %v2963, 7
        %v2965 = vsub.s32 0, %v2964
        %v2966 = vrot.slane %v2937, %v2965
        %v2967 = vlaneseq
        %v2968 = vshrl.u32 %v2967, 7
        %v2969 = vsub.s32 0, %v2968
        %v2970 = vrot.slane %v2938, %v2969
        %v2971 = vsub.f32 %v2450, %v2942
        %v2972 = vsub.f32 %v2453, %v2942
        %v2973 = vsub.f32 %v2458, %v2942
        %v2974 = vsub.f32 %v2461, %v2942
        %v2975 = vsub.f32 %v2466, %v2942
        %v2976 = vsub.f32 %v2469, %v2942
        %v2977 = vsub.f32 %v2474, %v2942
        %v2978 = vsub.f32 %v2477, %v2942
        %v2979 = vsub.f32 %v2482, %v2946
        %v2980 = vsub.f32 %v2485, %v2946
        %v2981 = vsub.f32 %v2490, %v2946
        %v2982 = vsub.f32 %v2493, %v2946
        %v2983 = vsub.f32 %v2498, %v2946
        %v2984 = vsub.f32 %v2501, %v2946
        %v2985 = vsub.f32 %v2506, %v2946
        %v2986 = vsub.f32 %v2509, %v2946
        %v2987 = vsub.f32 %v2514, %v2950
        %v2988 = vsub.f32 %v2517, %v2950
        %v2989 = vsub.f32 %v2522, %v2950
        %v2990 = vsub.f32 %v2525, %v2950
        %v2991 = vsub.f32 %v2530, %v2950
        %v2992 = vsub.f32 %v2533, %v2950
        %v2993 = vsub.f32 %v2538, %v2950
        %v2994 = vsub.f32 %v2541, %v2950
        %v2995 = vsub.f32 %v2546, %v2954
        %v2996 = vsub.f32 %v2549, %v2954
        %v2997 = vsub.f32 %v2554, %v2954
        %v2998 = vsub.f32 %v2557, %v2954
        %v2999 = vsub.f32 %v2562, %v2954
        %v3000 = vsub.f32 %v2565, %v2954
        %v3001 = vsub.f32 %v2570, %v2954
        %v3002 = vsub.f32 %v2573, %v2954
        %v3003 = vsub.f32 %v2578, %v2958
        %v3004 = vsub.f32 %v2581, %v2958
        %v3005 = vsub.f32 %v2586, %v2958
        %v3006 = vsub.f32 %v2589, %v2958
        %v3007 = vsub.f32 %v2594, %v2958
        %v3008 = vsub.f32 %v2597, %v2958
        %v3009 = vsub.f32 %v2602, %v2958
        %v3010 = vsub.f32 %v2605, %v2958
        %v3011 = vsub.f32 %v2610, %v2962
        %v3012 = vsub.f32 %v2613, %v2962
        %v3013 = vsub.f32 %v2618, %v2962
        %v3014 = vsub.f32 %v2621, %v2962
        %v3015 = vsub.f32 %v2626, %v2962
        %v3016 = vsub.f32 %v2629, %v2962
        %v3017 = vsub.f32 %v2634, %v2962
        %v3018 = vsub.f32 %v2637, %v2962
        %v3019 = vsub.f32 %v2642, %v2966
        %v3020 = vsub.f32 %v2645, %v2966
        %v3021 = vsub.f32 %v2650, %v2966
        %v3022 = vsub.f32 %v2653, %v2966
        %v3023 = vsub.f32 %v2658, %v2966
        %v3024 = vsub.f32 %v2661, %v2966
        %v3025 = vsub.f32 %v2666, %v2966
        %v3026 = vsub.f32 %v2669, %v2966
        %v3027 = vsub.f32 %v2674, %v2970
        %v3028 = vsub.f32 %v2677, %v2970
        %v3029 = vsub.f32 %v2682, %v2970
        %v3030 = vsub.f32 %v2685, %v2970
        %v3031 = vsub.f32 %v2690, %v2970
        %v3032 = vsub.f32 %v2693, %v2970
        %v3033 = vsub.f32 %v2698, %v2970
        %v3034 = vsub.f32 %v2701, %v2970
        %v3035 = vmul.f32 %v2971, 1.442695
        %v3036 = vpow.pop %v3035
        %v3037 = vmul.f32 %v2972, 1.442695
        %v3038 = vpow.pop %v3037
        %v3039 = vmul.f32 %v2973, 1.442695
        %v3040 = vpow.pop %v3039
        %v3041 = vmul.f32 %v2974, 1.442695
        %v3042 = vpow.pop %v3041
        %v3043 = vmul.f32 %v2975, 1.442695
        %v3044 = vpow.pop %v3043
        %v3045 = vmul.f32 %v2976, 1.442695
        %v3046 = vpow.pop %v3045
        %v3047 = vmul.f32 %v2977, 1.442695
        %v3048 = vpow.pop %v3047
        %v3049 = vmul.f32 %v2978, 1.442695
        %v3050 = vpow.pop %v3049
        %v3051 = vmul.f32 %v2979, 1.442695
        %v3052 = vpow.pop %v3051
        %v3053 = vmul.f32 %v2980, 1.442695
        %v3054 = vpow.pop %v3053
        %v3055 = vmul.f32 %v2981, 1.442695
        %v3056 = vpow.pop %v3055
        %v3057 = vmul.f32 %v2982, 1.442695
        %v3058 = vpow.pop %v3057
        %v3059 = vmul.f32 %v2983, 1.442695
        %v3060 = vpow.pop %v3059
        %v3061 = vmul.f32 %v2984, 1.442695
        %v3062 = vpow.pop %v3061
        %v3063 = vmul.f32 %v2985, 1.442695
        %v3064 = vpow.pop %v3063
        %v3065 = vmul.f32 %v2986, 1.442695
        %v3066 = vpow.pop %v3065
        %v3067 = vmul.f32 %v2987, 1.442695
        %v3068 = vpow.pop %v3067
        %v3069 = vmul.f32 %v2988, 1.442695
        %v3070 = vpow.pop %v3069
        %v3071 = vmul.f32 %v2989, 1.442695
        %v3072 = vpow.pop %v3071
        %v3073 = vmul.f32 %v2990, 1.442695
        %v3074 = vpow.pop %v3073
        %v3075 = vmul.f32 %v2991, 1.442695
        %v3076 = vpow.pop %v3075
        %v3077 = vmul.f32 %v2992, 1.442695
        %v3078 = vpow.pop %v3077
        %v3079 = vmul.f32 %v2993, 1.442695
        %v3080 = vpow.pop %v3079
        %v3081 = vmul.f32 %v2994, 1.442695
        %v3082 = vpow.pop %v3081
        %v3083 = vmul.f32 %v2995, 1.442695
        %v3084 = vpow.pop %v3083
        %v3085 = vmul.f32 %v2996, 1.442695
        %v3086 = vpow.pop %v3085
        %v3087 = vmul.f32 %v2997, 1.442695
        %v3088 = vpow.pop %v3087
        %v3089 = vmul.f32 %v2998, 1.442695
        %v3090 = vpow.pop %v3089
        %v3091 = vmul.f32 %v2999, 1.442695
        %v3092 = vpow.pop %v3091
        %v3093 = vmul.f32 %v3000, 1.442695
        %v3094 = vpow.pop %v3093
        %v3095 = vmul.f32 %v3001, 1.442695
        %v3096 = vpow.pop %v3095
        %v3097 = vmul.f32 %v3002, 1.442695
        %v3098 = vpow.pop %v3097
        %v3099 = vmul.f32 %v3003, 1.442695
        %v3100 = vpow.pop %v3099
        %v3101 = vmul.f32 %v3004, 1.442695
        %v3102 = vpow.pop %v3101
        %v3103 = vmul.f32 %v3005, 1.442695
        %v3104 = vpow.pop %v3103
        %v3105 = vmul.f32 %v3006, 1.442695
        %v3106 = vpow.pop %v3105
        %v3107 = vmul.f32 %v3007, 1.442695
        %v3108 = vpow.pop %v3107
        %v3109 = vmul.f32 %v3008, 1.442695
        %v3110 = vpow.pop %v3109
        %v3111 = vmul.f32 %v3009, 1.442695
        %v3112 = vpow.pop %v3111
        %v3113 = vmul.f32 %v3010, 1.442695
        %v3114 = vpow.pop %v3113
        %v3115 = vmul.f32 %v3011, 1.442695
        %v3116 = vpow.pop %v3115
        %v3117 = vmul.f32 %v3012, 1.442695
        %v3118 = vpow.pop %v3117
        %v3119 = vmul.f32 %v3013, 1.442695
        %v3120 = vpow.pop %v3119
        %v3121 = vmul.f32 %v3014, 1.442695
        %v3122 = vpow.pop %v3121
        %v3123 = vmul.f32 %v3015, 1.442695
        %v3124 = vpow.pop %v3123
        %v3125 = vmul.f32 %v3016, 1.442695
        %v3126 = vpow.pop %v3125
        %v3127 = vmul.f32 %v3017, 1.442695
        %v3128 = vpow.pop %v3127
        %v3129 = vmul.f32 %v3018, 1.442695
        %v3130 = vpow.pop %v3129
        %v3131 = vmul.f32 %v3019, 1.442695
        %v3132 = vpow.pop %v3131
        %v3133 = vmul.f32 %v3020, 1.442695
        %v3134 = vpow.pop %v3133
        %v3135 = vmul.f32 %v3021, 1.442695
        %v3136 = vpow.pop %v3135
        %v3137 = vmul.f32 %v3022, 1.442695
        %v3138 = vpow.pop %v3137
        %v3139 = vmul.f32 %v3023, 1.442695
        %v3140 = vpow.pop %v3139
        %v3141 = vmul.f32 %v3024, 1.442695
        %v3142 = vpow.pop %v3141
        %v3143 = vmul.f32 %v3025, 1.442695
        %v3144 = vpow.pop %v3143
        %v3145 = vmul.f32 %v3026, 1.442695
        %v3146 = vpow.pop %v3145
        %v3147 = vmul.f32 %v3027, 1.442695
        %v3148 = vpow.pop %v3147
        %v3149 = vmul.f32 %v3028, 1.442695
        %v3150 = vpow.pop %v3149
        %v3151 = vmul.f32 %v3029, 1.442695
        %v3152 = vpow.pop %v3151
        %v3153 = vmul.f32 %v3030, 1.442695
        %v3154 = vpow.pop %v3153
        %v3155 = vmul.f32 %v3031, 1.442695
        %v3156 = vpow.pop %v3155
        %v3157 = vmul.f32 %v3032, 1.442695
        %v3158 = vpow.pop %v3157
        %v3159 = vmul.f32 %v3033, 1.442695
        %v3160 = vpow.pop %v3159
        %v3161 = vmul.f32 %v3034, 1.442695
        %v3162 = vpow.pop %v3161
        %v3171 = vrot.slane %v2932, 7
        %vm3172 = vcmask 1041409
        %v3173 = vsel %vm3172, %v3171, %v2931
        %v3174 = vrot.slane %v2933, 6
        %vm3175 = vcmask 1042434
        %v3176 = vsel %vm3175, %v3174, %v3173
        %v3177 = vrot.slane %v2934, 5
        %vm3178 = vcmask 1043459
        %v3179 = vsel %vm3178, %v3177, %v3176
        %v3180 = vrot.slane %v2935, 4
        %vm3181 = vcmask 1044484
        %v3182 = vsel %vm3181, %v3180, %v3179
        %v3183 = vrot.slane %v2936, 3
        %vm3184 = vcmask 1045509
        %v3185 = vsel %vm3184, %v3183, %v3182
        %v3186 = vrot.slane %v2937, 2
        %vm3187 = vcmask 1046534
        %v3188 = vsel %vm3187, %v3186, %v3185
        %v3189 = vrot.slane %v2938, 1
        %vm3190 = vcmask 1047559
        %v3191 = vsel %vm3190, %v3189, %v3188
        %v3193 = vsub.f32 %v2741, %v3191
        %v3194 = vmul.f32 %v3193, 1.442695
        %v3195 = vpow.pop %v3194
        %v3196 = vsel %vm2746, %v3036, 0.0
        %v3197 = vsel %vm2746, %v3038, 0.0
        %v3198 = vadd.f32 %v3196, %v3197
        %v3199 = vsel %vm2746, %v3040, 0.0
        %v3200 = vadd.f32 %v3198, %v3199
        %v3201 = vsel %vm2746, %v3042, 0.0
        %v3202 = vadd.f32 %v3200, %v3201
        %v3203 = vsel %vm2746, %v3044, 0.0
        %v3204 = vadd.f32 %v3202, %v3203
        %v3205 = vsel %vm2746, %v3046, 0.0
        %v3206 = vadd.f32 %v3204, %v3205
        %v3207 = vsel %vm2746, %v3048, 0.0
        %v3208 = vadd.f32 %v3206, %v3207
        %v3209 = vsel %vm2746, %v3050, 0.0
        %v3210 = vadd.f32 %v3208, %v3209
        %v3211 = vrot.slane %v3210, 4
        %v3212 = vadd.f32 %v3210, %v3211
        %v3213 = vrot.slane %v3212, 2
        %v3214 = vadd.f32 %v3212, %v3213
        %v3215 = vrot.slane %v3214, 1
        %v3216 = vadd.f32 %v3214, %v3215
        %v3217 = vsel %vm2746, %v3052, 0.0
        %v3218 = vsel %vm2746, %v3054, 0.0
        %v3219 = vadd.f32 %v3217, %v3218
        %v3220 = vsel %vm2746, %v3056, 0.0
        %v3221 = vadd.f32 %v3219, %v3220
        %v3222 = vsel %vm2746, %v3058, 0.0
        %v3223 = vadd.f32 %v3221, %v3222
        %v3224 = vsel %vm2746, %v3060, 0.0
        %v3225 = vadd.f32 %v3223, %v3224
        %v3226 = vsel %vm2746, %v3062, 0.0
        %v3227 = vadd.f32 %v3225, %v3226
        %v3228 = vsel %vm2746, %v3064, 0.0
        %v3229 = vadd.f32 %v3227, %v3228
        %v3230 = vsel %vm2746, %v3066, 0.0
        %v3231 = vadd.f32 %v3229, %v3230
        %v3232 = vrot.slane %v3231, 4
        %v3233 = vadd.f32 %v3231, %v3232
        %v3234 = vrot.slane %v3233, 2
        %v3235 = vadd.f32 %v3233, %v3234
        %v3236 = vrot.slane %v3235, 1
        %v3237 = vadd.f32 %v3235, %v3236
        %v3238 = vsel %vm2746, %v3068, 0.0
        %v3239 = vsel %vm2746, %v3070, 0.0
        %v3240 = vadd.f32 %v3238, %v3239
        %v3241 = vsel %vm2746, %v3072, 0.0
        %v3242 = vadd.f32 %v3240, %v3241
        %v3243 = vsel %vm2746, %v3074, 0.0
        %v3244 = vadd.f32 %v3242, %v3243
        %v3245 = vsel %vm2746, %v3076, 0.0
        %v3246 = vadd.f32 %v3244, %v3245
        %v3247 = vsel %vm2746, %v3078, 0.0
        %v3248 = vadd.f32 %v3246, %v3247
        %v3249 = vsel %vm2746, %v3080, 0.0
        %v3250 = vadd.f32 %v3248, %v3249
        %v3251 = vsel %vm2746, %v3082, 0.0
        %v3252 = vadd.f32 %v3250, %v3251
        %v3253 = vrot.slane %v3252, 4
        %v3254 = vadd.f32 %v3252, %v3253
        %v3255 = vrot.slane %v3254, 2
        %v3256 = vadd.f32 %v3254, %v3255
        %v3257 = vrot.slane %v3256, 1
        %v3258 = vadd.f32 %v3256, %v3257
        %v3259 = vsel %vm2746, %v3084, 0.0
        %v3260 = vsel %vm2746, %v3086, 0.0
        %v3261 = vadd.f32 %v3259, %v3260
        %v3262 = vsel %vm2746, %v3088, 0.0
        %v3263 = vadd.f32 %v3261, %v3262
        %v3264 = vsel %vm2746, %v3090, 0.0
        %v3265 = vadd.f32 %v3263, %v3264
        %v3266 = vsel %vm2746, %v3092, 0.0
        %v3267 = vadd.f32 %v3265, %v3266
        %v3268 = vsel %vm2746, %v3094, 0.0
        %v3269 = vadd.f32 %v3267, %v3268
        %v3270 = vsel %vm2746, %v3096, 0.0
        %v3271 = vadd.f32 %v3269, %v3270
        %v3272 = vsel %vm2746, %v3098, 0.0
        %v3273 = vadd.f32 %v3271, %v3272
        %v3274 = vrot.slane %v3273, 4
        %v3275 = vadd.f32 %v3273, %v3274
        %v3276 = vrot.slane %v3275, 2
        %v3277 = vadd.f32 %v3275, %v3276
        %v3278 = vrot.slane %v3277, 1
        %v3279 = vadd.f32 %v3277, %v3278
        %v3280 = vsel %vm2746, %v3100, 0.0
        %v3281 = vsel %vm2746, %v3102, 0.0
        %v3282 = vadd.f32 %v3280, %v3281
        %v3283 = vsel %vm2746, %v3104, 0.0
        %v3284 = vadd.f32 %v3282, %v3283
        %v3285 = vsel %vm2746, %v3106, 0.0
        %v3286 = vadd.f32 %v3284, %v3285
        %v3287 = vsel %vm2746, %v3108, 0.0
        %v3288 = vadd.f32 %v3286, %v3287
        %v3289 = vsel %vm2746, %v3110, 0.0
        %v3290 = vadd.f32 %v3288, %v3289
        %v3291 = vsel %vm2746, %v3112, 0.0
        %v3292 = vadd.f32 %v3290, %v3291
        %v3293 = vsel %vm2746, %v3114, 0.0
        %v3294 = vadd.f32 %v3292, %v3293
        %v3295 = vrot.slane %v3294, 4
        %v3296 = vadd.f32 %v3294, %v3295
        %v3297 = vrot.slane %v3296, 2
        %v3298 = vadd.f32 %v3296, %v3297
        %v3299 = vrot.slane %v3298, 1
        %v3300 = vadd.f32 %v3298, %v3299
        %v3301 = vsel %vm2746, %v3116, 0.0
        %v3302 = vsel %vm2746, %v3118, 0.0
        %v3303 = vadd.f32 %v3301, %v3302
        %v3304 = vsel %vm2746, %v3120, 0.0
        %v3305 = vadd.f32 %v3303, %v3304
        %v3306 = vsel %vm2746, %v3122, 0.0
        %v3307 = vadd.f32 %v3305, %v3306
        %v3308 = vsel %vm2746, %v3124, 0.0
        %v3309 = vadd.f32 %v3307, %v3308
        %v3310 = vsel %vm2746, %v3126, 0.0
        %v3311 = vadd.f32 %v3309, %v3310
        %v3312 = vsel %vm2746, %v3128, 0.0
        %v3313 = vadd.f32 %v3311, %v3312
        %v3314 = vsel %vm2746, %v3130, 0.0
        %v3315 = vadd.f32 %v3313, %v3314
        %v3316 = vrot.slane %v3315, 4
        %v3317 = vadd.f32 %v3315, %v3316
        %v3318 = vrot.slane %v3317, 2
        %v3319 = vadd.f32 %v3317, %v3318
        %v3320 = vrot.slane %v3319, 1
        %v3321 = vadd.f32 %v3319, %v3320
        %v3322 = vsel %vm2746, %v3132, 0.0
        %v3323 = vsel %vm2746, %v3134, 0.0
        %v3324 = vadd.f32 %v3322, %v3323
        %v3325 = vsel %vm2746, %v3136, 0.0
        %v3326 = vadd.f32 %v3324, %v3325
        %v3327 = vsel %vm2746, %v3138, 0.0
        %v3328 = vadd.f32 %v3326, %v3327
        %v3329 = vsel %vm2746, %v3140, 0.0
        %v3330 = vadd.f32 %v3328, %v3329
        %v3331 = vsel %vm2746, %v3142, 0.0
        %v3332 = vadd.f32 %v3330, %v3331
        %v3333 = vsel %vm2746, %v3144, 0.0
        %v3334 = vadd.f32 %v3332, %v3333
        %v3335 = vsel %vm2746, %v3146, 0.0
        %v3336 = vadd.f32 %v3334, %v3335
        %v3337 = vrot.slane %v3336, 4
        %v3338 = vadd.f32 %v3336, %v3337
        %v3339 = vrot.slane %v3338, 2
        %v3340 = vadd.f32 %v3338, %v3339
        %v3341 = vrot.slane %v3340, 1
        %v3342 = vadd.f32 %v3340, %v3341
        %v3343 = vsel %vm2746, %v3148, 0.0
        %v3344 = vsel %vm2746, %v3150, 0.0
        %v3345 = vadd.f32 %v3343, %v3344
        %v3346 = vsel %vm2746, %v3152, 0.0
        %v3347 = vadd.f32 %v3345, %v3346
        %v3348 = vsel %vm2746, %v3154, 0.0
        %v3349 = vadd.f32 %v3347, %v3348
        %v3350 = vsel %vm2746, %v3156, 0.0
        %v3351 = vadd.f32 %v3349, %v3350
        %v3352 = vsel %vm2746, %v3158, 0.0
        %v3353 = vadd.f32 %v3351, %v3352
        %v3354 = vsel %vm2746, %v3160, 0.0
        %v3355 = vadd.f32 %v3353, %v3354
        %v3356 = vsel %vm2746, %v3162, 0.0
        %v3357 = vadd.f32 %v3355, %v3356
        %v3358 = vrot.slane %v3357, 4
        %v3359 = vadd.f32 %v3357, %v3358
        %v3360 = vrot.slane %v3359, 2
        %v3361 = vadd.f32 %v3359, %v3360
        %v3362 = vrot.slane %v3361, 1
        %v3363 = vadd.f32 %v3361, %v3362
        %v3372 = vsel %vm3172, %v3237, %v3216
        %v3373 = vsel %vm3175, %v3258, %v3372
        %v3374 = vsel %vm3178, %v3279, %v3373
        %v3375 = vsel %vm3181, %v3300, %v3374
        %v3376 = vsel %vm3184, %v3321, %v3375
        %v3377 = vsel %vm3187, %v3342, %v3376
        %v3378 = vsel %vm3190, %v3363, %v3377
        %v3380 = vadd.f32 %v3195, %v3378
        %v3381 = vrcp.pop %v3380
        %v3383 = vcombine.high %v3381, %v3381
        %v3385 = vunpack.c.l.s4 1966171168
        %v3386 = vunpack.c.0.s8 %v3385
        %v3387 = vlaneseq
        %v3388 = vshrl.u32 %v3387, 7
        %v3389 = vsub.s32 %v3386, %v3388
        %v3390 = vrot.slane %v3381, %v3389
        %v3392 = vunpack.c.l.s4 1966171168
        %v3393 = vunpack.c.0.s8 %v3392
        %v3394 = vlaneseq
        %v3395 = vshrl.u32 %v3394, 7
        %v3396 = vsub.s32 %v3393, %v3395
        %v3397 = vrot.slane %v3383, %v3396
        %v3398 = vcombine.high %v3390, %v3390
        %v3399 = vcombine.high %v3397, %v3397
        %v3401 = vunpack.c.l.s4 1966171168
        %v3402 = vunpack.c.0.s8 %v3401
        %v3403 = vlaneseq
        %v3404 = vshrl.u32 %v3403, 7
        %v3405 = vsub.s32 %v3402, %v3404
        %v3406 = vrot.slane %v3390, %v3405
        %v3408 = vunpack.c.l.s4 1966171168
        %v3409 = vunpack.c.0.s8 %v3408
        %v3410 = vlaneseq
        %v3411 = vshrl.u32 %v3410, 7
        %v3412 = vsub.s32 %v3409, %v3411
        %v3413 = vrot.slane %v3397, %v3412
        %v3415 = vunpack.c.l.s4 1966171168
        %v3416 = vunpack.c.0.s8 %v3415
        %v3417 = vlaneseq
        %v3418 = vshrl.u32 %v3417, 7
        %v3419 = vsub.s32 %v3416, %v3418
        %v3420 = vrot.slane %v3398, %v3419
        %v3422 = vunpack.c.l.s4 1966171168
        %v3423 = vunpack.c.0.s8 %v3422
        %v3424 = vlaneseq
        %v3425 = vshrl.u32 %v3424, 7
        %v3426 = vsub.s32 %v3423, %v3425
        %v3427 = vrot.slane %v3399, %v3426
        %v3428 = vcombine.high %v3406, %v3406
        %v3429 = vcombine.high %v3413, %v3413
        %v3430 = vcombine.high %v3420, %v3420
        %v3431 = vcombine.high %v3427, %v3427
        %v3432 = vlaneseq
        %v3433 = vshrl.u32 %v3432, 7
        %v3434 = vsub.s32 0, %v3433
        %v3435 = vrot.slane %v3406, %v3434
        %v3436 = vlaneseq
        %v3437 = vshrl.u32 %v3436, 7
        %v3438 = vsub.s32 0, %v3437
        %v3439 = vrot.slane %v3420, %v3438
        %v3440 = vlaneseq
        %v3441 = vshrl.u32 %v3440, 7
        %v3442 = vsub.s32 0, %v3441
        %v3443 = vrot.slane %v3428, %v3442
        %v3444 = vlaneseq
        %v3445 = vshrl.u32 %v3444, 7
        %v3446 = vsub.s32 0, %v3445
        %v3447 = vrot.slane %v3430, %v3446
        %v3448 = vlaneseq
        %v3449 = vshrl.u32 %v3448, 7
        %v3450 = vsub.s32 0, %v3449
        %v3451 = vrot.slane %v3413, %v3450
        %v3452 = vlaneseq
        %v3453 = vshrl.u32 %v3452, 7
        %v3454 = vsub.s32 0, %v3453
        %v3455 = vrot.slane %v3427, %v3454
        %v3456 = vlaneseq
        %v3457 = vshrl.u32 %v3456, 7
        %v3458 = vsub.s32 0, %v3457
        %v3459 = vrot.slane %v3429, %v3458
        %v3460 = vlaneseq
        %v3461 = vshrl.u32 %v3460, 7
        %v3462 = vsub.s32 0, %v3461
        %v3463 = vrot.slane %v3431, %v3462
        %v3472 = vmul.f32 %v3036, %v3435
        %v3473 = vmul.f32 %v3038, %v3435
        %v3474 = vmul.f32 %v3040, %v3435
        %v3475 = vmul.f32 %v3042, %v3435
        %v3476 = vmul.f32 %v3044, %v3435
        %v3477 = vmul.f32 %v3046, %v3435
        %v3478 = vmul.f32 %v3048, %v3435
        %v3479 = vmul.f32 %v3050, %v3435
        %v3480 = vmul.f32 %v3052, %v3439
        %v3481 = vmul.f32 %v3054, %v3439
        %v3482 = vmul.f32 %v3056, %v3439
        %v3483 = vmul.f32 %v3058, %v3439
        %v3484 = vmul.f32 %v3060, %v3439
        %v3485 = vmul.f32 %v3062, %v3439
        %v3486 = vmul.f32 %v3064, %v3439
        %v3487 = vmul.f32 %v3066, %v3439
        %v3488 = vmul.f32 %v3068, %v3443
        %v3489 = vmul.f32 %v3070, %v3443
        %v3490 = vmul.f32 %v3072, %v3443
        %v3491 = vmul.f32 %v3074, %v3443
        %v3492 = vmul.f32 %v3076, %v3443
        %v3493 = vmul.f32 %v3078, %v3443
        %v3494 = vmul.f32 %v3080, %v3443
        %v3495 = vmul.f32 %v3082, %v3443
        %v3496 = vmul.f32 %v3084, %v3447
        %v3497 = vmul.f32 %v3086, %v3447
        %v3498 = vmul.f32 %v3088, %v3447
        %v3499 = vmul.f32 %v3090, %v3447
        %v3500 = vmul.f32 %v3092, %v3447
        %v3501 = vmul.f32 %v3094, %v3447
        %v3502 = vmul.f32 %v3096, %v3447
        %v3503 = vmul.f32 %v3098, %v3447
        %v3504 = vmul.f32 %v3100, %v3451
        %v3505 = vmul.f32 %v3102, %v3451
        %v3506 = vmul.f32 %v3104, %v3451
        %v3507 = vmul.f32 %v3106, %v3451
        %v3508 = vmul.f32 %v3108, %v3451
        %v3509 = vmul.f32 %v3110, %v3451
        %v3510 = vmul.f32 %v3112, %v3451
        %v3511 = vmul.f32 %v3114, %v3451
        %v3512 = vmul.f32 %v3116, %v3455
        %v3513 = vmul.f32 %v3118, %v3455
        %v3514 = vmul.f32 %v3120, %v3455
        %v3515 = vmul.f32 %v3122, %v3455
        %v3516 = vmul.f32 %v3124, %v3455
        %v3517 = vmul.f32 %v3126, %v3455
        %v3518 = vmul.f32 %v3128, %v3455
        %v3519 = vmul.f32 %v3130, %v3455
        %v3520 = vmul.f32 %v3132, %v3459
        %v3521 = vmul.f32 %v3134, %v3459
        %v3522 = vmul.f32 %v3136, %v3459
        %v3523 = vmul.f32 %v3138, %v3459
        %v3524 = vmul.f32 %v3140, %v3459
        %v3525 = vmul.f32 %v3142, %v3459
        %v3526 = vmul.f32 %v3144, %v3459
        %v3527 = vmul.f32 %v3146, %v3459
        %v3528 = vmul.f32 %v3148, %v3463
        %v3529 = vmul.f32 %v3150, %v3463
        %v3530 = vmul.f32 %v3152, %v3463
        %v3531 = vmul.f32 %v3154, %v3463
        %v3532 = vmul.f32 %v3156, %v3463
        %v3533 = vmul.f32 %v3158, %v3463
        %v3534 = vmul.f32 %v3160, %v3463
        %v3535 = vmul.f32 %v3162, %v3463
        %v3536 = vmul.f32 %v3195, %v3381
        %v3537 = vpack.c.bf16 %v3473, %v3472
        %v3538 = vpack.c.bf16 %v3475, %v3474
        %v3539 = vpack.c.bf16 %v3477, %v3476
        %v3540 = vpack.c.bf16 %v3479, %v3478
        %v3541 = vpack.c.bf16 %v3481, %v3480
        %v3542 = vpack.c.bf16 %v3483, %v3482
        %v3543 = vpack.c.bf16 %v3485, %v3484
        %v3544 = vpack.c.bf16 %v3487, %v3486
        %v3545 = vpack.c.bf16 %v3489, %v3488
        %v3546 = vpack.c.bf16 %v3491, %v3490
        %v3547 = vpack.c.bf16 %v3493, %v3492
        %v3548 = vpack.c.bf16 %v3495, %v3494
        %v3549 = vpack.c.bf16 %v3497, %v3496
        %v3550 = vpack.c.bf16 %v3499, %v3498
        %v3551 = vpack.c.bf16 %v3501, %v3500
        %v3552 = vpack.c.bf16 %v3503, %v3502
        %v3553 = vpack.c.bf16 %v3505, %v3504
        %v3554 = vpack.c.bf16 %v3507, %v3506
        %v3555 = vpack.c.bf16 %v3509, %v3508
        %v3556 = vpack.c.bf16 %v3511, %v3510
        %v3557 = vpack.c.bf16 %v3513, %v3512
        %v3558 = vpack.c.bf16 %v3515, %v3514
        %v3559 = vpack.c.bf16 %v3517, %v3516
        %v3560 = vpack.c.bf16 %v3519, %v3518
        %v3561 = vpack.c.bf16 %v3521, %v3520
        %v3562 = vpack.c.bf16 %v3523, %v3522
        %v3563 = vpack.c.bf16 %v3525, %v3524
        %v3564 = vpack.c.bf16 %v3527, %v3526
        %v3565 = vpack.c.bf16 %v3529, %v3528
        %v3566 = vpack.c.bf16 %v3531, %v3530
        %v3567 = vpack.c.bf16 %v3533, %v3532
        %v3568 = vpack.c.bf16 %v3535, %v3534
        %v3570 = vsel %vm2746, %v3537, 0
        %v3573 = vsel %vm2746, %v3538, 0
        %v3576 = vsel %vm2746, %v3539, 0
        %v3579 = vsel %vm2746, %v3540, 0
        %v3582 = vsel %vm2746, %v3541, 0
        %v3585 = vsel %vm2746, %v3542, 0
        %v3588 = vsel %vm2746, %v3543, 0
        %v3591 = vsel %vm2746, %v3544, 0
        %v3594 = vsel %vm2746, %v3545, 0
        %v3597 = vsel %vm2746, %v3546, 0
        %v3600 = vsel %vm2746, %v3547, 0
        %v3603 = vsel %vm2746, %v3548, 0
        %v3606 = vsel %vm2746, %v3549, 0
        %v3609 = vsel %vm2746, %v3550, 0
        %v3612 = vsel %vm2746, %v3551, 0
        %v3615 = vsel %vm2746, %v3552, 0
        %v3618 = vsel %vm2746, %v3553, 0
        %v3621 = vsel %vm2746, %v3554, 0
        %v3624 = vsel %vm2746, %v3555, 0
        %v3627 = vsel %vm2746, %v3556, 0
        %v3630 = vsel %vm2746, %v3557, 0
        %v3633 = vsel %vm2746, %v3558, 0
        %v3636 = vsel %vm2746, %v3559, 0
        %v3639 = vsel %vm2746, %v3560, 0
        %v3642 = vsel %vm2746, %v3561, 0
        %v3645 = vsel %vm2746, %v3562, 0
        %v3648 = vsel %vm2746, %v3563, 0
        %v3651 = vsel %vm2746, %v3564, 0
        %v3654 = vsel %vm2746, %v3565, 0
        %v3657 = vsel %vm2746, %v3566, 0
        %v3660 = vsel %vm2746, %v3567, 0
        %v3663 = vsel %vm2746, %v3568, 0
        %vm3665 = vcmask 1041408
        %v3667 = vsel %vm3665, %v1226, 0
        %3669 = vmatprep.subr.bf16.mxu0 0
        %3670 = vmatpush1.bf16.msra.mxu0 %v3667
        %3671 = vmatprep.subr.bf16.mxu0 0
        %3672 = vmatpush1.bf16.msra.mxu0 0
        %3673 = vmatprep.subr.bf16.mxu0 0
        %3674 = vmatpush1.bf16.msra.mxu0 0
        %3675 = vmatprep.subr.bf16.mxu0 0
        %3676 = vmatpush1.bf16.msra.mxu0 0
        %3677 = vmatprep.subr.bf16.mxu0 0
        %3678 = vmatpush1.bf16.msra.mxu0 0
        %3679 = vmatprep.subr.bf16.mxu0 0
        %3680 = vmatpush1.bf16.msra.mxu0 0
        %3681 = vmatprep.subr.bf16.mxu0 0
        %3682 = vmatpush1.bf16.msra.mxu0 0
        %3683 = vmatprep.subr.bf16.mxu0 0
        %3684 = vmatpush1.bf16.msra.mxu0 0
        %3685 = vmatprep.subr.bf16.mxu0 0
        %3686 = vmatpush1.bf16.msra.mxu0 0
        %3687 = vmatprep.subr.bf16.mxu0 0
        %3688 = vmatpush1.bf16.msra.mxu0 0
        %3689 = vmatprep.subr.bf16.mxu0 0
        %3690 = vmatpush1.bf16.msra.mxu0 0
        %3691 = vmatprep.subr.bf16.mxu0 0
        %3692 = vmatpush1.bf16.msra.mxu0 0
        %3693 = vmatprep.subr.bf16.mxu0 0
        %3694 = vmatpush1.bf16.msra.mxu0 0
        %3695 = vmatprep.subr.bf16.mxu0 0
        %3696 = vmatpush1.bf16.msra.mxu0 0
        %3697 = vmatprep.subr.bf16.mxu0 0
        %3698 = vmatpush1.bf16.msra.mxu0 0
        %3699 = vmatprep.subr.bf16.mxu0 0
        %3700 = vmatpush1.bf16.msra.mxu0 0
        %3701 = vmatprep.mubr.bf16.mxu0 0
        %3702 = vmatmul.mubr.bf16.gmra.mrb[0].mxu0 %v3570
        %v3703 = vpop.f32.mrb[0].mxu0
        %v3704 = vadd.f32 0.0, %v3703
        %v3705 = vpop.f32.mrb[0].mxu0
        %v3706 = vpop.f32.mrb[0].mxu0
        %v3707 = vadd.f32 0.0, %v3706
        %v3708 = vpop.f32.mrb[0].mxu0
        %3709 = vmatprep.mubr.bf16.mxu0 0
        %3710 = vmatmul.mubr.bf16.gmra.mrb[0].mxu0 %v3573
        %v3711 = vpop.f32.mrb[0].mxu0
        %v3712 = vadd.f32 0.0, %v3711
        %v3713 = vpop.f32.mrb[0].mxu0
        %v3714 = vpop.f32.mrb[0].mxu0
        %v3715 = vadd.f32 0.0, %v3714
        %v3716 = vpop.f32.mrb[0].mxu0
        %3717 = vmatprep.mubr.bf16.mxu0 0
        %3718 = vmatmul.mubr.bf16.gmra.mrb[0].mxu0 %v3576
        %v3719 = vpop.f32.mrb[0].mxu0
        %v3720 = vadd.f32 0.0, %v3719
        %v3721 = vpop.f32.mrb[0].mxu0
        %v3722 = vpop.f32.mrb[0].mxu0
        %v3723 = vadd.f32 0.0, %v3722
        %v3724 = vpop.f32.mrb[0].mxu0
        %3725 = vmatprep.mubr.bf16.mxu0 0
        %3726 = vmatmul.mubr.bf16.gmra.mrb[0].mxu0 %v3579
        %v3727 = vpop.f32.mrb[0].mxu0
        %v3728 = vadd.f32 0.0, %v3727
        %v3729 = vpop.f32.mrb[0].mxu0
        %v3730 = vpop.f32.mrb[0].mxu0
        %v3731 = vadd.f32 0.0, %v3730
        %v3732 = vpop.f32.mrb[0].mxu0
        %3733 = vmatprep.mubr.bf16.mxu0 0
        %3734 = vmatmul.mubr.bf16.gmra.mrb[0].mxu0 %v3582
        %v3735 = vpop.f32.mrb[0].mxu0
        %v3736 = vadd.f32 0.0, %v3735
        %v3737 = vpop.f32.mrb[0].mxu0
        %v3738 = vpop.f32.mrb[0].mxu0
        %v3739 = vadd.f32 0.0, %v3738
        %v3740 = vpop.f32.mrb[0].mxu0
        %3741 = vmatprep.mubr.bf16.mxu0 0
        %3742 = vmatmul.mubr.bf16.gmra.mrb[0].mxu0 %v3585
        %v3743 = vpop.f32.mrb[0].mxu0
        %v3744 = vadd.f32 0.0, %v3743
        %v3745 = vpop.f32.mrb[0].mxu0
        %v3746 = vpop.f32.mrb[0].mxu0
        %v3747 = vadd.f32 0.0, %v3746
        %v3748 = vpop.f32.mrb[0].mxu0
        %3749 = vmatprep.mubr.bf16.mxu0 0
        %3750 = vmatmul.mubr.bf16.gmra.mrb[0].mxu0 %v3588
        %v3751 = vpop.f32.mrb[0].mxu0
        %v3752 = vadd.f32 0.0, %v3751
        %v3753 = vpop.f32.mrb[0].mxu0
        %v3754 = vpop.f32.mrb[0].mxu0
        %v3755 = vadd.f32 0.0, %v3754
        %v3756 = vpop.f32.mrb[0].mxu0
        %3757 = vmatprep.mubr.bf16.mxu0 0
        %3758 = vmatmul.mubr.bf16.gmra.mrb[0].mxu0 %v3591
        %v3759 = vpop.f32.mrb[0].mxu0
        %v3760 = vadd.f32 0.0, %v3759
        %v3761 = vpop.f32.mrb[0].mxu0
        %v3762 = vpop.f32.mrb[0].mxu0
        %v3763 = vadd.f32 0.0, %v3762
        %v3764 = vpop.f32.mrb[0].mxu0
        %3765 = vmatprep.mubr.bf16.mxu0 0
        %3766 = vmatmul.mubr.bf16.gmra.mrb[0].mxu0 %v3594
        %v3767 = vpop.f32.mrb[0].mxu0
        %v3768 = vadd.f32 0.0, %v3767
        %v3769 = vpop.f32.mrb[0].mxu0
        %v3770 = vpop.f32.mrb[0].mxu0
        %v3771 = vadd.f32 0.0, %v3770
        %v3772 = vpop.f32.mrb[0].mxu0
        %3773 = vmatprep.mubr.bf16.mxu0 0
        %3774 = vmatmul.mubr.bf16.gmra.mrb[0].mxu0 %v3597
        %v3775 = vpop.f32.mrb[0].mxu0
        %v3776 = vadd.f32 0.0, %v3775
        %v3777 = vpop.f32.mrb[0].mxu0
        %v3778 = vpop.f32.mrb[0].mxu0
        %v3779 = vadd.f32 0.0, %v3778
        %v3780 = vpop.f32.mrb[0].mxu0
        %3781 = vmatprep.mubr.bf16.mxu0 0
        %3782 = vmatmul.mubr.bf16.gmra.mrb[0].mxu0 %v3600
        %v3783 = vpop.f32.mrb[0].mxu0
        %v3784 = vadd.f32 0.0, %v3783
        %v3785 = vpop.f32.mrb[0].mxu0
        %v3786 = vpop.f32.mrb[0].mxu0
        %v3787 = vadd.f32 0.0, %v3786
        %v3788 = vpop.f32.mrb[0].mxu0
        %3789 = vmatprep.mubr.bf16.mxu0 0
        %3790 = vmatmul.mubr.bf16.gmra.mrb[0].mxu0 %v3603
        %v3791 = vpop.f32.mrb[0].mxu0
        %v3792 = vadd.f32 0.0, %v3791
        %v3793 = vpop.f32.mrb[0].mxu0
        %v3794 = vpop.f32.mrb[0].mxu0
        %v3795 = vadd.f32 0.0, %v3794
        %v3796 = vpop.f32.mrb[0].mxu0
        %3797 = vmatprep.mubr.bf16.mxu0 0
        %3798 = vmatmul.mubr.bf16.gmra.mrb[0].mxu0 %v3606
        %v3799 = vpop.f32.mrb[0].mxu0
        %v3800 = vadd.f32 0.0, %v3799
        %v3801 = vpop.f32.mrb[0].mxu0
        %v3802 = vpop.f32.mrb[0].mxu0
        %v3803 = vadd.f32 0.0, %v3802
        %v3804 = vpop.f32.mrb[0].mxu0
        %3805 = vmatprep.mubr.bf16.mxu0 0
        %3806 = vmatmul.mubr.bf16.gmra.mrb[0].mxu0 %v3609
        %v3807 = vpop.f32.mrb[0].mxu0
        %v3808 = vadd.f32 0.0, %v3807
        %v3809 = vpop.f32.mrb[0].mxu0
        %v3810 = vpop.f32.mrb[0].mxu0
        %v3811 = vadd.f32 0.0, %v3810
        %v3812 = vpop.f32.mrb[0].mxu0
        %3813 = vmatprep.mubr.bf16.mxu0 0
        %3814 = vmatmul.mubr.bf16.gmra.mrb[0].mxu0 %v3612
        %v3815 = vpop.f32.mrb[0].mxu0
        %v3816 = vadd.f32 0.0, %v3815
        %v3817 = vpop.f32.mrb[0].mxu0
        %v3818 = vpop.f32.mrb[0].mxu0
        %v3819 = vadd.f32 0.0, %v3818
        %v3820 = vpop.f32.mrb[0].mxu0
        %3821 = vmatprep.mubr.bf16.mxu0 0
        %3822 = vmatmul.mubr.bf16.gmra.mrb[0].mxu0 %v3615
        %v3823 = vpop.f32.mrb[0].mxu0
        %v3824 = vadd.f32 0.0, %v3823
        %v3825 = vpop.f32.mrb[0].mxu0
        %v3826 = vpop.f32.mrb[0].mxu0
        %v3827 = vadd.f32 0.0, %v3826
        %v3828 = vpop.f32.mrb[0].mxu0
        %3829 = vmatprep.mubr.bf16.mxu0 0
        %3830 = vmatmul.mubr.bf16.gmra.mrb[0].mxu0 %v3618
        %v3831 = vpop.f32.mrb[0].mxu0
        %v3832 = vadd.f32 0.0, %v3831
        %v3833 = vpop.f32.mrb[0].mxu0
        %v3834 = vpop.f32.mrb[0].mxu0
        %v3835 = vadd.f32 0.0, %v3834
        %v3836 = vpop.f32.mrb[0].mxu0
        %3837 = vmatprep.mubr.bf16.mxu0 0
        %3838 = vmatmul.mubr.bf16.gmra.mrb[0].mxu0 %v3621
        %v3839 = vpop.f32.mrb[0].mxu0
        %v3840 = vadd.f32 0.0, %v3839
        %v3841 = vpop.f32.mrb[0].mxu0
        %v3842 = vpop.f32.mrb[0].mxu0
        %v3843 = vadd.f32 0.0, %v3842
        %v3844 = vpop.f32.mrb[0].mxu0
        %3845 = vmatprep.mubr.bf16.mxu0 0
        %3846 = vmatmul.mubr.bf16.gmra.mrb[0].mxu0 %v3624
        %v3847 = vpop.f32.mrb[0].mxu0
        %v3848 = vadd.f32 0.0, %v3847
        %v3849 = vpop.f32.mrb[0].mxu0
        %v3850 = vpop.f32.mrb[0].mxu0
        %v3851 = vadd.f32 0.0, %v3850
        %v3852 = vpop.f32.mrb[0].mxu0
        %3853 = vmatprep.mubr.bf16.mxu0 0
        %3854 = vmatmul.mubr.bf16.gmra.mrb[0].mxu0 %v3627
        %v3855 = vpop.f32.mrb[0].mxu0
        %v3856 = vadd.f32 0.0, %v3855
        %v3857 = vpop.f32.mrb[0].mxu0
        %v3858 = vpop.f32.mrb[0].mxu0
        %v3859 = vadd.f32 0.0, %v3858
        %v3860 = vpop.f32.mrb[0].mxu0
        %3861 = vmatprep.mubr.bf16.mxu0 0
        %3862 = vmatmul.mubr.bf16.gmra.mrb[0].mxu0 %v3630
        %v3863 = vpop.f32.mrb[0].mxu0
        %v3864 = vadd.f32 0.0, %v3863
        %v3865 = vpop.f32.mrb[0].mxu0
        %v3866 = vpop.f32.mrb[0].mxu0
        %v3867 = vadd.f32 0.0, %v3866
        %v3868 = vpop.f32.mrb[0].mxu0
        %3869 = vmatprep.mubr.bf16.mxu0 0
        %3870 = vmatmul.mubr.bf16.gmra.mrb[0].mxu0 %v3633
        %v3871 = vpop.f32.mrb[0].mxu0
        %v3872 = vadd.f32 0.0, %v3871
        %v3873 = vpop.f32.mrb[0].mxu0
        %v3874 = vpop.f32.mrb[0].mxu0
        %v3875 = vadd.f32 0.0, %v3874
        %v3876 = vpop.f32.mrb[0].mxu0
        %3877 = vmatprep.mubr.bf16.mxu0 0
        %3878 = vmatmul.mubr.bf16.gmra.mrb[0].mxu0 %v3636
        %v3879 = vpop.f32.mrb[0].mxu0
        %v3880 = vadd.f32 0.0, %v3879
        %v3881 = vpop.f32.mrb[0].mxu0
        %v3882 = vpop.f32.mrb[0].mxu0
        %v3883 = vadd.f32 0.0, %v3882
        %v3884 = vpop.f32.mrb[0].mxu0
        %3885 = vmatprep.mubr.bf16.mxu0 0
        %3886 = vmatmul.mubr.bf16.gmra.mrb[0].mxu0 %v3639
        %v3887 = vpop.f32.mrb[0].mxu0
        %v3888 = vadd.f32 0.0, %v3887
        %v3889 = vpop.f32.mrb[0].mxu0
        %v3890 = vpop.f32.mrb[0].mxu0
        %v3891 = vadd.f32 0.0, %v3890
        %v3892 = vpop.f32.mrb[0].mxu0
        %3893 = vmatprep.mubr.bf16.mxu0 0
        %3894 = vmatmul.mubr.bf16.gmra.mrb[0].mxu0 %v3642
        %v3895 = vpop.f32.mrb[0].mxu0
        %v3896 = vadd.f32 0.0, %v3895
        %v3897 = vpop.f32.mrb[0].mxu0
        %v3898 = vpop.f32.mrb[0].mxu0
        %v3899 = vadd.f32 0.0, %v3898
        %v3900 = vpop.f32.mrb[0].mxu0
        %3901 = vmatprep.mubr.bf16.mxu0 0
        %3902 = vmatmul.mubr.bf16.gmra.mrb[0].mxu0 %v3645
        %v3903 = vpop.f32.mrb[0].mxu0
        %v3904 = vadd.f32 0.0, %v3903
        %v3905 = vpop.f32.mrb[0].mxu0
        %v3906 = vpop.f32.mrb[0].mxu0
        %v3907 = vadd.f32 0.0, %v3906
        %v3908 = vpop.f32.mrb[0].mxu0
        %3909 = vmatprep.mubr.bf16.mxu0 0
        %3910 = vmatmul.mubr.bf16.gmra.mrb[0].mxu0 %v3648
        %v3911 = vpop.f32.mrb[0].mxu0
        %v3912 = vadd.f32 0.0, %v3911
        %v3913 = vpop.f32.mrb[0].mxu0
        %v3914 = vpop.f32.mrb[0].mxu0
        %v3915 = vadd.f32 0.0, %v3914
        %v3916 = vpop.f32.mrb[0].mxu0
        %3917 = vmatprep.mubr.bf16.mxu0 0
        %3918 = vmatmul.mubr.bf16.gmra.mrb[0].mxu0 %v3651
        %v3919 = vpop.f32.mrb[0].mxu0
        %v3920 = vadd.f32 0.0, %v3919
        %v3921 = vpop.f32.mrb[0].mxu0
        %v3922 = vpop.f32.mrb[0].mxu0
        %v3923 = vadd.f32 0.0, %v3922
        %v3924 = vpop.f32.mrb[0].mxu0
        %3925 = vmatprep.mubr.bf16.mxu0 0
        %3926 = vmatmul.mubr.bf16.gmra.mrb[0].mxu0 %v3654
        %v3927 = vpop.f32.mrb[0].mxu0
        %v3928 = vadd.f32 0.0, %v3927
        %v3929 = vpop.f32.mrb[0].mxu0
        %v3930 = vpop.f32.mrb[0].mxu0
        %v3931 = vadd.f32 0.0, %v3930
        %v3932 = vpop.f32.mrb[0].mxu0
        %3933 = vmatprep.mubr.bf16.mxu0 0
        %3934 = vmatmul.mubr.bf16.gmra.mrb[0].mxu0 %v3657
        %v3935 = vpop.f32.mrb[0].mxu0
        %v3936 = vadd.f32 0.0, %v3935
        %v3937 = vpop.f32.mrb[0].mxu0
        %v3938 = vpop.f32.mrb[0].mxu0
        %v3939 = vadd.f32 0.0, %v3938
        %v3940 = vpop.f32.mrb[0].mxu0
        %3941 = vmatprep.mubr.bf16.mxu0 0
        %3942 = vmatmul.mubr.bf16.gmra.mrb[0].mxu0 %v3660
        %v3943 = vpop.f32.mrb[0].mxu0
        %v3944 = vadd.f32 0.0, %v3943
        %v3945 = vpop.f32.mrb[0].mxu0
        %v3946 = vpop.f32.mrb[0].mxu0
        %v3947 = vadd.f32 0.0, %v3946
        %v3948 = vpop.f32.mrb[0].mxu0
        %3949 = vmatprep.mubr.bf16.mxu0 0
        %3950 = vmatmul.mubr.bf16.gmra.mrb[0].mxu0 %v3663
        %v3951 = vpop.f32.mrb[0].mxu0
        %v3952 = vadd.f32 0.0, %v3951
        %v3953 = vpop.f32.mrb[0].mxu0
        %v3954 = vpop.f32.mrb[0].mxu0
        %v3955 = vadd.f32 0.0, %v3954
        %v3956 = vpop.f32.mrb[0].mxu0
        %3957 = vdwg.mxu0
        %v3958 = vmul.f32 %v3704, %v1975
        %v3959 = vmul.f32 %v3707, %v1978
        %v3960 = vmul.f32 %v3712, %v1983
        %v3961 = vmul.f32 %v3715, %v1986
        %v3962 = vmul.f32 %v3720, %v1991
        %v3963 = vmul.f32 %v3723, %v1994
        %v3964 = vmul.f32 %v3728, %v1999
        %v3965 = vmul.f32 %v3731, %v2002
        %v3966 = vmul.f32 %v3736, %v2007
        %v3967 = vmul.f32 %v3739, %v2010
        %v3968 = vmul.f32 %v3744, %v2015
        %v3969 = vmul.f32 %v3747, %v2018
        %v3970 = vmul.f32 %v3752, %v2023
        %v3971 = vmul.f32 %v3755, %v2026
        %v3972 = vmul.f32 %v3760, %v2031
        %v3973 = vmul.f32 %v3763, %v2034
        %v3974 = vmul.f32 %v3768, %v2039
        %v3975 = vmul.f32 %v3771, %v2042
        %v3976 = vmul.f32 %v3776, %v2047
        %v3977 = vmul.f32 %v3779, %v2050
        %v3978 = vmul.f32 %v3784, %v2055
        %v3979 = vmul.f32 %v3787, %v2058
        %v3980 = vmul.f32 %v3792, %v2063
        %v3981 = vmul.f32 %v3795, %v2066
        %v3982 = vmul.f32 %v3800, %v2071
        %v3983 = vmul.f32 %v3803, %v2074
        %v3984 = vmul.f32 %v3808, %v2079
        %v3985 = vmul.f32 %v3811, %v2082
        %v3986 = vmul.f32 %v3816, %v2087
        %v3987 = vmul.f32 %v3819, %v2090
        %v3988 = vmul.f32 %v3824, %v2095
        %v3989 = vmul.f32 %v3827, %v2098
        %v3990 = vmul.f32 %v3832, %v2103
        %v3991 = vmul.f32 %v3835, %v2106
        %v3992 = vmul.f32 %v3840, %v2111
        %v3993 = vmul.f32 %v3843, %v2114
        %v3994 = vmul.f32 %v3848, %v2119
        %v3995 = vmul.f32 %v3851, %v2122
        %v3996 = vmul.f32 %v3856, %v2127
        %v3997 = vmul.f32 %v3859, %v2130
        %v3998 = vmul.f32 %v3864, %v2135
        %v3999 = vmul.f32 %v3867, %v2138
        %v4000 = vmul.f32 %v3872, %v2143
        %v4001 = vmul.f32 %v3875, %v2146
        %v4002 = vmul.f32 %v3880, %v2151
        %v4003 = vmul.f32 %v3883, %v2154
        %v4004 = vmul.f32 %v3888, %v2159
        %v4005 = vmul.f32 %v3891, %v2162
        %v4006 = vmul.f32 %v3896, %v2167
        %v4007 = vmul.f32 %v3899, %v2170
        %v4008 = vmul.f32 %v3904, %v2175
        %v4009 = vmul.f32 %v3907, %v2178
        %v4010 = vmul.f32 %v3912, %v2183
        %v4011 = vmul.f32 %v3915, %v2186
        %v4012 = vmul.f32 %v3920, %v2191
        %v4013 = vmul.f32 %v3923, %v2194
        %v4014 = vmul.f32 %v3928, %v2199
        %v4015 = vmul.f32 %v3931, %v2202
        %v4016 = vmul.f32 %v3936, %v2207
        %v4017 = vmul.f32 %v3939, %v2210
        %v4018 = vmul.f32 %v3944, %v2215
        %v4019 = vmul.f32 %v3947, %v2218
        %v4020 = vmul.f32 %v3952, %v2223
        %v4021 = vmul.f32 %v3955, %v2226
        %v4022 = vpack.c.bf16 %v3959, %v3958
        %v4023 = vpack.c.bf16 %v3961, %v3960
        %v4024 = vpack.c.bf16 %v3963, %v3962
        %v4025 = vpack.c.bf16 %v3965, %v3964
        %v4026 = vpack.c.bf16 %v3967, %v3966
        %v4027 = vpack.c.bf16 %v3969, %v3968
        %v4028 = vpack.c.bf16 %v3971, %v3970
        %v4029 = vpack.c.bf16 %v3973, %v3972
        %v4030 = vpack.c.bf16 %v3975, %v3974
        %v4031 = vpack.c.bf16 %v3977, %v3976
        %v4032 = vpack.c.bf16 %v3979, %v3978
        %v4033 = vpack.c.bf16 %v3981, %v3980
        %v4034 = vpack.c.bf16 %v3983, %v3982
        %v4035 = vpack.c.bf16 %v3985, %v3984
        %v4036 = vpack.c.bf16 %v3987, %v3986
        %v4037 = vpack.c.bf16 %v3989, %v3988
        %v4038 = vpack.c.bf16 %v3991, %v3990
        %v4039 = vpack.c.bf16 %v3993, %v3992
        %v4040 = vpack.c.bf16 %v3995, %v3994
        %v4041 = vpack.c.bf16 %v3997, %v3996
        %v4042 = vpack.c.bf16 %v3999, %v3998
        %v4043 = vpack.c.bf16 %v4001, %v4000
        %v4044 = vpack.c.bf16 %v4003, %v4002
        %v4045 = vpack.c.bf16 %v4005, %v4004
        %v4046 = vpack.c.bf16 %v4007, %v4006
        %v4047 = vpack.c.bf16 %v4009, %v4008
        %v4048 = vpack.c.bf16 %v4011, %v4010
        %v4049 = vpack.c.bf16 %v4013, %v4012
        %v4050 = vpack.c.bf16 %v4015, %v4014
        %v4051 = vpack.c.bf16 %v4017, %v4016
        %v4052 = vpack.c.bf16 %v4019, %v4018
        %v4053 = vpack.c.bf16 %v4021, %v4020
        %v4054 = vpack.c.bf16 %v3536, %v3536
        %v4056 = vsel %vm2746, %v4054, 0
        %4058 = vmatprep.subr.bf16.mxu0 0
        %4059 = vmatpush1.bf16.msra.mxu0 %v3667
        %4060 = vmatprep.subr.bf16.mxu0 0
        %4061 = vmatpush1.bf16.msra.mxu0 0
        %4062 = vmatprep.subr.bf16.mxu0 0
        %4063 = vmatpush1.bf16.msra.mxu0 0
        %4064 = vmatprep.subr.bf16.mxu0 0
        %4065 = vmatpush1.bf16.msra.mxu0 0
        %4066 = vmatprep.subr.bf16.mxu0 0
        %4067 = vmatpush1.bf16.msra.mxu0 0
        %4068 = vmatprep.subr.bf16.mxu0 0
        %4069 = vmatpush1.bf16.msra.mxu0 0
        %4070 = vmatprep.subr.bf16.mxu0 0
        %4071 = vmatpush1.bf16.msra.mxu0 0
        %4072 = vmatprep.subr.bf16.mxu0 0
        %4073 = vmatpush1.bf16.msra.mxu0 0
        %4074 = vmatprep.subr.bf16.mxu0 0
        %4075 = vmatpush1.bf16.msra.mxu0 0
        %4076 = vmatprep.subr.bf16.mxu0 0
        %4077 = vmatpush1.bf16.msra.mxu0 0
        %4078 = vmatprep.subr.bf16.mxu0 0
        %4079 = vmatpush1.bf16.msra.mxu0 0
        %4080 = vmatprep.subr.bf16.mxu0 0
        %4081 = vmatpush1.bf16.msra.mxu0 0
        %4082 = vmatprep.subr.bf16.mxu0 0
        %4083 = vmatpush1.bf16.msra.mxu0 0
        %4084 = vmatprep.subr.bf16.mxu0 0
        %4085 = vmatpush1.bf16.msra.mxu0 0
        %4086 = vmatprep.subr.bf16.mxu0 0
        %4087 = vmatpush1.bf16.msra.mxu0 0
        %4088 = vmatprep.subr.bf16.mxu0 0
        %4089 = vmatpush1.bf16.msra.mxu0 0
        %4090 = vmatprep.mubr.bf16.mxu0 0
        %4091 = vmatmul.mubr.bf16.gmra.mrb[0].mxu0 %v4056
        %v4092 = vpop.f32.mrb[0].mxu0
        %v4093 = vadd.f32 0.0, %v4092
        %v4094 = vpop.f32.mrb[0].mxu0
        %v4095 = vpop.f32.mrb[0].mxu0
        %v4096 = vpop.f32.mrb[0].mxu0
        %4097 = vdwg.mxu0
        %v4098 = vmul.f32 %v4093, %v1646
        %4099 = vmatprep.subr.bf16.mxu0 0
        %4100 = vmatpush1.bf16.msra.mxu0 %v4022
        %4101 = vmatprep.subr.bf16.mxu0 0
        %4102 = vmatpush1.bf16.msra.mxu0 %v4023
        %4103 = vmatprep.subr.bf16.mxu0 0
        %4104 = vmatpush1.bf16.msra.mxu0 %v4024
        %4105 = vmatprep.subr.bf16.mxu0 0
        %4106 = vmatpush1.bf16.msra.mxu0 %v4025
        %4107 = vmatprep.subr.bf16.mxu0 0
        %4108 = vmatpush1.bf16.msra.mxu0 %v4026
        %4109 = vmatprep.subr.bf16.mxu0 0
        %4110 = vmatpush1.bf16.msra.mxu0 %v4027
        %4111 = vmatprep.subr.bf16.mxu0 0
        %4112 = vmatpush1.bf16.msra.mxu0 %v4028
        %4113 = vmatprep.subr.bf16.mxu0 0
        %4114 = vmatpush1.bf16.msra.mxu0 %v4029
        %4115 = vmatprep.subr.bf16.mxu0 0
        %4116 = vmatpush1.bf16.msra.mxu0 %v4030
        %4117 = vmatprep.subr.bf16.mxu0 0
        %4118 = vmatpush1.bf16.msra.mxu0 %v4031
        %4119 = vmatprep.subr.bf16.mxu0 0
        %4120 = vmatpush1.bf16.msra.mxu0 %v4032
        %4121 = vmatprep.subr.bf16.mxu0 0
        %4122 = vmatpush1.bf16.msra.mxu0 %v4033
        %4123 = vmatprep.subr.bf16.mxu0 0
        %4124 = vmatpush1.bf16.msra.mxu0 %v4034
        %4125 = vmatprep.subr.bf16.mxu0 0
        %4126 = vmatpush1.bf16.msra.mxu0 %v4035
        %4127 = vmatprep.subr.bf16.mxu0 0
        %4128 = vmatpush1.bf16.msra.mxu0 %v4036
        %4129 = vmatprep.subr.bf16.mxu0 0
        %4130 = vmatpush1.bf16.msra.mxu0 %v4037
        %4131 = vmatprep.mubr.bf16.mxu0 %v1128
        %4132 = vmatmul.mubr.bf16.gmra.mrb[0].mxu0 %v1127
        %v4133 = vpop.f32.mrb[0].mxu0
        %v4134 = vadd.f32 %v4098, %v4133
        %v4135 = vpop.f32.mrb[0].mxu0
        %v4136 = vpop.f32.mrb[0].mxu0
        %v4137 = vpop.f32.mrb[0].mxu0
        %4138 = vdwg.mxu0
        %4139 = vmatprep.subr.bf16.mxu0 0
        %4140 = vmatpush1.bf16.msra.mxu0 %v4038
        %4141 = vmatprep.subr.bf16.mxu0 0
        %4142 = vmatpush1.bf16.msra.mxu0 %v4039
        %4143 = vmatprep.subr.bf16.mxu0 0
        %4144 = vmatpush1.bf16.msra.mxu0 %v4040
        %4145 = vmatprep.subr.bf16.mxu0 0
        %4146 = vmatpush1.bf16.msra.mxu0 %v4041
        %4147 = vmatprep.subr.bf16.mxu0 0
        %4148 = vmatpush1.bf16.msra.mxu0 %v4042
        %4149 = vmatprep.subr.bf16.mxu0 0
        %4150 = vmatpush1.bf16.msra.mxu0 %v4043
        %4151 = vmatprep.subr.bf16.mxu0 0
        %4152 = vmatpush1.bf16.msra.mxu0 %v4044
        %4153 = vmatprep.subr.bf16.mxu0 0
        %4154 = vmatpush1.bf16.msra.mxu0 %v4045
        %4155 = vmatprep.subr.bf16.mxu0 0
        %4156 = vmatpush1.bf16.msra.mxu0 %v4046
        %4157 = vmatprep.subr.bf16.mxu0 0
        %4158 = vmatpush1.bf16.msra.mxu0 %v4047
        %4159 = vmatprep.subr.bf16.mxu0 0
        %4160 = vmatpush1.bf16.msra.mxu0 %v4048
        %4161 = vmatprep.subr.bf16.mxu0 0
        %4162 = vmatpush1.bf16.msra.mxu0 %v4049
        %4163 = vmatprep.subr.bf16.mxu0 0
        %4164 = vmatpush1.bf16.msra.mxu0 %v4050
        %4165 = vmatprep.subr.bf16.mxu0 0
        %4166 = vmatpush1.bf16.msra.mxu0 %v4051
        %4167 = vmatprep.subr.bf16.mxu0 0
        %4168 = vmatpush1.bf16.msra.mxu0 %v4052
        %4169 = vmatprep.subr.bf16.mxu0 0
        %4170 = vmatpush1.bf16.msra.mxu0 %v4053
        %4171 = vmatprep.mubr.bf16.mxu0 %v1130
        %4172 = vmatmul.mubr.bf16.gmra.mrb[0].mxu0 %v1129
        %v4173 = vpop.f32.mrb[0].mxu0
        %v4174 = vadd.f32 %v4134, %v4173
        %v4175 = vpop.f32.mrb[0].mxu0
        %v4176 = vpop.f32.mrb[0].mxu0
        %v4177 = vpop.f32.mrb[0].mxu0
        %4178 = vdwg.mxu0
        %v4179 = vpack.c.bf16 %v4174, %v4174
        %v4180 = vld [vmem:[#allocation18] sm:$0xf]
        %v4181 = vld [vmem:[#allocation18 + $0x4] sm:$0xf]
        %v4182 = vld [vmem:[#allocation18 + $0x8] sm:$0xf]
        %v4183 = vld [vmem:[#allocation18 + $0xc] sm:$0xf]
        %v4184 = vld [vmem:[#allocation18 + $0x10] sm:$0xf]
        %v4185 = vld [vmem:[#allocation18 + $0x14] sm:$0xf]
        %v4186 = vld [vmem:[#allocation18 + $0x18] sm:$0xf]
        %v4187 = vld [vmem:[#allocation18 + $0x1c] sm:$0xf]
        %v4188 = vld [vmem:[#allocation18 + $0x20] sm:$0xf]
        %v4189 = vld [vmem:[#allocation18 + $0x24] sm:$0xf]
        %v4190 = vld [vmem:[#allocation18 + $0x28] sm:$0xf]
        %v4191 = vld [vmem:[#allocation18 + $0x2c] sm:$0xf]
        %v4192 = vld [vmem:[#allocation18 + $0x30] sm:$0xf]
        %v4193 = vld [vmem:[#allocation18 + $0x34] sm:$0xf]
        %v4194 = vld [vmem:[#allocation18 + $0x38] sm:$0xf]
        %v4195 = vld [vmem:[#allocation18 + $0x3c] sm:$0xf]
        %v4196 = vld [vmem:[#allocation20] sm:$0x1]
        %v4198 = vlaneseq
        %v4199 = vshrl.u32 %v4198, 7
        %v4200 = vsub.s32 0, %v4199
        %v4201 = vrot.slane %v4196, %v4200
        %v4219 = vunpack.c.l.b16 %v4180
        %v4220 = vunpack.c.l.b16 %v4181
        %v4221 = vunpack.c.l.b16 %v4182
        %v4222 = vunpack.c.l.b16 %v4183
        %v4223 = vunpack.c.l.b16 %v4184
        %v4224 = vunpack.c.l.b16 %v4185
        %v4225 = vunpack.c.l.b16 %v4186
        %v4226 = vunpack.c.l.b16 %v4187
        %v4227 = vunpack.c.l.b16 %v4188
        %v4228 = vunpack.c.l.b16 %v4189
        %v4229 = vunpack.c.l.b16 %v4190
        %v4230 = vunpack.c.l.b16 %v4191
        %v4231 = vunpack.c.l.b16 %v4192
        %v4232 = vunpack.c.l.b16 %v4193
        %v4233 = vunpack.c.l.b16 %v4194
        %v4234 = vunpack.c.l.b16 %v4195
        %v4235 = vpack.c.b16 %v4220, %v4219
        %v4236 = vpack.c.b16 %v4222, %v4221
        %v4237 = vpack.c.b16 %v4224, %v4223
        %v4238 = vpack.c.b16 %v4226, %v4225
        %v4239 = vpack.c.b16 %v4228, %v4227
        %v4240 = vpack.c.b16 %v4230, %v4229
        %v4241 = vpack.c.b16 %v4232, %v4231
        %v4242 = vpack.c.b16 %v4234, %v4233
        %4251 = vmatprep.subr.bf16.mxu0 0
        %4252 = vmatpush1.bf16.msra.mxu0 %v4235
        %4253 = vmatprep.subr.bf16.mxu0 0
        %4254 = vmatpush1.bf16.msra.mxu0 %v4236
        %4255 = vmatprep.subr.bf16.mxu0 0
        %4256 = vmatpush1.bf16.msra.mxu0 %v4237
        %4257 = vmatprep.subr.bf16.mxu0 0
        %4258 = vmatpush1.bf16.msra.mxu0 %v4238
        %4259 = vmatprep.subr.bf16.mxu0 0
        %4260 = vmatpush1.bf16.msra.mxu0 %v4239
        %4261 = vmatprep.subr.bf16.mxu0 0
        %4262 = vmatpush1.bf16.msra.mxu0 %v4240
        %4263 = vmatprep.subr.bf16.mxu0 0
        %4264 = vmatpush1.bf16.msra.mxu0 %v4241
        %4265 = vmatprep.subr.bf16.mxu0 0
        %4266 = vmatpush1.bf16.msra.mxu0 %v4242
        %4267 = vmatprep.subr.bf16.mxu0 0
        %4268 = vmatpush1.bf16.msra.mxu0 0
        %4269 = vmatprep.subr.bf16.mxu0 0
        %4270 = vmatpush1.bf16.msra.mxu0 0
        %4271 = vmatprep.subr.bf16.mxu0 0
        %4272 = vmatpush1.bf16.msra.mxu0 0
        %4273 = vmatprep.subr.bf16.mxu0 0
        %4274 = vmatpush1.bf16.msra.mxu0 0
        %4275 = vmatprep.subr.bf16.mxu0 0
        %4276 = vmatpush1.bf16.msra.mxu0 0
        %4277 = vmatprep.subr.bf16.mxu0 0
        %4278 = vmatpush1.bf16.msra.mxu0 0
        %4279 = vmatprep.subr.bf16.mxu0 0
        %4280 = vmatpush1.bf16.msra.mxu0 0
        %4281 = vmatprep.subr.bf16.mxu0 0
        %4282 = vmatpush1.bf16.msra.mxu0 0
        %4283 = vmatprep.mubr.bf16.mxu0 0
        %4284 = vmatmul.mubr.bf16.gmra.mrb[0].mxu0 %v4179
        %v4285 = vpop.f32.mrb[0].mxu0
        %v4286 = vadd.f32 %v4201, %v4285
        %v4287 = vpop.f32.mrb[0].mxu0
        %v4288 = vpop.f32.mrb[0].mxu0
        %v4289 = vpop.f32.mrb[0].mxu0
        %4290 = vdwg.mxu0
        %4291 = vst [vmem:[%s540] sm:$0xff] %v4286
        %s4292 = sand.u32 %s277, 1
        %s4293 = scalar_lea.sflag [#allocation5], %s4292
        %s4294 = sand.u32 %s277, 1
        %s4295 = smul.addr %s4294, 8
        %s4296 = scalar_lea.vmem [#allocation21], %s4295
        // Predicated region
        $region109: #{tpu_custom_call.1} parent=63 // pred_check
          %p4297 = pneg %p287
        $region110: #{tpu_custom_call.1} parent=63 // pred_check_branch
          %4299 = sbr.rel (%p4297) target = $region112
        $region111: #{tpu_custom_call.1} parent=63 // pred_region
          %s4301 = ssub.s32 128, 128
          %4302 = vsyncadd %s4293, %s4301
          %s4303 = smul.addr %s33, 128
          %s4304 = scalar_lea.hbm %s11, %s4303
          %s4306 = sshll.u32 %s4296, 4
          %s4307 = int_to_ptr.vmem [resolvable:$true] %s4306
          %4309 = dma.vmem_to_hbm [thread:$0]  %s4307, 128, %s4304, %s4293
        $region112: #{tpu_custom_call.1} parent=63 // pred_fallthru
          _
      $region64: #{tpu_custom_call.1} parent=5 // pred_fallthru
        _
      %p4310 = scmp.le.s32.totalorder 2, %s28
      // Predicated region
      $region113: #{tpu_custom_call.1} parent=5 // pred_check
        %p4311 = pneg %p4310
      $region114: #{tpu_custom_call.1} parent=5 // pred_check_branch
        %4313 = sbr.rel (%p4311) target = $region116
      $region115: #{tpu_custom_call.1} parent=5 // pred_region
        %s4314 = ssub.s32 %s28, 2
        // Predicated region
        $region117: #{tpu_custom_call.1} parent=115 // pred_check
          %p4315 = pneg %p293
        $region118: #{tpu_custom_call.1} parent=115 // pred_check_branch
          %4317 = sbr.rel (%p4315) target = $region120
        $region119: #{tpu_custom_call.1} parent=115 // pred_region
          %s4318 = sand.u32 %s278, 1
          %s4319 = scalar_lea.sflag [#allocation5], %s4318
          %s4320 = sand.u32 %s278, 1
          %s4321 = smul.addr %s4320, 8
          %s4322 = scalar_lea.vmem [#allocation21], %s4321
          %4323 = dma.done %s4319, 128
        $region120: #{tpu_custom_call.1} parent=115 // pred_fallthru
          _
      $region116: #{tpu_custom_call.1} parent=5 // pred_fallthru
        _
    $region6: #{tpu_custom_call.1} parent=1 // loop_footer
      %s32 = sadd.s32 1, %s28
    $region7: #{tpu_custom_call.1} parent=1 // loop_footer_branch
      %27 = sbr.rel target = $region3
    $region8: #{tpu_custom_call.1} parent=1 // loop_exit
      _
    %4324 = vsyncpa [#allocation4], 1
    %s4325 = scalar_lea.sflag [#allocation4], 1
    %4326 = vsyncpa %s4325, 1
    %4327 = vsyncpa [#allocation7], 1
    %4328 = vsyncpa [#allocation10], 1
    %4329 = vsyncpa [#allocation13], 1
    %4330 = vsyncpa [#allocation16], 1
    %4331 = vsyncpa [#allocation19], 1
    %4332 = vsyncpa [#allocation5], 1
    %s4333 = scalar_lea.sflag [#allocation5], 1
    %4334 = vsyncpa %s4333, 1

</llo_original>
